<compile_context>
chip_gen: v6e
topology: v6e:2x2x1
jax: 0.10.0
libtpu: 0.0.40
codegen_flags: <defaults>
</compile_context>

<pallas_src>
import jax
import jax.numpy as jnp
from jax import lax
from jax.experimental import pallas as pl
from jax.experimental.pallas import tpu as pltpu

CPAD = 128                                        # padded channel width (lane-dense)
CONV_CFG = ((32, 8, 4), (64, 4, 2), (64, 3, 1))   # (out_channels, kernel, stride)
FC_HIDDEN = 512


# ----------------------------------------------------------------------------
# shape helpers
# ----------------------------------------------------------------------------
def _conv_out(n, k, s):
    return (n - k) // s + 1


def _conv_dims(h, w):
    dims = []
    for (_, k, s) in CONV_CFG:
        oh, ow = _conv_out(h, k, s), _conv_out(w, k, s)
        dims.append((k, k, s, oh, ow))
        h, w = oh, ow
    return dims


def feature_size(input_shape):
    _, h, w = input_shape
    dims = _conv_dims(h, w)
    return CONV_CFG[-1][0] * dims[-1][3] * dims[-1][4]


def _pick_btile(n):
    """Largest image block (fc M dimension) that divides the batch while
    keeping >= 2 grid steps (v7x dual-TensorCore load balance)."""
    for bt in (8, 4, 2, 1):
        if n % bt == 0 and n // bt >= 2:
            return bt
    return n


# ----------------------------------------------------------------------------
# fused kernel
# ----------------------------------------------------------------------------
def _make_kernel(dims, b_tile, feat_k):
    (_, _, _, oh1, ow1), (kh2, kw2, s2, oh2, ow2), (kh3, kw3, s3, oh3, ow3) = dims
    c_real = CONV_CFG[-1][0]                      # real conv3 channels (64)

    def window(src_ref, ki, kj, oh, ow, stride):
        if stride == 1:
            return src_ref[pl.ds(ki, oh), pl.ds(kj, ow), :]
        return src_ref[pl.ds(ki, oh, stride=stride),
                       pl.ds(kj, ow, stride=stride), :]

    def conv_block(src_ref, w_ref, b_ref, kh, kw, stride, oh, ow):
        """relu(conv(src) + b): per-kernel-offset K=128 matmuls; the f32
        accumulator (oh*ow x 128) stays in registers (<= 11 vregs)."""
        acc = jnp.zeros((oh * ow, CPAD), jnp.float32)
        for ki in range(kh):
            for kj in range(kw):
                win = window(src_ref, ki, kj, oh, ow, stride)
                acc = acc + jnp.dot(
                    win.reshape(oh * ow, CPAD).astype(jnp.bfloat16),
                    w_ref[ki * kw + kj],
                    preferred_element_type=jnp.float32)
        return jnp.maximum(acc + b_ref[...], 0.0)

    def kernel(p_ref, w1, b1, w2, b2, w3, b3, w4, b4, w5, b5,
               o_ref, a1_ref, a2_ref, f_ref):
        def conv_one_image(b, carry):
            # conv1: ONE fused-K matmul on the pre-built im2col patches.
            y1 = jnp.dot(p_ref[b], w1[...], preferred_element_type=jnp.float32)
            y1 = jnp.maximum(y1 + b1[...], 0.0)
            a1_ref[...] = y1.reshape(oh1, ow1, CPAD)          # one slab store

            # conv2 (stride-2 windows of f32 a1) and conv3 (stride-1, bf16 a2).
            y2 = conv_block(a1_ref, w2, b2, kh2, kw2, s2, oh2, ow2)
            a2_ref[...] = y2.reshape(oh2, ow2, CPAD).astype(jnp.bfloat16)
            y3 = conv_block(a2_ref, w3, b3, kh3, kw3, s3, oh3, ow3)

            # Stage this image's feature row: only the real conv3 channels,
            # flattened (h, w, c)-major to match the repacked fc1 weights.
            f_ref[pl.ds(b, 1), :] = y3[:, :c_real].reshape(1, feat_k)
            return carry

        lax.fori_loop(0, b_tile, conv_one_image, 0)

        # fc1 -> ReLU -> fc2, batched over the image block (M = b_tile).
        feat = f_ref[...].astype(jnp.bfloat16)
        h = jnp.dot(feat, w4[...], preferred_element_type=jnp.float32) + b4[...]
        h = jnp.maximum(h, 0.0).astype(jnp.bfloat16)
        o_ref[...] = jnp.dot(h, w5[...], preferred_element_type=jnp.float32) + b5[...]

    return kernel


# ----------------------------------------------------------------------------
# parameters (PyTorch layouts) + one-time repack into kernel layouts
# ----------------------------------------------------------------------------
def init_params(key, input_shape, num_actions):
    """PyTorch-default-style init: U(-1/sqrt(fan_in), +1/sqrt(fan_in))."""
    c = input_shape[0]
    feat = feature_size(input_shape)
    ks = jax.random.split(key, 10)

    def u(k, shape, fan_in):
        bound = 1.0 / float(fan_in) ** 0.5
        return jax.random.uniform(k, shape, jnp.float32, -bound, bound)

    return {
        "w1": u(ks[0], (32, c, 8, 8), c * 8 * 8),
        "b1": u(ks[1], (32,), c * 8 * 8),
        "w2": u(ks[2], (64, 32, 4, 4), 32 * 4 * 4),
        "b2": u(ks[3], (64,), 32 * 4 * 4),
        "w3": u(ks[4], (64, 64, 3, 3), 64 * 3 * 3),
        "b3": u(ks[5], (64,), 64 * 3 * 3),
        "w4": u(ks[6], (512, feat), feat),          # nn.Linear layout (out, in)
        "b4": u(ks[7], (512,), feat),
        "w5": u(ks[8], (num_actions, 512), 512),
        "b5": u(ks[9], (num_actions,), 512),
    }


def prepare_params(params, input_shape):
    """One-time weight repack into the layouts the fused kernel consumes."""
    _, h, w = input_shape
    dims = _conv_dims(h, w)
    oh3, ow3 = dims[-1][3], dims[-1][4]

    def prep_conv1(wt, bt):
        out_c, in_c, kh, kw = wt.shape               # fused-K (kh*kw*Cin, 128)
        wt = jnp.transpose(wt, (2, 3, 1, 0)).reshape(kh * kw * in_c, out_c)
        wt = jnp.pad(wt, ((0, 0), (0, CPAD - out_c)))
        bt = jnp.pad(bt, (0, CPAD - out_c)).reshape(1, CPAD)
        return wt.astype(jnp.bfloat16), bt.astype(jnp.float32)

    def prep_conv(wt, bt):
        out_c, in_c, kh, kw = wt.shape               # per-offset (kh*kw, 128, 128)
        wt = jnp.transpose(wt, (2, 3, 1, 0)).reshape(kh * kw, in_c, out_c)
        wt = jnp.pad(wt, ((0, 0), (0, CPAD - in_c), (0, CPAD - out_c)))
        bt = jnp.pad(bt, (0, CPAD - out_c)).reshape(1, CPAD)
        return wt.astype(jnp.bfloat16), bt.astype(jnp.float32)

    w1p, b1p = prep_conv1(params["w1"], params["b1"])
    w2p, b2p = prep_conv(params["w2"], params["b2"])
    w3p, b3p = prep_conv(params["w3"], params["b3"])

    # fc1: PyTorch columns are (c, h, w)-major; kernel flattens (h, w, c) with
    # only the 64 REAL conv3 channels in K (no zero-padded half of K in w4).
    c_out3 = CONV_CFG[-1][0]
    w4 = params["w4"].reshape(FC_HIDDEN, c_out3, oh3, ow3)
    w4 = jnp.transpose(w4, (2, 3, 1, 0)).reshape(oh3 * ow3 * c_out3, FC_HIDDEN)
    w4p = w4.astype(jnp.bfloat16)
    b4p = params["b4"].reshape(1, FC_HIDDEN).astype(jnp.float32)

    num_actions = params["w5"].shape[0]
    w5p = jnp.pad(params["w5"].T, ((0, 0), (0, CPAD - num_actions))).astype(jnp.bfloat16)
    b5p = jnp.pad(params["b5"], (0, CPAD - num_actions)).reshape(1, CPAD).astype(jnp.float32)

    return {"w1": w1p, "b1": b1p, "w2": w2p, "b2": b2p, "w3": w3p, "b3": b3p,
            "w4": w4p, "b4": b4p, "w5": w5p, "b5": b5p}


# ----------------------------------------------------------------------------
# forward
# ----------------------------------------------------------------------------
def _im2col_conv1(xn, kh, kw, s, oh, ow):
    """(N, H, W, C) f32 -> (N, oh*ow, kh*kw*C) bf16 conv1 patches, K ordered
    (ki, kj, c)-major (matches prepare_params' w1 row order)."""
    n, _, _, c = xn.shape
    cols = []
    for ki in range(kh):
        for kj in range(kw):
            cols.append(lax.slice(
                xn, (0, ki, kj, 0),
                (n, ki + (oh - 1) * s + 1, kj + (ow - 1) * s + 1, c),
                (1, s, s, 1)))
    pat = jnp.stack(cols, axis=3)                  # (N, oh, ow, kh*kw, C)
    return pat.reshape(n, oh * ow, kh * kw * c).astype(jnp.bfloat16)


def cnn_dqn_forward(prep, x, num_actions, b_tile=None):
    """x: (N, C, H, W) float32 (PyTorch layout). Returns (N, num_actions) f32."""
    n, c, h, w = x.shape
    assert num_actions <= CPAD, "num_actions must be <= 128"
    dims = _conv_dims(h, w)
    for (_, _, _, oh, ow) in dims:                 # fail loudly on bad shapes
        assert oh >= 1 and ow >= 1, f"input {h}x{w} too small for the conv stack"
    kh1, kw1, s1, oh1, ow1 = dims[0]
    oh2, ow2 = dims[1][3], dims[1][4]
    oh3, ow3 = dims[2][3], dims[2][4]
    feat_k = oh3 * ow3 * CONV_CFG[-1][0]
    assert prep["w4"].shape == (feat_k, FC_HIDDEN), "prepared params mismatch input shape"
    assert prep["w1"].shape[0] == kh1 * kw1 * c, "prepared params mismatch input channels"

    if b_tile is None:
        b_tile = _pick_btile(n)
    assert n % b_tile == 0
    g = n // b_tile

    # Single NCHW->NHWC conversion + conv1 im2col (lane-dense, K=256) per call.
    xn = jnp.transpose(x, (0, 2, 3, 1)).astype(jnp.float32)
    patches = _im2col_conv1(xn, kh1, kw1, s1, oh1, ow1)        # (N, M1, K1) bf16
    m1, k1 = oh1 * ow1, kh1 * kw1 * c

    kernel = _make_kernel(dims, b_tile, feat_k)

    def full_spec(shape):                          # grid-invariant operand
        zeros = (0,) * len(shape)
        return pl.BlockSpec(shape, lambda i, _z=zeros: _z)

    weight_names = ("w1", "b1", "w2", "b2", "w3", "b3", "w4", "b4", "w5", "b5")
    in_specs = [pl.BlockSpec((b_tile, m1, k1), lambda i: (i, 0, 0))]
    in_specs += [full_spec(prep[nm].shape) for nm in weight_names]
    out_specs = pl.BlockSpec((None, b_tile, CPAD), lambda i: (i, 0, 0))

    # rough cost hint for the XLA scheduler
    macs = (m1 * k1 * CPAD
            + dims[1][0] * dims[1][1] * oh2 * ow2 * CPAD * CPAD
            + dims[2][0] * dims[2][1] * oh3 * ow3 * CPAD * CPAD
            + feat_k * FC_HIDDEN + FC_HIDDEN * CPAD)
    weight_bytes = sum(int(prep[nm].size) * prep[nm].dtype.itemsize
                       for nm in weight_names)
    cost = pl.CostEstimate(flops=2 * n * int(macs), transcendentals=0,
                           bytes_accessed=int(patches.size) * 2 + weight_bytes
                           + n * CPAD * 4)

    q = pl.pallas_call(
        kernel,
        out_shape=jax.ShapeDtypeStruct((g, b_tile, CPAD), jnp.float32),
        grid=(g,),
        in_specs=in_specs,
        out_specs=out_specs,
        scratch_shapes=[
            pltpu.VMEM((oh1, ow1, CPAD), jnp.float32),    # conv1 act (stride-2 source)
            pltpu.VMEM((oh2, ow2, CPAD), jnp.bfloat16),   # conv2 act (stride-1 source)
            pltpu.VMEM((b_tile, feat_k), jnp.float32),    # staged fc1 feature rows
        ],
        compiler_params=pltpu.CompilerParams(
            dimension_semantics=("parallel",)),
        cost_estimate=cost,
    )(patches, *(prep[nm] for nm in weight_names))

    return q.reshape(n, CPAD)[:, :num_actions]


# ----------------------------------------------------------------------------
# pure-JAX reference (correctness check only)
# ----------------------------------------------------------------------------
def ref_forward(params, x, dtype=jnp.float32):
    """dtype=f32: exact PyTorch semantics; dtype=bf16: mirrors the kernel's
    MXU numerics (bf16 operands, f32 accumulation)."""
    def conv(x, w, b, s):
        y = lax.conv_general_dilated(
            x.astype(dtype), w.astype(dtype), (s, s), "VALID",
            dimension_numbers=("NCHW", "OIHW", "NCHW"),
            preferred_element_type=jnp.float32)
        return jnp.maximum(y + b.reshape(1, -1, 1, 1), 0.0)

    x = conv(x, params["w1"], params["b1"], 4)
    x = conv(x, params["w2"], params["b2"], 2)
    x = conv(x, params["w3"], params["b3"], 1)
    x = x.reshape(x.shape[0], -1)
    h = jnp.dot(x.astype(dtype), params["w4"].T.astype(dtype),
                preferred_element_type=jnp.float32) + params["b4"]
    h = jnp.maximum(h, 0.0)
    q = jnp.dot(h.astype(dtype), params["w5"].T.astype(dtype),
                preferred_element_type=jnp.float32) + params["b5"]
    return q


if __name__ == "__main__":
    # 36x36 is the smallest spatial size that survives the 8/4 -> 4/2 -> 3/1
    # conv stack (36 -> 8 -> 3 -> 1), so feature_size = 64.  batch=16 gives
    # B_TILE=8 (full-sublane fc matmuls) and an even grid of 2 (v7x balance).
    input_shape = (4, 36, 36)
    num_actions = 6
    batch = 16

    key = jax.random.PRNGKey(0)
    k_param, k_x = jax.random.split(key)
    params = init_params(k_param, input_shape, num_actions)
    x = jax.random.normal(k_x, (batch,) + input_shape, dtype=jnp.float32)

    prep = prepare_params(params, input_shape)            # one-time weight repack
    fwd = jax.jit(lambda p, inp: cnn_dqn_forward(p, inp, num_actions))

    out = jax.block_until_ready(fwd(prep, x))
    assert out.shape == (batch, num_actions), out.shape

    # bf16-matched reference (same operand precision / f32 accum) -> tight check
    ref_bf = jax.block_until_ready(ref_forward(params, x, dtype=jnp.bfloat16))
    err_bf = float(jnp.max(jnp.abs(out - ref_bf)))
    assert jnp.allclose(out, ref_bf, atol=5e-3, rtol=5e-3), err_bf

    # full-f32 PyTorch-semantics reference -> bf16-level tolerance
    ref32 = jax.block_until_ready(ref_forward(params, x, dtype=jnp.float32))
    err32 = float(jnp.max(jnp.abs(out - ref32)))
    assert jnp.allclose(out, ref32, atol=3e-2, rtol=3e-2), err32

    print("KERNEL_OK")
</pallas_src>

<mosaic_0001>
module attributes {stable_mosaic.version = 11 : i64} {
  func.func @kernel(%arg0: i32, %arg1: memref<8x64x256xbf16, #tpu.memory_space<vmem>>, %arg2: memref<256x128xbf16, #tpu.memory_space<vmem>>, %arg3: memref<1x128xf32, #tpu.memory_space<vmem>>, %arg4: memref<16x128x128xbf16, #tpu.memory_space<vmem>>, %arg5: memref<1x128xf32, #tpu.memory_space<vmem>>, %arg6: memref<9x128x128xbf16, #tpu.memory_space<vmem>>, %arg7: memref<1x128xf32, #tpu.memory_space<vmem>>, %arg8: memref<64x512xbf16, #tpu.memory_space<vmem>>, %arg9: memref<1x512xf32, #tpu.memory_space<vmem>>, %arg10: memref<512x128xbf16, #tpu.memory_space<vmem>>, %arg11: memref<1x128xf32, #tpu.memory_space<vmem>>, %arg12: memref<1x8x128xf32, #tpu.memory_space<vmem>>, %arg13: memref<8x8x128xf32, #tpu.memory_space<vmem>>, %arg14: memref<3x3x128xbf16, #tpu.memory_space<vmem>>, %arg15: memref<8x64xf32, #tpu.memory_space<vmem>>) attributes {dimension_semantics = [#tpu.dimension_semantics<parallel>], iteration_bounds = array<i64: 2>, scalar_prefetch = 0 : i64, scratch_operands = 3 : i64, tpu.core_type = #tpu.core_type<tc>, window_params = [{transform_indices = @transform_0, window_bounds = array<i64: 8, 64, 256>}, {pipeline_mode = #tpu.pipeline_mode<synchronous>, transform_indices = @transform_1, window_bounds = array<i64: 256, 128>}, {pipeline_mode = #tpu.pipeline_mode<synchronous>, transform_indices = @transform_2, window_bounds = array<i64: 1, 128>}, {pipeline_mode = #tpu.pipeline_mode<synchronous>, transform_indices = @transform_3, window_bounds = array<i64: 16, 128, 128>}, {pipeline_mode = #tpu.pipeline_mode<synchronous>, transform_indices = @transform_4, window_bounds = array<i64: 1, 128>}, {pipeline_mode = #tpu.pipeline_mode<synchronous>, transform_indices = @transform_5, window_bounds = array<i64: 9, 128, 128>}, {pipeline_mode = #tpu.pipeline_mode<synchronous>, transform_indices = @transform_6, window_bounds = array<i64: 1, 128>}, {pipeline_mode = #tpu.pipeline_mode<synchronous>, transform_indices = @transform_7, window_bounds = array<i64: 64, 512>}, {pipeline_mode = #tpu.pipeline_mode<synchronous>, transform_indices = @transform_8, window_bounds = array<i64: 1, 512>}, {pipeline_mode = #tpu.pipeline_mode<synchronous>, transform_indices = @transform_9, window_bounds = array<i64: 512, 128>}, {pipeline_mode = #tpu.pipeline_mode<synchronous>, transform_indices = @transform_10, window_bounds = array<i64: 1, 128>}, {transform_indices = @transform_11, window_bounds = array<i64: 1, 8, 128>}]} {
    %c0_i32 = arith.constant 0 : i32
    %c8_i32 = arith.constant 8 : i32
    %0 = arith.addi %c0_i32, %c8_i32 : i32
    %c1_i32 = arith.constant 1 : i32
    scf.for %arg16 = %c0_i32 to %0 step %c1_i32  : i32 {
      %19 = arith.index_cast %arg16 : i32 to index
      %c0_15 = arith.constant 0 : index
      %c0_16 = arith.constant 0 : index
      %20 = vector.load %arg1[%19, %c0_15, %c0_16] : memref<8x64x256xbf16, #tpu.memory_space<vmem>>, vector<1x64x256xbf16>
      %21 = vector.shape_cast %20 : vector<1x64x256xbf16> to vector<64x256xbf16>
      %c0_17 = arith.constant 0 : index
      %c0_18 = arith.constant 0 : index
      %22 = vector.load %arg2[%c0_17, %c0_18] : memref<256x128xbf16, #tpu.memory_space<vmem>>, vector<256x128xbf16>
      %cst_19 = arith.constant dense<0.000000e+00> : vector<64x128xf32>
      %23 = tpu.matmul %21, %22, %cst_19 {dimension_numbers = #tpu.dot_dimension_numbers<[1], [0], [0], [1], [0, 0, 1, 1], [], []>} : vector<64x256xbf16>, vector<256x128xbf16>, vector<64x128xf32> -> vector<64x128xf32>
      %c0_20 = arith.constant 0 : index
      %c0_21 = arith.constant 0 : index
      %24 = vector.load %arg3[%c0_20, %c0_21] : memref<1x128xf32, #tpu.memory_space<vmem>>, vector<1x128xf32>
      %25 = vector.broadcast %24 : vector<1x128xf32> to vector<64x128xf32>
      %26 = arith.addf %23, %25 : vector<64x128xf32>
      %cst_22 = arith.constant 0.000000e+00 : f32
      %27 = vector.broadcast %cst_22 : f32 to vector<64x128xf32>
      %28 = arith.maximumf %26, %27 : vector<64x128xf32>
      %29 = vector.shape_cast %28 : vector<64x128xf32> to vector<8x8x128xf32>
      %c0_23 = arith.constant 0 : index
      %c0_24 = arith.constant 0 : index
      %c0_25 = arith.constant 0 : index
      %30 = vector.load %arg13[%c0_23, %c0_24, %c0_25] : memref<8x8x128xf32, #tpu.memory_space<vmem>>, vector<8x8x128xf32>
      tpu.vector_store %arg13[%c0_23, %c0_24, %c0_25], %29 {strides = array<i32>} : memref<8x8x128xf32, #tpu.memory_space<vmem>>, vector<8x8x128xf32>,
      %cst_26 = arith.constant 0.000000e+00 : f32
      %31 = vector.broadcast %cst_26 : f32 to vector<9x128xf32>
      %c0_27 = arith.constant 0 : index
      %c0_28 = arith.constant 0 : index
      %c0_29 = arith.constant 0 : index
      %32 = tpu.strided_load %arg13[%c0_27, %c0_28, %c0_29] {strides = array<i32: 2, 2, 1>} : memref<8x8x128xf32, #tpu.memory_space<vmem>>, vector<3x3x128xf32>
      %33 = vector.shape_cast %32 : vector<3x3x128xf32> to vector<9x128xf32>
      %34 = arith.truncf %33 : vector<9x128xf32> to vector<9x128xbf16>
      %c0_30 = arith.constant 0 : index
      %c0_31 = arith.constant 0 : index
      %c0_32 = arith.constant 0 : index
      %35 = vector.load %arg4[%c0_30, %c0_31, %c0_32] : memref<16x128x128xbf16, #tpu.memory_space<vmem>>, vector<1x128x128xbf16>
      %36 = vector.shape_cast %35 : vector<1x128x128xbf16> to vector<128x128xbf16>
      %cst_33 = arith.constant dense<0.000000e+00> : vector<9x128xf32>
      %37 = tpu.matmul %34, %36, %cst_33 {dimension_numbers = #tpu.dot_dimension_numbers<[1], [0], [0], [1], [0, 0, 1, 1], [], []>} : vector<9x128xbf16>, vector<128x128xbf16>, vector<9x128xf32> -> vector<9x128xf32>
      %38 = arith.addf %31, %37 : vector<9x128xf32>
      %c0_34 = arith.constant 0 : index
      %c1 = arith.constant 1 : index
      %c0_35 = arith.constant 0 : index
      %39 = tpu.strided_load %arg13[%c0_34, %c1, %c0_35] {strides = array<i32: 2, 2, 1>} : memref<8x8x128xf32, #tpu.memory_space<vmem>>, vector<3x3x128xf32>
      %40 = vector.shape_cast %39 : vector<3x3x128xf32> to vector<9x128xf32>
      %41 = arith.truncf %40 : vector<9x128xf32> to vector<9x128xbf16>
      %c1_36 = arith.constant 1 : index
      %c0_37 = arith.constant 0 : index
      %c0_38 = arith.constant 0 : index
      %42 = vector.load %arg4[%c1_36, %c0_37, %c0_38] : memref<16x128x128xbf16, #tpu.memory_space<vmem>>, vector<1x128x128xbf16>
      %43 = vector.shape_cast %42 : vector<1x128x128xbf16> to vector<128x128xbf16>
      %cst_39 = arith.constant dense<0.000000e+00> : vector<9x128xf32>
      %44 = tpu.matmul %41, %43, %cst_39 {dimension_numbers = #tpu.dot_dimension_numbers<[1], [0], [0], [1], [0, 0, 1, 1], [], []>} : vector<9x128xbf16>, vector<128x128xbf16>, vector<9x128xf32> -> vector<9x128xf32>
      %45 = arith.addf %38, %44 : vector<9x128xf32>
      %c0_40 = arith.constant 0 : index
      %c2 = arith.constant 2 : index
      %c0_41 = arith.constant 0 : index
      %46 = tpu.strided_load %arg13[%c0_40, %c2, %c0_41] {strides = array<i32: 2, 2, 1>} : memref<8x8x128xf32, #tpu.memory_space<vmem>>, vector<3x3x128xf32>
      %47 = vector.shape_cast %46 : vector<3x3x128xf32> to vector<9x128xf32>
      %48 = arith.truncf %47 : vector<9x128xf32> to vector<9x128xbf16>
      %c2_42 = arith.constant 2 : index
      %c0_43 = arith.constant 0 : index
      %c0_44 = arith.constant 0 : index
      %49 = vector.load %arg4[%c2_42, %c0_43, %c0_44] : memref<16x128x128xbf16, #tpu.memory_space<vmem>>, vector<1x128x128xbf16>
      %50 = vector.shape_cast %49 : vector<1x128x128xbf16> to vector<128x128xbf16>
      %cst_45 = arith.constant dense<0.000000e+00> : vector<9x128xf32>
      %51 = tpu.matmul %48, %50, %cst_45 {dimension_numbers = #tpu.dot_dimension_numbers<[1], [0], [0], [1], [0, 0, 1, 1], [], []>} : vector<9x128xbf16>, vector<128x128xbf16>, vector<9x128xf32> -> vector<9x128xf32>
      %52 = arith.addf %45, %51 : vector<9x128xf32>
      %c0_46 = arith.constant 0 : index
      %c3 = arith.constant 3 : index
      %c0_47 = arith.constant 0 : index
      %53 = tpu.strided_load %arg13[%c0_46, %c3, %c0_47] {strides = array<i32: 2, 2, 1>} : memref<8x8x128xf32, #tpu.memory_space<vmem>>, vector<3x3x128xf32>
      %54 = vector.shape_cast %53 : vector<3x3x128xf32> to vector<9x128xf32>
      %55 = arith.truncf %54 : vector<9x128xf32> to vector<9x128xbf16>
      %c3_48 = arith.constant 3 : index
      %c0_49 = arith.constant 0 : index
      %c0_50 = arith.constant 0 : index
      %56 = vector.load %arg4[%c3_48, %c0_49, %c0_50] : memref<16x128x128xbf16, #tpu.memory_space<vmem>>, vector<1x128x128xbf16>
      %57 = vector.shape_cast %56 : vector<1x128x128xbf16> to vector<128x128xbf16>
      %cst_51 = arith.constant dense<0.000000e+00> : vector<9x128xf32>
      %58 = tpu.matmul %55, %57, %cst_51 {dimension_numbers = #tpu.dot_dimension_numbers<[1], [0], [0], [1], [0, 0, 1, 1], [], []>} : vector<9x128xbf16>, vector<128x128xbf16>, vector<9x128xf32> -> vector<9x128xf32>
      %59 = arith.addf %52, %58 : vector<9x128xf32>
      %c1_52 = arith.constant 1 : index
      %c0_53 = arith.constant 0 : index
      %c0_54 = arith.constant 0 : index
      %60 = tpu.strided_load %arg13[%c1_52, %c0_53, %c0_54] {strides = array<i32: 2, 2, 1>} : memref<8x8x128xf32, #tpu.memory_space<vmem>>, vector<3x3x128xf32>
      %61 = vector.shape_cast %60 : vector<3x3x128xf32> to vector<9x128xf32>
      %62 = arith.truncf %61 : vector<9x128xf32> to vector<9x128xbf16>
      %c4 = arith.constant 4 : index
      %c0_55 = arith.constant 0 : index
      %c0_56 = arith.constant 0 : index
      %63 = vector.load %arg4[%c4, %c0_55, %c0_56] : memref<16x128x128xbf16, #tpu.memory_space<vmem>>, vector<1x128x128xbf16>
      %64 = vector.shape_cast %63 : vector<1x128x128xbf16> to vector<128x128xbf16>
      %cst_57 = arith.constant dense<0.000000e+00> : vector<9x128xf32>
      %65 = tpu.matmul %62, %64, %cst_57 {dimension_numbers = #tpu.dot_dimension_numbers<[1], [0], [0], [1], [0, 0, 1, 1], [], []>} : vector<9x128xbf16>, vector<128x128xbf16>, vector<9x128xf32> -> vector<9x128xf32>
      %66 = arith.addf %59, %65 : vector<9x128xf32>
      %c1_58 = arith.constant 1 : index
      %c1_59 = arith.constant 1 : index
      %c0_60 = arith.constant 0 : index
      %67 = tpu.strided_load %arg13[%c1_58, %c1_59, %c0_60] {strides = array<i32: 2, 2, 1>} : memref<8x8x128xf32, #tpu.memory_space<vmem>>, vector<3x3x128xf32>
      %68 = vector.shape_cast %67 : vector<3x3x128xf32> to vector<9x128xf32>
      %69 = arith.truncf %68 : vector<9x128xf32> to vector<9x128xbf16>
      %c5 = arith.constant 5 : index
      %c0_61 = arith.constant 0 : index
      %c0_62 = arith.constant 0 : index
      %70 = vector.load %arg4[%c5, %c0_61, %c0_62] : memref<16x128x128xbf16, #tpu.memory_space<vmem>>, vector<1x128x128xbf16>
      %71 = vector.shape_cast %70 : vector<1x128x128xbf16> to vector<128x128xbf16>
      %cst_63 = arith.constant dense<0.000000e+00> : vector<9x128xf32>
      %72 = tpu.matmul %69, %71, %cst_63 {dimension_numbers = #tpu.dot_dimension_numbers<[1], [0], [0], [1], [0, 0, 1, 1], [], []>} : vector<9x128xbf16>, vector<128x128xbf16>, vector<9x128xf32> -> vector<9x128xf32>
      %73 = arith.addf %66, %72 : vector<9x128xf32>
      %c1_64 = arith.constant 1 : index
      %c2_65 = arith.constant 2 : index
      %c0_66 = arith.constant 0 : index
      %74 = tpu.strided_load %arg13[%c1_64, %c2_65, %c0_66] {strides = array<i32: 2, 2, 1>} : memref<8x8x128xf32, #tpu.memory_space<vmem>>, vector<3x3x128xf32>
      %75 = vector.shape_cast %74 : vector<3x3x128xf32> to vector<9x128xf32>
      %76 = arith.truncf %75 : vector<9x128xf32> to vector<9x128xbf16>
      %c6 = arith.constant 6 : index
      %c0_67 = arith.constant 0 : index
      %c0_68 = arith.constant 0 : index
      %77 = vector.load %arg4[%c6, %c0_67, %c0_68] : memref<16x128x128xbf16, #tpu.memory_space<vmem>>, vector<1x128x128xbf16>
      %78 = vector.shape_cast %77 : vector<1x128x128xbf16> to vector<128x128xbf16>
      %cst_69 = arith.constant dense<0.000000e+00> : vector<9x128xf32>
      %79 = tpu.matmul %76, %78, %cst_69 {dimension_numbers = #tpu.dot_dimension_numbers<[1], [0], [0], [1], [0, 0, 1, 1], [], []>} : vector<9x128xbf16>, vector<128x128xbf16>, vector<9x128xf32> -> vector<9x128xf32>
      %80 = arith.addf %73, %79 : vector<9x128xf32>
      %c1_70 = arith.constant 1 : index
      %c3_71 = arith.constant 3 : index
      %c0_72 = arith.constant 0 : index
      %81 = tpu.strided_load %arg13[%c1_70, %c3_71, %c0_72] {strides = array<i32: 2, 2, 1>} : memref<8x8x128xf32, #tpu.memory_space<vmem>>, vector<3x3x128xf32>
      %82 = vector.shape_cast %81 : vector<3x3x128xf32> to vector<9x128xf32>
      %83 = arith.truncf %82 : vector<9x128xf32> to vector<9x128xbf16>
      %c7 = arith.constant 7 : index
      %c0_73 = arith.constant 0 : index
      %c0_74 = arith.constant 0 : index
      %84 = vector.load %arg4[%c7, %c0_73, %c0_74] : memref<16x128x128xbf16, #tpu.memory_space<vmem>>, vector<1x128x128xbf16>
      %85 = vector.shape_cast %84 : vector<1x128x128xbf16> to vector<128x128xbf16>
      %cst_75 = arith.constant dense<0.000000e+00> : vector<9x128xf32>
      %86 = tpu.matmul %83, %85, %cst_75 {dimension_numbers = #tpu.dot_dimension_numbers<[1], [0], [0], [1], [0, 0, 1, 1], [], []>} : vector<9x128xbf16>, vector<128x128xbf16>, vector<9x128xf32> -> vector<9x128xf32>
      %87 = arith.addf %80, %86 : vector<9x128xf32>
      %c2_76 = arith.constant 2 : index
      %c0_77 = arith.constant 0 : index
      %c0_78 = arith.constant 0 : index
      %88 = tpu.strided_load %arg13[%c2_76, %c0_77, %c0_78] {strides = array<i32: 2, 2, 1>} : memref<8x8x128xf32, #tpu.memory_space<vmem>>, vector<3x3x128xf32>
      %89 = vector.shape_cast %88 : vector<3x3x128xf32> to vector<9x128xf32>
      %90 = arith.truncf %89 : vector<9x128xf32> to vector<9x128xbf16>
      %c8 = arith.constant 8 : index
      %c0_79 = arith.constant 0 : index
      %c0_80 = arith.constant 0 : index
      %91 = vector.load %arg4[%c8, %c0_79, %c0_80] : memref<16x128x128xbf16, #tpu.memory_space<vmem>>, vector<1x128x128xbf16>
      %92 = vector.shape_cast %91 : vector<1x128x128xbf16> to vector<128x128xbf16>
      %cst_81 = arith.constant dense<0.000000e+00> : vector<9x128xf32>
      %93 = tpu.matmul %90, %92, %cst_81 {dimension_numbers = #tpu.dot_dimension_numbers<[1], [0], [0], [1], [0, 0, 1, 1], [], []>} : vector<9x128xbf16>, vector<128x128xbf16>, vector<9x128xf32> -> vector<9x128xf32>
      %94 = arith.addf %87, %93 : vector<9x128xf32>
      %c2_82 = arith.constant 2 : index
      %c1_83 = arith.constant 1 : index
      %c0_84 = arith.constant 0 : index
      %95 = tpu.strided_load %arg13[%c2_82, %c1_83, %c0_84] {strides = array<i32: 2, 2, 1>} : memref<8x8x128xf32, #tpu.memory_space<vmem>>, vector<3x3x128xf32>
      %96 = vector.shape_cast %95 : vector<3x3x128xf32> to vector<9x128xf32>
      %97 = arith.truncf %96 : vector<9x128xf32> to vector<9x128xbf16>
      %c9 = arith.constant 9 : index
      %c0_85 = arith.constant 0 : index
      %c0_86 = arith.constant 0 : index
      %98 = vector.load %arg4[%c9, %c0_85, %c0_86] : memref<16x128x128xbf16, #tpu.memory_space<vmem>>, vector<1x128x128xbf16>
      %99 = vector.shape_cast %98 : vector<1x128x128xbf16> to vector<128x128xbf16>
      %cst_87 = arith.constant dense<0.000000e+00> : vector<9x128xf32>
      %100 = tpu.matmul %97, %99, %cst_87 {dimension_numbers = #tpu.dot_dimension_numbers<[1], [0], [0], [1], [0, 0, 1, 1], [], []>} : vector<9x128xbf16>, vector<128x128xbf16>, vector<9x128xf32> -> vector<9x128xf32>
      %101 = arith.addf %94, %100 : vector<9x128xf32>
      %c2_88 = arith.constant 2 : index
      %c2_89 = arith.constant 2 : index
      %c0_90 = arith.constant 0 : index
      %102 = tpu.strided_load %arg13[%c2_88, %c2_89, %c0_90] {strides = array<i32: 2, 2, 1>} : memref<8x8x128xf32, #tpu.memory_space<vmem>>, vector<3x3x128xf32>
      %103 = vector.shape_cast %102 : vector<3x3x128xf32> to vector<9x128xf32>
      %104 = arith.truncf %103 : vector<9x128xf32> to vector<9x128xbf16>
      %c10 = arith.constant 10 : index
      %c0_91 = arith.constant 0 : index
      %c0_92 = arith.constant 0 : index
      %105 = vector.load %arg4[%c10, %c0_91, %c0_92] : memref<16x128x128xbf16, #tpu.memory_space<vmem>>, vector<1x128x128xbf16>
      %106 = vector.shape_cast %105 : vector<1x128x128xbf16> to vector<128x128xbf16>
      %cst_93 = arith.constant dense<0.000000e+00> : vector<9x128xf32>
      %107 = tpu.matmul %104, %106, %cst_93 {dimension_numbers = #tpu.dot_dimension_numbers<[1], [0], [0], [1], [0, 0, 1, 1], [], []>} : vector<9x128xbf16>, vector<128x128xbf16>, vector<9x128xf32> -> vector<9x128xf32>
      %108 = arith.addf %101, %107 : vector<9x128xf32>
      %c2_94 = arith.constant 2 : index
      %c3_95 = arith.constant 3 : index
      %c0_96 = arith.constant 0 : index
      %109 = tpu.strided_load %arg13[%c2_94, %c3_95, %c0_96] {strides = array<i32: 2, 2, 1>} : memref<8x8x128xf32, #tpu.memory_space<vmem>>, vector<3x3x128xf32>
      %110 = vector.shape_cast %109 : vector<3x3x128xf32> to vector<9x128xf32>
      %111 = arith.truncf %110 : vector<9x128xf32> to vector<9x128xbf16>
      %c11 = arith.constant 11 : index
      %c0_97 = arith.constant 0 : index
      %c0_98 = arith.constant 0 : index
      %112 = vector.load %arg4[%c11, %c0_97, %c0_98] : memref<16x128x128xbf16, #tpu.memory_space<vmem>>, vector<1x128x128xbf16>
      %113 = vector.shape_cast %112 : vector<1x128x128xbf16> to vector<128x128xbf16>
      %cst_99 = arith.constant dense<0.000000e+00> : vector<9x128xf32>
      %114 = tpu.matmul %111, %113, %cst_99 {dimension_numbers = #tpu.dot_dimension_numbers<[1], [0], [0], [1], [0, 0, 1, 1], [], []>} : vector<9x128xbf16>, vector<128x128xbf16>, vector<9x128xf32> -> vector<9x128xf32>
      %115 = arith.addf %108, %114 : vector<9x128xf32>
      %c3_100 = arith.constant 3 : index
      %c0_101 = arith.constant 0 : index
      %c0_102 = arith.constant 0 : index
      %116 = tpu.strided_load %arg13[%c3_100, %c0_101, %c0_102] {strides = array<i32: 2, 2, 1>} : memref<8x8x128xf32, #tpu.memory_space<vmem>>, vector<3x3x128xf32>
      %117 = vector.shape_cast %116 : vector<3x3x128xf32> to vector<9x128xf32>
      %118 = arith.truncf %117 : vector<9x128xf32> to vector<9x128xbf16>
      %c12 = arith.constant 12 : index
      %c0_103 = arith.constant 0 : index
      %c0_104 = arith.constant 0 : index
      %119 = vector.load %arg4[%c12, %c0_103, %c0_104] : memref<16x128x128xbf16, #tpu.memory_space<vmem>>, vector<1x128x128xbf16>
      %120 = vector.shape_cast %119 : vector<1x128x128xbf16> to vector<128x128xbf16>
      %cst_105 = arith.constant dense<0.000000e+00> : vector<9x128xf32>
      %121 = tpu.matmul %118, %120, %cst_105 {dimension_numbers = #tpu.dot_dimension_numbers<[1], [0], [0], [1], [0, 0, 1, 1], [], []>} : vector<9x128xbf16>, vector<128x128xbf16>, vector<9x128xf32> -> vector<9x128xf32>
      %122 = arith.addf %115, %121 : vector<9x128xf32>
      %c3_106 = arith.constant 3 : index
      %c1_107 = arith.constant 1 : index
      %c0_108 = arith.constant 0 : index
      %123 = tpu.strided_load %arg13[%c3_106, %c1_107, %c0_108] {strides = array<i32: 2, 2, 1>} : memref<8x8x128xf32, #tpu.memory_space<vmem>>, vector<3x3x128xf32>
      %124 = vector.shape_cast %123 : vector<3x3x128xf32> to vector<9x128xf32>
      %125 = arith.truncf %124 : vector<9x128xf32> to vector<9x128xbf16>
      %c13 = arith.constant 13 : index
      %c0_109 = arith.constant 0 : index
      %c0_110 = arith.constant 0 : index
      %126 = vector.load %arg4[%c13, %c0_109, %c0_110] : memref<16x128x128xbf16, #tpu.memory_space<vmem>>, vector<1x128x128xbf16>
      %127 = vector.shape_cast %126 : vector<1x128x128xbf16> to vector<128x128xbf16>
      %cst_111 = arith.constant dense<0.000000e+00> : vector<9x128xf32>
      %128 = tpu.matmul %125, %127, %cst_111 {dimension_numbers = #tpu.dot_dimension_numbers<[1], [0], [0], [1], [0, 0, 1, 1], [], []>} : vector<9x128xbf16>, vector<128x128xbf16>, vector<9x128xf32> -> vector<9x128xf32>
      %129 = arith.addf %122, %128 : vector<9x128xf32>
      %c3_112 = arith.constant 3 : index
      %c2_113 = arith.constant 2 : index
      %c0_114 = arith.constant 0 : index
      %130 = tpu.strided_load %arg13[%c3_112, %c2_113, %c0_114] {strides = array<i32: 2, 2, 1>} : memref<8x8x128xf32, #tpu.memory_space<vmem>>, vector<3x3x128xf32>
      %131 = vector.shape_cast %130 : vector<3x3x128xf32> to vector<9x128xf32>
      %132 = arith.truncf %131 : vector<9x128xf32> to vector<9x128xbf16>
      %c14 = arith.constant 14 : index
      %c0_115 = arith.constant 0 : index
      %c0_116 = arith.constant 0 : index
      %133 = vector.load %arg4[%c14, %c0_115, %c0_116] : memref<16x128x128xbf16, #tpu.memory_space<vmem>>, vector<1x128x128xbf16>
      %134 = vector.shape_cast %133 : vector<1x128x128xbf16> to vector<128x128xbf16>
      %cst_117 = arith.constant dense<0.000000e+00> : vector<9x128xf32>
      %135 = tpu.matmul %132, %134, %cst_117 {dimension_numbers = #tpu.dot_dimension_numbers<[1], [0], [0], [1], [0, 0, 1, 1], [], []>} : vector<9x128xbf16>, vector<128x128xbf16>, vector<9x128xf32> -> vector<9x128xf32>
      %136 = arith.addf %129, %135 : vector<9x128xf32>
      %c3_118 = arith.constant 3 : index
      %c3_119 = arith.constant 3 : index
      %c0_120 = arith.constant 0 : index
      %137 = tpu.strided_load %arg13[%c3_118, %c3_119, %c0_120] {strides = array<i32: 2, 2, 1>} : memref<8x8x128xf32, #tpu.memory_space<vmem>>, vector<3x3x128xf32>
      %138 = vector.shape_cast %137 : vector<3x3x128xf32> to vector<9x128xf32>
      %139 = arith.truncf %138 : vector<9x128xf32> to vector<9x128xbf16>
      %c15 = arith.constant 15 : index
      %c0_121 = arith.constant 0 : index
      %c0_122 = arith.constant 0 : index
      %140 = vector.load %arg4[%c15, %c0_121, %c0_122] : memref<16x128x128xbf16, #tpu.memory_space<vmem>>, vector<1x128x128xbf16>
      %141 = vector.shape_cast %140 : vector<1x128x128xbf16> to vector<128x128xbf16>
      %cst_123 = arith.constant dense<0.000000e+00> : vector<9x128xf32>
      %142 = tpu.matmul %139, %141, %cst_123 {dimension_numbers = #tpu.dot_dimension_numbers<[1], [0], [0], [1], [0, 0, 1, 1], [], []>} : vector<9x128xbf16>, vector<128x128xbf16>, vector<9x128xf32> -> vector<9x128xf32>
      %143 = arith.addf %136, %142 : vector<9x128xf32>
      %c0_124 = arith.constant 0 : index
      %c0_125 = arith.constant 0 : index
      %144 = vector.load %arg5[%c0_124, %c0_125] : memref<1x128xf32, #tpu.memory_space<vmem>>, vector<1x128xf32>
      %145 = vector.broadcast %144 : vector<1x128xf32> to vector<9x128xf32>
      %146 = arith.addf %143, %145 : vector<9x128xf32>
      %cst_126 = arith.constant 0.000000e+00 : f32
      %147 = vector.broadcast %cst_126 : f32 to vector<9x128xf32>
      %148 = arith.maximumf %146, %147 : vector<9x128xf32>
      %149 = vector.shape_cast %148 : vector<9x128xf32> to vector<3x3x128xf32>
      %150 = arith.truncf %149 : vector<3x3x128xf32> to vector<3x3x128xbf16>
      %c0_127 = arith.constant 0 : index
      %c0_128 = arith.constant 0 : index
      %c0_129 = arith.constant 0 : index
      %151 = vector.load %arg14[%c0_127, %c0_128, %c0_129] : memref<3x3x128xbf16, #tpu.memory_space<vmem>>, vector<3x3x128xbf16>
      tpu.vector_store %arg14[%c0_127, %c0_128, %c0_129], %150 {strides = array<i32>} : memref<3x3x128xbf16, #tpu.memory_space<vmem>>, vector<3x3x128xbf16>,
      %cst_130 = arith.constant 0.000000e+00 : f32
      %152 = vector.broadcast %cst_130 : f32 to vector<1x128xf32>
      %c0_131 = arith.constant 0 : index
      %c0_132 = arith.constant 0 : index
      %c0_133 = arith.constant 0 : index
      %153 = vector.load %arg14[%c0_131, %c0_132, %c0_133] : memref<3x3x128xbf16, #tpu.memory_space<vmem>>, vector<1x1x128xbf16>
      %154 = vector.shape_cast %153 : vector<1x1x128xbf16> to vector<1x128xbf16>
      %c0_134 = arith.constant 0 : index
      %c0_135 = arith.constant 0 : index
      %c0_136 = arith.constant 0 : index
      %155 = vector.load %arg6[%c0_134, %c0_135, %c0_136] : memref<9x128x128xbf16, #tpu.memory_space<vmem>>, vector<1x128x128xbf16>
      %156 = vector.shape_cast %155 : vector<1x128x128xbf16> to vector<128x128xbf16>
      %cst_137 = arith.constant dense<0.000000e+00> : vector<1x128xf32>
      %157 = tpu.matmul %154, %156, %cst_137 {dimension_numbers = #tpu.dot_dimension_numbers<[1], [0], [0], [1], [0, 0, 1, 1], [], []>} : vector<1x128xbf16>, vector<128x128xbf16>, vector<1x128xf32> -> vector<1x128xf32>
      %158 = arith.addf %152, %157 : vector<1x128xf32>
      %c0_138 = arith.constant 0 : index
      %c1_139 = arith.constant 1 : index
      %c0_140 = arith.constant 0 : index
      %159 = vector.load %arg14[%c0_138, %c1_139, %c0_140] : memref<3x3x128xbf16, #tpu.memory_space<vmem>>, vector<1x1x128xbf16>
      %160 = vector.shape_cast %159 : vector<1x1x128xbf16> to vector<1x128xbf16>
      %c1_141 = arith.constant 1 : index
      %c0_142 = arith.constant 0 : index
      %c0_143 = arith.constant 0 : index
      %161 = vector.load %arg6[%c1_141, %c0_142, %c0_143] : memref<9x128x128xbf16, #tpu.memory_space<vmem>>, vector<1x128x128xbf16>
      %162 = vector.shape_cast %161 : vector<1x128x128xbf16> to vector<128x128xbf16>
      %cst_144 = arith.constant dense<0.000000e+00> : vector<1x128xf32>
      %163 = tpu.matmul %160, %162, %cst_144 {dimension_numbers = #tpu.dot_dimension_numbers<[1], [0], [0], [1], [0, 0, 1, 1], [], []>} : vector<1x128xbf16>, vector<128x128xbf16>, vector<1x128xf32> -> vector<1x128xf32>
      %164 = arith.addf %158, %163 : vector<1x128xf32>
      %c0_145 = arith.constant 0 : index
      %c2_146 = arith.constant 2 : index
      %c0_147 = arith.constant 0 : index
      %165 = vector.load %arg14[%c0_145, %c2_146, %c0_147] : memref<3x3x128xbf16, #tpu.memory_space<vmem>>, vector<1x1x128xbf16>
      %166 = vector.shape_cast %165 : vector<1x1x128xbf16> to vector<1x128xbf16>
      %c2_148 = arith.constant 2 : index
      %c0_149 = arith.constant 0 : index
      %c0_150 = arith.constant 0 : index
      %167 = vector.load %arg6[%c2_148, %c0_149, %c0_150] : memref<9x128x128xbf16, #tpu.memory_space<vmem>>, vector<1x128x128xbf16>
      %168 = vector.shape_cast %167 : vector<1x128x128xbf16> to vector<128x128xbf16>
      %cst_151 = arith.constant dense<0.000000e+00> : vector<1x128xf32>
      %169 = tpu.matmul %166, %168, %cst_151 {dimension_numbers = #tpu.dot_dimension_numbers<[1], [0], [0], [1], [0, 0, 1, 1], [], []>} : vector<1x128xbf16>, vector<128x128xbf16>, vector<1x128xf32> -> vector<1x128xf32>
      %170 = arith.addf %164, %169 : vector<1x128xf32>
      %c1_152 = arith.constant 1 : index
      %c0_153 = arith.constant 0 : index
      %c0_154 = arith.constant 0 : index
      %171 = vector.load %arg14[%c1_152, %c0_153, %c0_154] : memref<3x3x128xbf16, #tpu.memory_space<vmem>>, vector<1x1x128xbf16>
      %172 = vector.shape_cast %171 : vector<1x1x128xbf16> to vector<1x128xbf16>
      %c3_155 = arith.constant 3 : index
      %c0_156 = arith.constant 0 : index
      %c0_157 = arith.constant 0 : index
      %173 = vector.load %arg6[%c3_155, %c0_156, %c0_157] : memref<9x128x128xbf16, #tpu.memory_space<vmem>>, vector<1x128x128xbf16>
      %174 = vector.shape_cast %173 : vector<1x128x128xbf16> to vector<128x128xbf16>
      %cst_158 = arith.constant dense<0.000000e+00> : vector<1x128xf32>
      %175 = tpu.matmul %172, %174, %cst_158 {dimension_numbers = #tpu.dot_dimension_numbers<[1], [0], [0], [1], [0, 0, 1, 1], [], []>} : vector<1x128xbf16>, vector<128x128xbf16>, vector<1x128xf32> -> vector<1x128xf32>
      %176 = arith.addf %170, %175 : vector<1x128xf32>
      %c1_159 = arith.constant 1 : index
      %c1_160 = arith.constant 1 : index
      %c0_161 = arith.constant 0 : index
      %177 = vector.load %arg14[%c1_159, %c1_160, %c0_161] : memref<3x3x128xbf16, #tpu.memory_space<vmem>>, vector<1x1x128xbf16>
      %178 = vector.shape_cast %177 : vector<1x1x128xbf16> to vector<1x128xbf16>
      %c4_162 = arith.constant 4 : index
      %c0_163 = arith.constant 0 : index
      %c0_164 = arith.constant 0 : index
      %179 = vector.load %arg6[%c4_162, %c0_163, %c0_164] : memref<9x128x128xbf16, #tpu.memory_space<vmem>>, vector<1x128x128xbf16>
      %180 = vector.shape_cast %179 : vector<1x128x128xbf16> to vector<128x128xbf16>
      %cst_165 = arith.constant dense<0.000000e+00> : vector<1x128xf32>
      %181 = tpu.matmul %178, %180, %cst_165 {dimension_numbers = #tpu.dot_dimension_numbers<[1], [0], [0], [1], [0, 0, 1, 1], [], []>} : vector<1x128xbf16>, vector<128x128xbf16>, vector<1x128xf32> -> vector<1x128xf32>
      %182 = arith.addf %176, %181 : vector<1x128xf32>
      %c1_166 = arith.constant 1 : index
      %c2_167 = arith.constant 2 : index
      %c0_168 = arith.constant 0 : index
      %183 = vector.load %arg14[%c1_166, %c2_167, %c0_168] : memref<3x3x128xbf16, #tpu.memory_space<vmem>>, vector<1x1x128xbf16>
      %184 = vector.shape_cast %183 : vector<1x1x128xbf16> to vector<1x128xbf16>
      %c5_169 = arith.constant 5 : index
      %c0_170 = arith.constant 0 : index
      %c0_171 = arith.constant 0 : index
      %185 = vector.load %arg6[%c5_169, %c0_170, %c0_171] : memref<9x128x128xbf16, #tpu.memory_space<vmem>>, vector<1x128x128xbf16>
      %186 = vector.shape_cast %185 : vector<1x128x128xbf16> to vector<128x128xbf16>
      %cst_172 = arith.constant dense<0.000000e+00> : vector<1x128xf32>
      %187 = tpu.matmul %184, %186, %cst_172 {dimension_numbers = #tpu.dot_dimension_numbers<[1], [0], [0], [1], [0, 0, 1, 1], [], []>} : vector<1x128xbf16>, vector<128x128xbf16>, vector<1x128xf32> -> vector<1x128xf32>
      %188 = arith.addf %182, %187 : vector<1x128xf32>
      %c2_173 = arith.constant 2 : index
      %c0_174 = arith.constant 0 : index
      %c0_175 = arith.constant 0 : index
      %189 = vector.load %arg14[%c2_173, %c0_174, %c0_175] : memref<3x3x128xbf16, #tpu.memory_space<vmem>>, vector<1x1x128xbf16>
      %190 = vector.shape_cast %189 : vector<1x1x128xbf16> to vector<1x128xbf16>
      %c6_176 = arith.constant 6 : index
      %c0_177 = arith.constant 0 : index
      %c0_178 = arith.constant 0 : index
      %191 = vector.load %arg6[%c6_176, %c0_177, %c0_178] : memref<9x128x128xbf16, #tpu.memory_space<vmem>>, vector<1x128x128xbf16>
      %192 = vector.shape_cast %191 : vector<1x128x128xbf16> to vector<128x128xbf16>
      %cst_179 = arith.constant dense<0.000000e+00> : vector<1x128xf32>
      %193 = tpu.matmul %190, %192, %cst_179 {dimension_numbers = #tpu.dot_dimension_numbers<[1], [0], [0], [1], [0, 0, 1, 1], [], []>} : vector<1x128xbf16>, vector<128x128xbf16>, vector<1x128xf32> -> vector<1x128xf32>
      %194 = arith.addf %188, %193 : vector<1x128xf32>
      %c2_180 = arith.constant 2 : index
      %c1_181 = arith.constant 1 : index
      %c0_182 = arith.constant 0 : index
      %195 = vector.load %arg14[%c2_180, %c1_181, %c0_182] : memref<3x3x128xbf16, #tpu.memory_space<vmem>>, vector<1x1x128xbf16>
      %196 = vector.shape_cast %195 : vector<1x1x128xbf16> to vector<1x128xbf16>
      %c7_183 = arith.constant 7 : index
      %c0_184 = arith.constant 0 : index
      %c0_185 = arith.constant 0 : index
      %197 = vector.load %arg6[%c7_183, %c0_184, %c0_185] : memref<9x128x128xbf16, #tpu.memory_space<vmem>>, vector<1x128x128xbf16>
      %198 = vector.shape_cast %197 : vector<1x128x128xbf16> to vector<128x128xbf16>
      %cst_186 = arith.constant dense<0.000000e+00> : vector<1x128xf32>
      %199 = tpu.matmul %196, %198, %cst_186 {dimension_numbers = #tpu.dot_dimension_numbers<[1], [0], [0], [1], [0, 0, 1, 1], [], []>} : vector<1x128xbf16>, vector<128x128xbf16>, vector<1x128xf32> -> vector<1x128xf32>
      %200 = arith.addf %194, %199 : vector<1x128xf32>
      %c2_187 = arith.constant 2 : index
      %c2_188 = arith.constant 2 : index
      %c0_189 = arith.constant 0 : index
      %201 = vector.load %arg14[%c2_187, %c2_188, %c0_189] : memref<3x3x128xbf16, #tpu.memory_space<vmem>>, vector<1x1x128xbf16>
      %202 = vector.shape_cast %201 : vector<1x1x128xbf16> to vector<1x128xbf16>
      %c8_190 = arith.constant 8 : index
      %c0_191 = arith.constant 0 : index
      %c0_192 = arith.constant 0 : index
      %203 = vector.load %arg6[%c8_190, %c0_191, %c0_192] : memref<9x128x128xbf16, #tpu.memory_space<vmem>>, vector<1x128x128xbf16>
      %204 = vector.shape_cast %203 : vector<1x128x128xbf16> to vector<128x128xbf16>
      %cst_193 = arith.constant dense<0.000000e+00> : vector<1x128xf32>
      %205 = tpu.matmul %202, %204, %cst_193 {dimension_numbers = #tpu.dot_dimension_numbers<[1], [0], [0], [1], [0, 0, 1, 1], [], []>} : vector<1x128xbf16>, vector<128x128xbf16>, vector<1x128xf32> -> vector<1x128xf32>
      %206 = arith.addf %200, %205 : vector<1x128xf32>
      %c0_194 = arith.constant 0 : index
      %c0_195 = arith.constant 0 : index
      %207 = vector.load %arg7[%c0_194, %c0_195] : memref<1x128xf32, #tpu.memory_space<vmem>>, vector<1x128xf32>
      %208 = arith.addf %206, %207 : vector<1x128xf32>
      %cst_196 = arith.constant 0.000000e+00 : f32
      %209 = vector.broadcast %cst_196 : f32 to vector<1x128xf32>
      %210 = arith.maximumf %208, %209 : vector<1x128xf32>
      %211 = vector.extract_strided_slice %210 {offsets = [0, 0], sizes = [1, 64], strides = [1, 1]} : vector<1x128xf32> to vector<1x64xf32>
      %212 = arith.index_cast %arg16 : i32 to index
      %c0_197 = arith.constant 0 : index
      %213 = vector.load %arg15[%212, %c0_197] : memref<8x64xf32, #tpu.memory_space<vmem>>, vector<1x64xf32>
      tpu.vector_store %arg15[%212, %c0_197], %211 {strides = array<i32>} : memref<8x64xf32, #tpu.memory_space<vmem>>, vector<1x64xf32>,
    }
    %c8_i32_0 = arith.constant 8 : i32
    %c0 = arith.constant 0 : index
    %c0_1 = arith.constant 0 : index
    %1 = vector.load %arg15[%c0, %c0_1] : memref<8x64xf32, #tpu.memory_space<vmem>>, vector<8x64xf32>
    %2 = arith.truncf %1 : vector<8x64xf32> to vector<8x64xbf16>
    %c0_2 = arith.constant 0 : index
    %c0_3 = arith.constant 0 : index
    %3 = vector.load %arg8[%c0_2, %c0_3] : memref<64x512xbf16, #tpu.memory_space<vmem>>, vector<64x512xbf16>
    %cst = arith.constant dense<0.000000e+00> : vector<8x512xf32>
    %4 = tpu.matmul %2, %3, %cst {dimension_numbers = #tpu.dot_dimension_numbers<[1], [0], [0], [1], [0, 0, 1, 1], [], []>} : vector<8x64xbf16>, vector<64x512xbf16>, vector<8x512xf32> -> vector<8x512xf32>
    %c0_4 = arith.constant 0 : index
    %c0_5 = arith.constant 0 : index
    %5 = vector.load %arg9[%c0_4, %c0_5] : memref<1x512xf32, #tpu.memory_space<vmem>>, vector<1x512xf32>
    %6 = vector.broadcast %5 : vector<1x512xf32> to vector<8x512xf32>
    %7 = arith.addf %4, %6 : vector<8x512xf32>
    %cst_6 = arith.constant 0.000000e+00 : f32
    %8 = vector.broadcast %cst_6 : f32 to vector<8x512xf32>
    %9 = arith.maximumf %7, %8 : vector<8x512xf32>
    %10 = arith.truncf %9 : vector<8x512xf32> to vector<8x512xbf16>
    %c0_7 = arith.constant 0 : index
    %c0_8 = arith.constant 0 : index
    %11 = vector.load %arg10[%c0_7, %c0_8] : memref<512x128xbf16, #tpu.memory_space<vmem>>, vector<512x128xbf16>
    %cst_9 = arith.constant dense<0.000000e+00> : vector<8x128xf32>
    %12 = tpu.matmul %10, %11, %cst_9 {dimension_numbers = #tpu.dot_dimension_numbers<[1], [0], [0], [1], [0, 0, 1, 1], [], []>} : vector<8x512xbf16>, vector<512x128xbf16>, vector<8x128xf32> -> vector<8x128xf32>
    %c0_10 = arith.constant 0 : index
    %c0_11 = arith.constant 0 : index
    %13 = vector.load %arg11[%c0_10, %c0_11] : memref<1x128xf32, #tpu.memory_space<vmem>>, vector<1x128xf32>
    %14 = vector.broadcast %13 : vector<1x128xf32> to vector<8x128xf32>
    %15 = arith.addf %12, %14 : vector<8x128xf32>
    %c0_12 = arith.constant 0 : index
    %c0_13 = arith.constant 0 : index
    %c0_14 = arith.constant 0 : index
    %16 = vector.load %arg12[%c0_12, %c0_13, %c0_14] : memref<1x8x128xf32, #tpu.memory_space<vmem>>, vector<1x8x128xf32>
    %17 = vector.shape_cast %16 : vector<1x8x128xf32> to vector<8x128xf32>
    %18 = vector.shape_cast %15 : vector<8x128xf32> to vector<1x8x128xf32>
    tpu.vector_store %arg12[%c0_12, %c0_13, %c0_14], %18 {strides = array<i32>} : memref<1x8x128xf32, #tpu.memory_space<vmem>>, vector<1x8x128xf32>,
    return
  }
  func.func @transform_0(%arg0: i32) -> (i32, i32, i32) {
    %c0_i32 = arith.constant 0 : i32
    %c0_i32_0 = arith.constant 0 : i32
    %c0_i32_1 = arith.constant 0 : i32
    return %arg0, %c0_i32, %c0_i32_0 : i32, i32, i32
  }
  func.func @transform_1(%arg0: i32) -> (i32, i32) {
    %c0_i32 = arith.constant 0 : i32
    %c0_i32_0 = arith.constant 0 : i32
    %c0_i32_1 = arith.constant 0 : i32
    return %c0_i32, %c0_i32_0 : i32, i32
  }
  func.func @transform_2(%arg0: i32) -> (i32, i32) {
    %c0_i32 = arith.constant 0 : i32
    %c0_i32_0 = arith.constant 0 : i32
    %c0_i32_1 = arith.constant 0 : i32
    return %c0_i32, %c0_i32_0 : i32, i32
  }
  func.func @transform_3(%arg0: i32) -> (i32, i32, i32) {
    %c0_i32 = arith.constant 0 : i32
    %c0_i32_0 = arith.constant 0 : i32
    %c0_i32_1 = arith.constant 0 : i32
    %c0_i32_2 = arith.constant 0 : i32
    return %c0_i32, %c0_i32_0, %c0_i32_1 : i32, i32, i32
  }
  func.func @transform_4(%arg0: i32) -> (i32, i32) {
    %c0_i32 = arith.constant 0 : i32
    %c0_i32_0 = arith.constant 0 : i32
    %c0_i32_1 = arith.constant 0 : i32
    return %c0_i32, %c0_i32_0 : i32, i32
  }
  func.func @transform_5(%arg0: i32) -> (i32, i32, i32) {
    %c0_i32 = arith.constant 0 : i32
    %c0_i32_0 = arith.constant 0 : i32
    %c0_i32_1 = arith.constant 0 : i32
    %c0_i32_2 = arith.constant 0 : i32
    return %c0_i32, %c0_i32_0, %c0_i32_1 : i32, i32, i32
  }
  func.func @transform_6(%arg0: i32) -> (i32, i32) {
    %c0_i32 = arith.constant 0 : i32
    %c0_i32_0 = arith.constant 0 : i32
    %c0_i32_1 = arith.constant 0 : i32
    return %c0_i32, %c0_i32_0 : i32, i32
  }
  func.func @transform_7(%arg0: i32) -> (i32, i32) {
    %c0_i32 = arith.constant 0 : i32
    %c0_i32_0 = arith.constant 0 : i32
    %c0_i32_1 = arith.constant 0 : i32
    return %c0_i32, %c0_i32_0 : i32, i32
  }
  func.func @transform_8(%arg0: i32) -> (i32, i32) {
    %c0_i32 = arith.constant 0 : i32
    %c0_i32_0 = arith.constant 0 : i32
    %c0_i32_1 = arith.constant 0 : i32
    return %c0_i32, %c0_i32_0 : i32, i32
  }
  func.func @transform_9(%arg0: i32) -> (i32, i32) {
    %c0_i32 = arith.constant 0 : i32
    %c0_i32_0 = arith.constant 0 : i32
    %c0_i32_1 = arith.constant 0 : i32
    return %c0_i32, %c0_i32_0 : i32, i32
  }
  func.func @transform_10(%arg0: i32) -> (i32, i32) {
    %c0_i32 = arith.constant 0 : i32
    %c0_i32_0 = arith.constant 0 : i32
    %c0_i32_1 = arith.constant 0 : i32
    return %c0_i32, %c0_i32_0 : i32, i32
  }
  func.func @transform_11(%arg0: i32) -> (i32, i32, i32) {
    %c0_i32 = arith.constant 0 : i32
    %c0_i32_0 = arith.constant 0 : i32
    %c0_i32_1 = arith.constant 0 : i32
    return %arg0, %c0_i32, %c0_i32_0 : i32, i32, i32
  }
}

</mosaic_0001>

<llo_original>
// kernel: _lambda_.1
$region0: #{_lambda_.1}
  #allocation0 [shape = 'u32[]', space=smem, size = 0x4, offset = 0x4, fixed_abs, tag = 'smem constant byte address 0x4 - core index']
  #allocation1 [shape = 'u32[144,128]{1,0:T(1,128)}', space=vmem, size = 0x12000, scoped, tag = 'internal scratch']
  #allocation2 [shape = 'f32[8,8,128]{2,1,0:T(8,128)}', space=vmem, size = 0x8000, scoped, tag = 'scratch operand']
  #allocation3 [shape = 'bf16[3,3,128]{2,1,0:T(4,128)(2,1)}', space=vmem, size = 0xc00, scoped, tag = 'scratch operand']
  #allocation4 [shape = 'f32[8,64]{1,0:T(8,128)}', space=vmem, size = 0x1000, scoped, tag = 'scratch operand']
  %s0 = inlined_call_operand.vmem [shape: bf16[16,64,256], index: 0, kind: input, shape index: {}]
  %s1 = inlined_call_operand.vmem [shape: bf16[256,128], index: 1, kind: input, shape index: {}]
  %s2 = inlined_call_operand.vmem [shape: f32[1,128], index: 2, kind: input, shape index: {}]
  %s3 = inlined_call_operand.vmem [shape: bf16[16,128,128], index: 3, kind: input, shape index: {}]
  %s4 = inlined_call_operand.vmem [shape: f32[1,128], index: 4, kind: input, shape index: {}]
  %s5 = inlined_call_operand.vmem [shape: bf16[9,128,128], index: 5, kind: input, shape index: {}]
  %s6 = inlined_call_operand.vmem [shape: f32[1,128], index: 6, kind: input, shape index: {}]
  %s7 = inlined_call_operand.vmem [shape: bf16[64,512], index: 7, kind: input, shape index: {}]
  %s8 = inlined_call_operand.vmem [shape: f32[1,512], index: 8, kind: input, shape index: {}]
  %s9 = inlined_call_operand.vmem [shape: bf16[512,128], index: 9, kind: input, shape index: {}]
  %s10 = inlined_call_operand.vmem [shape: f32[1,128], index: 10, kind: input, shape index: {}]
  %s11 = inlined_call_operand.vmem [shape: f32[2,8,128], index: 11, kind: output, shape index: {}]
  %s12 = sld [smem:[#allocation0]]
  $region84: #{_lambda_.1} parent=0
    _
  %s14 = ssub.s32 1, %s12
  %s15 = scalar_select 0, %s14, %s12
  loop: start=0, step=1, limit=4
  $region2: #{_lambda_.1} parent=0 // loop_pre_header
    _
  $region3: #{_lambda_.1} parent=0 // loop_header
    %s17 = sphi 0, %s21
    %p18 = scmp.ge.s32.totalorder %s17, 4
    %s27 = sphi 0, %s29
    %s30 = sphi 0, %s27
    %s31 = sphi 0, %s30
    %s47 = sphi 0, %s31
    %s51 = sphi 0, %s51
    %s53 = sphi 0, %s51
    %s54 = sphi 0, %s53
    %s68 = sphi 0, %s54
    %s72 = sphi 0, %s72
    %s74 = sphi 0, %s72
    %s75 = sphi 0, %s74
    %s89 = sphi 0, %s75
    %s93 = sphi 0, %s93
    %s95 = sphi 0, %s93
    %s96 = sphi 0, %s95
    %s110 = sphi 0, %s96
    %s114 = sphi 0, %s114
    %s116 = sphi 0, %s114
    %s117 = sphi 0, %s116
    %s131 = sphi 0, %s117
    %s135 = sphi 0, %s135
    %s137 = sphi 0, %s135
    %s138 = sphi 0, %s137
    %s152 = sphi 0, %s138
    %s156 = sphi 0, %s156
    %s158 = sphi 0, %s156
    %s159 = sphi 0, %s158
    %s173 = sphi 0, %s159
    %s177 = sphi 0, %s177
    %s179 = sphi 0, %s177
    %s180 = sphi 0, %s179
    %s194 = sphi 0, %s180
    %s198 = sphi 0, %s198
    %s200 = sphi 0, %s198
    %s201 = sphi 0, %s200
    %s215 = sphi 0, %s201
    %s219 = sphi 0, %s219
    %s221 = sphi 0, %s219
    %s222 = sphi 0, %s221
    %s236 = sphi 0, %s222
    %s240 = sphi 0, %s240
    %s242 = sphi 0, %s240
    %s243 = sphi 0, %s242
    %s257 = sphi 0, %s243
    %s263 = sphi 0, %s265
    %s266 = sphi 0, %s263
    %s267 = sphi 0, %s266
    %s283 = sphi 0, %s267
  $region4: #{_lambda_.1} parent=0 // loop_header_branch
    %20 = sbr.rel (%p18) target = $region8
  $region5: #{_lambda_.1} parent=0 // loop_body
    %s22 = ssub.s32 %s17, 1
    %s23 = ssub.s32 %s17, 2
    %s24 = sadd.s32 %s17, 1
    %s25 = ssub.s32 %s17, %s24
    %p26 = scmp.eq.s32.totalorder %s25, 0
    %s28 = sadd.s32 %s27, 1
    %s29 = scalar_select %p26, %s27, %s28
    %p32 = pneg %p26
    %p33 = scmp.eq.s32.totalorder %s17, 1
    %p34 = por %p32, %p33
    %p35 = scmp.ne.s32.totalorder %s27, %s30
    %p36 = scmp.eq.s32.totalorder %s17, 0
    %p37 = por %p35, %p36
    %p38 = scmp.ne.s32.totalorder %s27, %s30
    %p39 = scmp.eq.s32.totalorder %s22, 1
    %p40 = por %p38, %p39
    %p41 = scmp.ne.s32.totalorder %s30, %s31
    %p42 = scmp.eq.s32.totalorder %s22, 0
    %p43 = por %p41, %p42
    %p44 = scmp.ne.s32.totalorder %s30, %s31
    %p45 = scmp.eq.s32.totalorder %s23, 1
    %p46 = por %p44, %p45
    %p48 = scmp.ne.s32.totalorder %s31, %s47
    %p49 = scmp.eq.s32.totalorder %s23, 0
    %p50 = por %p48, %p49
    %s52 = sadd.s32 %s51, 1
    %p55 = scmp.eq.s32.totalorder %s17, 1
    %p56 = scmp.ne.s32.totalorder %s51, %s53
    %p57 = scmp.eq.s32.totalorder %s17, 0
    %p58 = por %p56, %p57
    %p59 = scmp.ne.s32.totalorder %s51, %s53
    %p60 = scmp.eq.s32.totalorder %s22, 1
    %p61 = por %p59, %p60
    %p62 = scmp.ne.s32.totalorder %s53, %s54
    %p63 = scmp.eq.s32.totalorder %s22, 0
    %p64 = por %p62, %p63
    %p65 = scmp.ne.s32.totalorder %s53, %s54
    %p66 = scmp.eq.s32.totalorder %s23, 1
    %p67 = por %p65, %p66
    %p69 = scmp.ne.s32.totalorder %s54, %s68
    %p70 = scmp.eq.s32.totalorder %s23, 0
    %p71 = por %p69, %p70
    %s73 = sadd.s32 %s72, 1
    %p76 = scmp.eq.s32.totalorder %s17, 1
    %p77 = scmp.ne.s32.totalorder %s72, %s74
    %p78 = scmp.eq.s32.totalorder %s17, 0
    %p79 = por %p77, %p78
    %p80 = scmp.ne.s32.totalorder %s72, %s74
    %p81 = scmp.eq.s32.totalorder %s22, 1
    %p82 = por %p80, %p81
    %p83 = scmp.ne.s32.totalorder %s74, %s75
    %p84 = scmp.eq.s32.totalorder %s22, 0
    %p85 = por %p83, %p84
    %p86 = scmp.ne.s32.totalorder %s74, %s75
    %p87 = scmp.eq.s32.totalorder %s23, 1
    %p88 = por %p86, %p87
    %p90 = scmp.ne.s32.totalorder %s75, %s89
    %p91 = scmp.eq.s32.totalorder %s23, 0
    %p92 = por %p90, %p91
    %s94 = sadd.s32 %s93, 1
    %p97 = scmp.eq.s32.totalorder %s17, 1
    %p98 = scmp.ne.s32.totalorder %s93, %s95
    %p99 = scmp.eq.s32.totalorder %s17, 0
    %p100 = por %p98, %p99
    %p101 = scmp.ne.s32.totalorder %s93, %s95
    %p102 = scmp.eq.s32.totalorder %s22, 1
    %p103 = por %p101, %p102
    %p104 = scmp.ne.s32.totalorder %s95, %s96
    %p105 = scmp.eq.s32.totalorder %s22, 0
    %p106 = por %p104, %p105
    %p107 = scmp.ne.s32.totalorder %s95, %s96
    %p108 = scmp.eq.s32.totalorder %s23, 1
    %p109 = por %p107, %p108
    %p111 = scmp.ne.s32.totalorder %s96, %s110
    %p112 = scmp.eq.s32.totalorder %s23, 0
    %p113 = por %p111, %p112
    %s115 = sadd.s32 %s114, 1
    %p118 = scmp.eq.s32.totalorder %s17, 1
    %p119 = scmp.ne.s32.totalorder %s114, %s116
    %p120 = scmp.eq.s32.totalorder %s17, 0
    %p121 = por %p119, %p120
    %p122 = scmp.ne.s32.totalorder %s114, %s116
    %p123 = scmp.eq.s32.totalorder %s22, 1
    %p124 = por %p122, %p123
    %p125 = scmp.ne.s32.totalorder %s116, %s117
    %p126 = scmp.eq.s32.totalorder %s22, 0
    %p127 = por %p125, %p126
    %p128 = scmp.ne.s32.totalorder %s116, %s117
    %p129 = scmp.eq.s32.totalorder %s23, 1
    %p130 = por %p128, %p129
    %p132 = scmp.ne.s32.totalorder %s117, %s131
    %p133 = scmp.eq.s32.totalorder %s23, 0
    %p134 = por %p132, %p133
    %s136 = sadd.s32 %s135, 1
    %p139 = scmp.eq.s32.totalorder %s17, 1
    %p140 = scmp.ne.s32.totalorder %s135, %s137
    %p141 = scmp.eq.s32.totalorder %s17, 0
    %p142 = por %p140, %p141
    %p143 = scmp.ne.s32.totalorder %s135, %s137
    %p144 = scmp.eq.s32.totalorder %s22, 1
    %p145 = por %p143, %p144
    %p146 = scmp.ne.s32.totalorder %s137, %s138
    %p147 = scmp.eq.s32.totalorder %s22, 0
    %p148 = por %p146, %p147
    %p149 = scmp.ne.s32.totalorder %s137, %s138
    %p150 = scmp.eq.s32.totalorder %s23, 1
    %p151 = por %p149, %p150
    %p153 = scmp.ne.s32.totalorder %s138, %s152
    %p154 = scmp.eq.s32.totalorder %s23, 0
    %p155 = por %p153, %p154
    %s157 = sadd.s32 %s156, 1
    %p160 = scmp.eq.s32.totalorder %s17, 1
    %p161 = scmp.ne.s32.totalorder %s156, %s158
    %p162 = scmp.eq.s32.totalorder %s17, 0
    %p163 = por %p161, %p162
    %p164 = scmp.ne.s32.totalorder %s156, %s158
    %p165 = scmp.eq.s32.totalorder %s22, 1
    %p166 = por %p164, %p165
    %p167 = scmp.ne.s32.totalorder %s158, %s159
    %p168 = scmp.eq.s32.totalorder %s22, 0
    %p169 = por %p167, %p168
    %p170 = scmp.ne.s32.totalorder %s158, %s159
    %p171 = scmp.eq.s32.totalorder %s23, 1
    %p172 = por %p170, %p171
    %p174 = scmp.ne.s32.totalorder %s159, %s173
    %p175 = scmp.eq.s32.totalorder %s23, 0
    %p176 = por %p174, %p175
    %s178 = sadd.s32 %s177, 1
    %p181 = scmp.eq.s32.totalorder %s17, 1
    %p182 = scmp.ne.s32.totalorder %s177, %s179
    %p183 = scmp.eq.s32.totalorder %s17, 0
    %p184 = por %p182, %p183
    %p185 = scmp.ne.s32.totalorder %s177, %s179
    %p186 = scmp.eq.s32.totalorder %s22, 1
    %p187 = por %p185, %p186
    %p188 = scmp.ne.s32.totalorder %s179, %s180
    %p189 = scmp.eq.s32.totalorder %s22, 0
    %p190 = por %p188, %p189
    %p191 = scmp.ne.s32.totalorder %s179, %s180
    %p192 = scmp.eq.s32.totalorder %s23, 1
    %p193 = por %p191, %p192
    %p195 = scmp.ne.s32.totalorder %s180, %s194
    %p196 = scmp.eq.s32.totalorder %s23, 0
    %p197 = por %p195, %p196
    %s199 = sadd.s32 %s198, 1
    %p202 = scmp.eq.s32.totalorder %s17, 1
    %p203 = scmp.ne.s32.totalorder %s198, %s200
    %p204 = scmp.eq.s32.totalorder %s17, 0
    %p205 = por %p203, %p204
    %p206 = scmp.ne.s32.totalorder %s198, %s200
    %p207 = scmp.eq.s32.totalorder %s22, 1
    %p208 = por %p206, %p207
    %p209 = scmp.ne.s32.totalorder %s200, %s201
    %p210 = scmp.eq.s32.totalorder %s22, 0
    %p211 = por %p209, %p210
    %p212 = scmp.ne.s32.totalorder %s200, %s201
    %p213 = scmp.eq.s32.totalorder %s23, 1
    %p214 = por %p212, %p213
    %p216 = scmp.ne.s32.totalorder %s201, %s215
    %p217 = scmp.eq.s32.totalorder %s23, 0
    %p218 = por %p216, %p217
    %s220 = sadd.s32 %s219, 1
    %p223 = scmp.eq.s32.totalorder %s17, 1
    %p224 = scmp.ne.s32.totalorder %s219, %s221
    %p225 = scmp.eq.s32.totalorder %s17, 0
    %p226 = por %p224, %p225
    %p227 = scmp.ne.s32.totalorder %s219, %s221
    %p228 = scmp.eq.s32.totalorder %s22, 1
    %p229 = por %p227, %p228
    %p230 = scmp.ne.s32.totalorder %s221, %s222
    %p231 = scmp.eq.s32.totalorder %s22, 0
    %p232 = por %p230, %p231
    %p233 = scmp.ne.s32.totalorder %s221, %s222
    %p234 = scmp.eq.s32.totalorder %s23, 1
    %p235 = por %p233, %p234
    %p237 = scmp.ne.s32.totalorder %s222, %s236
    %p238 = scmp.eq.s32.totalorder %s23, 0
    %p239 = por %p237, %p238
    %s241 = sadd.s32 %s240, 1
    %p244 = scmp.eq.s32.totalorder %s17, 1
    %p245 = scmp.ne.s32.totalorder %s240, %s242
    %p246 = scmp.eq.s32.totalorder %s17, 0
    %p247 = por %p245, %p246
    %p248 = scmp.ne.s32.totalorder %s240, %s242
    %p249 = scmp.eq.s32.totalorder %s22, 1
    %p250 = por %p248, %p249
    %p251 = scmp.ne.s32.totalorder %s242, %s243
    %p252 = scmp.eq.s32.totalorder %s22, 0
    %p253 = por %p251, %p252
    %p254 = scmp.ne.s32.totalorder %s242, %s243
    %p255 = scmp.eq.s32.totalorder %s23, 1
    %p256 = por %p254, %p255
    %p258 = scmp.ne.s32.totalorder %s243, %s257
    %p259 = scmp.eq.s32.totalorder %s23, 0
    %p260 = por %p258, %p259
    %s261 = ssub.s32 %s17, %s24
    %p262 = scmp.eq.s32.totalorder %s261, 0
    %s264 = sadd.s32 %s263, 1
    %s265 = scalar_select %p262, %s263, %s264
    %p268 = pneg %p262
    %p269 = scmp.eq.s32.totalorder %s17, 1
    %p270 = por %p268, %p269
    %p271 = scmp.ne.s32.totalorder %s263, %s266
    %p272 = scmp.eq.s32.totalorder %s17, 0
    %p273 = por %p271, %p272
    %p274 = scmp.ne.s32.totalorder %s263, %s266
    %p275 = scmp.eq.s32.totalorder %s22, 1
    %p276 = por %p274, %p275
    %p277 = scmp.ne.s32.totalorder %s266, %s267
    %p278 = scmp.eq.s32.totalorder %s22, 0
    %p279 = por %p277, %p278
    %p280 = scmp.ne.s32.totalorder %s266, %s267
    %p281 = scmp.eq.s32.totalorder %s23, 1
    %p282 = por %p280, %p281
    %p284 = scmp.ne.s32.totalorder %s267, %s283
    %p285 = scmp.eq.s32.totalorder %s23, 0
    %p286 = por %p284, %p285
    %p287 = scmp.le.s32.totalorder 1, %s17
    %p288 = scmp.lt.s32.totalorder %s17, 3
    %p289 = pnand %p287, %p288
    %p290 = pneg %p289
    // Predicated region
    $region9: #{_lambda_.1} parent=5 // pred_check
      _
    $region10: #{_lambda_.1} parent=5 // pred_check_branch
      %292 = sbr.rel (%p289) target = $region12
    $region11: #{_lambda_.1} parent=5 // pred_region
      %s293 = ssub.s32 %s17, 1
      // Predicated region
      $region13: #{_lambda_.1} parent=11 // pred_check
        %p294 = pneg %p64
      $region14: #{_lambda_.1} parent=11 // pred_check_branch
        %296 = sbr.rel (%p294) target = $region16
      $region15: #{_lambda_.1} parent=11 // pred_region
        _
      $region16: #{_lambda_.1} parent=11 // pred_fallthru
        _
      // Predicated region
      $region17: #{_lambda_.1} parent=11 // pred_check
        %p297 = pneg %p85
      $region18: #{_lambda_.1} parent=11 // pred_check_branch
        %299 = sbr.rel (%p297) target = $region20
      $region19: #{_lambda_.1} parent=11 // pred_region
        _
      $region20: #{_lambda_.1} parent=11 // pred_fallthru
        _
      // Predicated region
      $region21: #{_lambda_.1} parent=11 // pred_check
        %p300 = pneg %p106
      $region22: #{_lambda_.1} parent=11 // pred_check_branch
        %302 = sbr.rel (%p300) target = $region24
      $region23: #{_lambda_.1} parent=11 // pred_region
        _
      $region24: #{_lambda_.1} parent=11 // pred_fallthru
        _
      // Predicated region
      $region25: #{_lambda_.1} parent=11 // pred_check
        %p303 = pneg %p127
      $region26: #{_lambda_.1} parent=11 // pred_check_branch
        %305 = sbr.rel (%p303) target = $region28
      $region27: #{_lambda_.1} parent=11 // pred_region
        _
      $region28: #{_lambda_.1} parent=11 // pred_fallthru
        _
      // Predicated region
      $region29: #{_lambda_.1} parent=11 // pred_check
        %p306 = pneg %p148
      $region30: #{_lambda_.1} parent=11 // pred_check_branch
        %308 = sbr.rel (%p306) target = $region32
      $region31: #{_lambda_.1} parent=11 // pred_region
        _
      $region32: #{_lambda_.1} parent=11 // pred_fallthru
        _
      // Predicated region
      $region33: #{_lambda_.1} parent=11 // pred_check
        %p309 = pneg %p169
      $region34: #{_lambda_.1} parent=11 // pred_check_branch
        %311 = sbr.rel (%p309) target = $region36
      $region35: #{_lambda_.1} parent=11 // pred_region
        _
      $region36: #{_lambda_.1} parent=11 // pred_fallthru
        _
      // Predicated region
      $region37: #{_lambda_.1} parent=11 // pred_check
        %p312 = pneg %p190
      $region38: #{_lambda_.1} parent=11 // pred_check_branch
        %314 = sbr.rel (%p312) target = $region40
      $region39: #{_lambda_.1} parent=11 // pred_region
        _
      $region40: #{_lambda_.1} parent=11 // pred_fallthru
        _
      // Predicated region
      $region41: #{_lambda_.1} parent=11 // pred_check
        %p315 = pneg %p211
      $region42: #{_lambda_.1} parent=11 // pred_check_branch
        %317 = sbr.rel (%p315) target = $region44
      $region43: #{_lambda_.1} parent=11 // pred_region
        _
      $region44: #{_lambda_.1} parent=11 // pred_fallthru
        _
      // Predicated region
      $region45: #{_lambda_.1} parent=11 // pred_check
        %p318 = pneg %p232
      $region46: #{_lambda_.1} parent=11 // pred_check_branch
        %320 = sbr.rel (%p318) target = $region48
      $region47: #{_lambda_.1} parent=11 // pred_region
        _
      $region48: #{_lambda_.1} parent=11 // pred_fallthru
        _
      // Predicated region
      $region49: #{_lambda_.1} parent=11 // pred_check
        %p321 = pneg %p253
      $region50: #{_lambda_.1} parent=11 // pred_check_branch
        %323 = sbr.rel (%p321) target = $region52
      $region51: #{_lambda_.1} parent=11 // pred_region
        _
      $region52: #{_lambda_.1} parent=11 // pred_fallthru
        _
    $region12: #{_lambda_.1} parent=5 // pred_fallthru
      _
    %p324 = scmp.lt.s32.totalorder %s17, 2
    // Predicated region
    $region53: #{_lambda_.1} parent=5 // pred_check
      %p325 = pneg %p324
    $region54: #{_lambda_.1} parent=5 // pred_check_branch
      %327 = sbr.rel (%p325) target = $region56
    $region55: #{_lambda_.1} parent=5 // pred_region
      // Predicated region
      $region57: #{_lambda_.1} parent=55 // pred_check
        %p328 = pneg %p37
      $region58: #{_lambda_.1} parent=55 // pred_check_branch
        %330 = sbr.rel (%p328) target = $region60
      $region59: #{_lambda_.1} parent=55 // pred_region
        %s331 = smul.u32 8, %s17
        %p332 = scmp.lt.s32.totalorder %s331, 15
        %s333 = scalar_select %p332, %s331, 15
        %s334 = smul.addr %s333, 16
        %s335 = smul.addr %s334, 4
        %s336 = scalar_lea.vmem %s0, %s335
        %s337 = smul.u32 8, %s17
      $region60: #{_lambda_.1} parent=55 // pred_fallthru
        _
    $region56: #{_lambda_.1} parent=5 // pred_fallthru
      _
    %p338 = scmp.le.s32.totalorder 1, %s17
    %p339 = scmp.lt.s32.totalorder %s17, 3
    %p340 = pnand %p338, %p339
    %p341 = pneg %p340
    // Predicated region
    $region61: #{_lambda_.1} parent=5 // pred_check
      _
    $region62: #{_lambda_.1} parent=5 // pred_check_branch
      %343 = sbr.rel (%p340) target = $region64
    $region63: #{_lambda_.1} parent=5 // pred_region
      %s344 = ssub.s32 %s17, 1
      %s345 = smul.u32 8, %s22
      %p346 = scmp.lt.s32.totalorder %s345, 15
      %s347 = scalar_select %p346, %s345, 15
      %s348 = smul.addr %s347, 16
      %s349 = smul.addr %s348, 4
      %s350 = scalar_lea.vmem %s0, %s349
      %p351 = pneg %p43
      %p352 = pneg %p40
      %p353 = pneg %p64
      %p354 = pneg %p61
      %p355 = pneg %p85
      %p356 = pneg %p82
      %p357 = pneg %p106
      %p358 = pneg %p103
      %p359 = pneg %p127
      %p360 = pneg %p124
      %p361 = pneg %p148
      %p362 = pneg %p145
      %p363 = pneg %p169
      %p364 = pneg %p166
      %p365 = pneg %p190
      %p366 = pneg %p187
      %p367 = pneg %p211
      %p368 = pneg %p208
      %p369 = pneg %p232
      %p370 = pneg %p229
      %p371 = pneg %p253
      %p372 = pneg %p250
      %p373 = pneg %p279
      %p374 = pneg %p276
      %p375 = scmp.lt.s32.totalorder %s22, 1
      %s376 = scalar_select %p375, %s22, 1
      %s377 = smul.addr %s376, 8
      %s378 = scalar_lea.vmem %s11, %s377
      %s379 = smul.u32 8, %s22
      %p380 = scmp.lt.s32.totalorder %s379, 15
      %s381 = scalar_select %p380, %s379, 15
      %s382 = smul.addr %s381, 16
      %s383 = smul.addr %s382, 4
      %s384 = scalar_lea.vmem %s0, %s383
      %s385 = smul.u32 8, %s22
      %p386 = scmp.lt.s32.totalorder %s22, 1
      %s387 = scalar_select %p386, %s22, 1
      %s388 = smul.addr %s387, 8
      %s389 = scalar_lea.vmem %s11, %s388
      loop: start=0, step=1, limit=8
      $region65: #{_lambda_.1} parent=63 // loop_pre_header
        _
      $region66: #{_lambda_.1} parent=63 // loop_header
        %s392 = sphi 0, %s396
        %p393 = scmp.ge.s32.totalorder %s392, 8
      $region67: #{_lambda_.1} parent=63 // loop_header_branch
        %395 = sbr.rel (%p393) target = $region71
      $region68: #{_lambda_.1} parent=63 // loop_body
        %s397 = smul.u32 %s392, 16
        %s398 = smul.addr %s397, 4
        %s399 = scalar_lea.vmem %s384, %s398
        %v400 = vld [vmem:[%s399] sm:$0xff]
        %v401 = vld [vmem:[%s399 + $0x8] sm:$0xff]
        %v402 = vld [vmem:[%s399 + $0x10] sm:$0xff]
        %v403 = vld [vmem:[%s399 + $0x18] sm:$0xff]
        %v404 = vld [vmem:[%s399 + $0x20] sm:$0xff]
        %v405 = vld [vmem:[%s399 + $0x28] sm:$0xff]
        %v406 = vld [vmem:[%s399 + $0x30] sm:$0xff]
        %v407 = vld [vmem:[%s399 + $0x38] sm:$0xff]
        %v408 = vld [vmem:[%s1] sm:$0xf]
        %v409 = vld [vmem:[%s1 + $0x4] sm:$0xf]
        %v410 = vld [vmem:[%s1 + $0x8] sm:$0xf]
        %v411 = vld [vmem:[%s1 + $0xc] sm:$0xf]
        %v412 = vld [vmem:[%s1 + $0x10] sm:$0xf]
        %v413 = vld [vmem:[%s1 + $0x14] sm:$0xf]
        %v414 = vld [vmem:[%s1 + $0x18] sm:$0xf]
        %v415 = vld [vmem:[%s1 + $0x1c] sm:$0xf]
        %v416 = vld [vmem:[%s1 + $0x20] sm:$0xf]
        %v417 = vld [vmem:[%s1 + $0x24] sm:$0xf]
        %v418 = vld [vmem:[%s1 + $0x28] sm:$0xf]
        %v419 = vld [vmem:[%s1 + $0x2c] sm:$0xf]
        %v420 = vld [vmem:[%s1 + $0x30] sm:$0xf]
        %v421 = vld [vmem:[%s1 + $0x34] sm:$0xf]
        %v422 = vld [vmem:[%s1 + $0x38] sm:$0xf]
        %v423 = vld [vmem:[%s1 + $0x3c] sm:$0xf]
        %v424 = vld [vmem:[%s1 + $0x40] sm:$0xf]
        %v425 = vld [vmem:[%s1 + $0x44] sm:$0xf]
        %v426 = vld [vmem:[%s1 + $0x48] sm:$0xf]
        %v427 = vld [vmem:[%s1 + $0x4c] sm:$0xf]
        %v428 = vld [vmem:[%s1 + $0x50] sm:$0xf]
        %v429 = vld [vmem:[%s1 + $0x54] sm:$0xf]
        %v430 = vld [vmem:[%s1 + $0x58] sm:$0xf]
        %v431 = vld [vmem:[%s1 + $0x5c] sm:$0xf]
        %v432 = vld [vmem:[%s1 + $0x60] sm:$0xf]
        %v433 = vld [vmem:[%s1 + $0x64] sm:$0xf]
        %v434 = vld [vmem:[%s1 + $0x68] sm:$0xf]
        %v435 = vld [vmem:[%s1 + $0x6c] sm:$0xf]
        %v436 = vld [vmem:[%s1 + $0x70] sm:$0xf]
        %v437 = vld [vmem:[%s1 + $0x74] sm:$0xf]
        %v438 = vld [vmem:[%s1 + $0x78] sm:$0xf]
        %v439 = vld [vmem:[%s1 + $0x7c] sm:$0xf]
        %v440 = vld [vmem:[%s2] sm:$0x1]
        %v442 = vlaneseq
        %v443 = vshrl.u32 %v442, 7
        %v444 = vsub.s32 0, %v443
        %v445 = vrot.slane %v440, %v444
        %v455 = vunpack.c.l.b16 %v400
        %v456 = vunpack.c.h.b16 %v400
        %v457 = vunpack.c.l.b16 %v401
        %v458 = vunpack.c.h.b16 %v401
        %v459 = vunpack.c.l.b16 %v402
        %v460 = vunpack.c.h.b16 %v402
        %v461 = vunpack.c.l.b16 %v403
        %v462 = vunpack.c.h.b16 %v403
        %v463 = vunpack.c.l.b16 %v404
        %v464 = vunpack.c.h.b16 %v404
        %v465 = vunpack.c.l.b16 %v405
        %v466 = vunpack.c.h.b16 %v405
        %v467 = vunpack.c.l.b16 %v406
        %v468 = vunpack.c.h.b16 %v406
        %v469 = vunpack.c.l.b16 %v407
        %v470 = vunpack.c.h.b16 %v407
        %v471 = vpack.c.b16 %v457, %v455
        %v472 = vpack.c.b16 %v458, %v456
        %v473 = vpack.c.b16 %v461, %v459
        %v474 = vpack.c.b16 %v462, %v460
        %v475 = vpack.c.b16 %v465, %v463
        %v476 = vpack.c.b16 %v466, %v464
        %v477 = vpack.c.b16 %v469, %v467
        %v478 = vpack.c.b16 %v470, %v468
        %v519 = vunpack.c.l.b16 %v408
        %v520 = vunpack.c.l.b16 %v409
        %v521 = vunpack.c.l.b16 %v410
        %v522 = vunpack.c.l.b16 %v411
        %v523 = vunpack.c.l.b16 %v412
        %v524 = vunpack.c.l.b16 %v413
        %v525 = vunpack.c.l.b16 %v414
        %v526 = vunpack.c.l.b16 %v415
        %v527 = vunpack.c.l.b16 %v416
        %v528 = vunpack.c.l.b16 %v417
        %v529 = vunpack.c.l.b16 %v418
        %v530 = vunpack.c.l.b16 %v419
        %v531 = vunpack.c.l.b16 %v420
        %v532 = vunpack.c.l.b16 %v421
        %v533 = vunpack.c.l.b16 %v422
        %v534 = vunpack.c.l.b16 %v423
        %v535 = vunpack.c.l.b16 %v424
        %v536 = vunpack.c.l.b16 %v425
        %v537 = vunpack.c.l.b16 %v426
        %v538 = vunpack.c.l.b16 %v427
        %v539 = vunpack.c.l.b16 %v428
        %v540 = vunpack.c.l.b16 %v429
        %v541 = vunpack.c.l.b16 %v430
        %v542 = vunpack.c.l.b16 %v431
        %v543 = vunpack.c.l.b16 %v432
        %v544 = vunpack.c.l.b16 %v433
        %v545 = vunpack.c.l.b16 %v434
        %v546 = vunpack.c.l.b16 %v435
        %v547 = vunpack.c.l.b16 %v436
        %v548 = vunpack.c.l.b16 %v437
        %v549 = vunpack.c.l.b16 %v438
        %v550 = vunpack.c.l.b16 %v439
        %v551 = vpack.c.b16 %v520, %v519
        %v552 = vpack.c.b16 %v522, %v521
        %v553 = vpack.c.b16 %v524, %v523
        %v554 = vpack.c.b16 %v526, %v525
        %v555 = vpack.c.b16 %v528, %v527
        %v556 = vpack.c.b16 %v530, %v529
        %v557 = vpack.c.b16 %v532, %v531
        %v558 = vpack.c.b16 %v534, %v533
        %v559 = vpack.c.b16 %v536, %v535
        %v560 = vpack.c.b16 %v538, %v537
        %v561 = vpack.c.b16 %v540, %v539
        %v562 = vpack.c.b16 %v542, %v541
        %v563 = vpack.c.b16 %v544, %v543
        %v564 = vpack.c.b16 %v546, %v545
        %v565 = vpack.c.b16 %v548, %v547
        %v566 = vpack.c.b16 %v550, %v549
        %583 = vmatprep.subr.bf16.mxu0 0
        %584 = vmatpush1.bf16.msra.mxu0 %v558
        %585 = vmatprep.subr.bf16.mxu0 0
        %586 = vmatpush1.bf16.msra.mxu0 %v557
        %587 = vmatprep.subr.bf16.mxu0 0
        %588 = vmatpush1.bf16.msra.mxu0 %v556
        %589 = vmatprep.subr.bf16.mxu0 0
        %590 = vmatpush1.bf16.msra.mxu0 %v555
        %591 = vmatprep.subr.bf16.mxu0 0
        %592 = vmatpush1.bf16.msra.mxu0 %v554
        %593 = vmatprep.subr.bf16.mxu0 0
        %594 = vmatpush1.bf16.msra.mxu0 %v553
        %595 = vmatprep.subr.bf16.mxu0 0
        %596 = vmatpush1.bf16.msra.mxu0 %v552
        %597 = vmatprep.subr.bf16.mxu0 0
        %598 = vmatpush1.bf16.msra.mxu0 %v551
        %599 = vmatprep.subr.bf16.mxu0 0
        %600 = vmatpush2.bf16.msra.mxu0 %v566
        %601 = vmatprep.subr.bf16.mxu0 0
        %602 = vmatpush2.bf16.msra.mxu0 %v565
        %603 = vmatprep.subr.bf16.mxu0 0
        %604 = vmatpush2.bf16.msra.mxu0 %v564
        %605 = vmatprep.subr.bf16.mxu0 0
        %606 = vmatpush2.bf16.msra.mxu0 %v563
        %607 = vmatprep.subr.bf16.mxu0 0
        %608 = vmatpush2.bf16.msra.mxu0 %v562
        %609 = vmatprep.subr.bf16.mxu0 0
        %610 = vmatpush2.bf16.msra.mxu0 %v561
        %611 = vmatprep.subr.bf16.mxu0 0
        %612 = vmatpush2.bf16.msra.mxu0 %v560
        %613 = vmatprep.subr.bf16.mxu0 0
        %614 = vmatpush2.bf16.msra.mxu0 %v559
        %615 = vmatprep.mubr.bf16.mxu0 %v472
        %616 = vmatmul.mubr.bf16.gmra.mxu0 %v471
        %v617 = vpop.f32.mrf.mxu0
        %v618 = vadd.f32 %v445, %v617
        %v619 = vpop.f32.mrf.mxu0
        %v620 = vpop.f32.mrf.mxu0
        %v621 = vadd.f32 %v445, %v620
        %v622 = vpop.f32.mrf.mxu0
        %623 = vmatprep.mubr.bf16.mxu0 %v474
        %624 = vmatmul.mubr.bf16.gmra.mxu0 %v473
        %v625 = vpop.f32.mrf.mxu0
        %v626 = vadd.f32 %v445, %v625
        %v627 = vpop.f32.mrf.mxu0
        %v628 = vpop.f32.mrf.mxu0
        %v629 = vadd.f32 %v445, %v628
        %v630 = vpop.f32.mrf.mxu0
        %631 = vmatprep.mubr.bf16.mxu0 %v476
        %632 = vmatmul.mubr.bf16.gmra.mxu0 %v475
        %v633 = vpop.f32.mrf.mxu0
        %v634 = vadd.f32 %v445, %v633
        %v635 = vpop.f32.mrf.mxu0
        %v636 = vpop.f32.mrf.mxu0
        %v637 = vadd.f32 %v445, %v636
        %v638 = vpop.f32.mrf.mxu0
        %639 = vmatprep.mubr.bf16.mxu0 %v478
        %640 = vmatmul.mubr.bf16.gmra.mxu0 %v477
        %v641 = vpop.f32.mrf.mxu0
        %v642 = vadd.f32 %v445, %v641
        %v643 = vpop.f32.mrf.mxu0
        %v644 = vpop.f32.mrf.mxu0
        %v645 = vadd.f32 %v445, %v644
        %v646 = vpop.f32.mrf.mxu0
        %647 = vdwg.mxu0
        %v648 = vmax.f32 %v618, 0.0
        %v649 = vmax.f32 %v621, 0.0
        %v650 = vmax.f32 %v626, 0.0
        %v651 = vmax.f32 %v629, 0.0
        %v652 = vmax.f32 %v634, 0.0
        %v653 = vmax.f32 %v637, 0.0
        %v654 = vmax.f32 %v642, 0.0
        %v655 = vmax.f32 %v645, 0.0
        %656 = vst [vmem:[#allocation2] sm:$0xff] %v648
        %657 = vst [vmem:[#allocation2 + $0x8] sm:$0xff] %v649
        %658 = vst [vmem:[#allocation2 + $0x10] sm:$0xff] %v650
        %659 = vst [vmem:[#allocation2 + $0x18] sm:$0xff] %v651
        %660 = vst [vmem:[#allocation2 + $0x20] sm:$0xff] %v652
        %661 = vst [vmem:[#allocation2 + $0x28] sm:$0xff] %v653
        %662 = vst [vmem:[#allocation2 + $0x30] sm:$0xff] %v654
        %663 = vst [vmem:[#allocation2 + $0x38] sm:$0xff] %v655
        %v664 = vld [vmem:[#allocation2] ss:$2 sm:$0x7]
        %s665 = scalar_lea.vmem [#allocation2], 16
        %v666 = vld [vmem:[%s665] ss:$2 sm:$0x7]
        %s667 = scalar_lea.vmem [#allocation2], 32
        %v668 = vld [vmem:[%s667] ss:$2 sm:$0x7]
        %v673 = vunpack.c.l.s4 1966171168
        %v674 = vunpack.c.0.s8 %v673
        %v675 = vlaneseq
        %v676 = vshrl.u32 %v675, 7
        %v677 = vsub.s32 %v674, %v676
        %v678 = vrot.slane %v664, %v677
        %v679 = vcombine.high %v678, %v678
        %v681 = vunpack.c.l.s4 1966171168
        %v682 = vunpack.c.0.s8 %v681
        %v683 = vlaneseq
        %v684 = vshrl.u32 %v683, 7
        %v685 = vsub.s32 %v682, %v684
        %v686 = vrot.slane %v678, %v685
        %v688 = vunpack.c.l.s4 1966171168
        %v689 = vunpack.c.0.s8 %v688
        %v690 = vlaneseq
        %v691 = vshrl.u32 %v690, 7
        %v692 = vsub.s32 %v689, %v691
        %v693 = vrot.slane %v679, %v692
        %v694 = vcombine.high %v686, %v686
        %v696 = vunpack.c.l.s4 1966171168
        %v697 = vunpack.c.0.s8 %v696
        %v698 = vlaneseq
        %v699 = vshrl.u32 %v698, 7
        %v700 = vsub.s32 %v697, %v699
        %v701 = vrot.slane %v666, %v700
        %v702 = vcombine.high %v701, %v701
        %v704 = vunpack.c.l.s4 1966171168
        %v705 = vunpack.c.0.s8 %v704
        %v706 = vlaneseq
        %v707 = vshrl.u32 %v706, 7
        %v708 = vsub.s32 %v705, %v707
        %v709 = vrot.slane %v701, %v708
        %v711 = vunpack.c.l.s4 1966171168
        %v712 = vunpack.c.0.s8 %v711
        %v713 = vlaneseq
        %v714 = vshrl.u32 %v713, 7
        %v715 = vsub.s32 %v712, %v714
        %v716 = vrot.slane %v702, %v715
        %v717 = vcombine.high %v709, %v709
        %v719 = vunpack.c.l.s4 1966171168
        %v720 = vunpack.c.0.s8 %v719
        %v721 = vlaneseq
        %v722 = vshrl.u32 %v721, 7
        %v723 = vsub.s32 %v720, %v722
        %v724 = vrot.slane %v668, %v723
        %v725 = vcombine.high %v724, %v724
        %v727 = vunpack.c.l.s4 1966171168
        %v728 = vunpack.c.0.s8 %v727
        %v729 = vlaneseq
        %v730 = vshrl.u32 %v729, 7
        %v731 = vsub.s32 %v728, %v730
        %v732 = vrot.slane %v724, %v731
        %v734 = vunpack.c.l.s4 1966171168
        %v735 = vunpack.c.0.s8 %v734
        %v736 = vlaneseq
        %v737 = vshrl.u32 %v736, 7
        %v738 = vsub.s32 %v735, %v737
        %v739 = vrot.slane %v725, %v738
        %v740 = vcombine.high %v732, %v732
        %v741 = vcombine.low %v686, %v693
        %v742 = vcombine.low %v694, %v709
        %v743 = vcombine.low %v716, %v717
        %v744 = vcombine.low %v732, %v739
        %v746 = vunpack.c.l.s4 1966171168
        %v747 = vunpack.c.0.s8 %v746
        %v748 = vlaneseq
        %v749 = vshrl.u32 %v748, 7
        %v750 = vsub.s32 %v747, %v749
        %v751 = vrot.slane %v741, %v750
        %v753 = vunpack.c.l.s4 1966171168
        %v754 = vunpack.c.0.s8 %v753
        %v755 = vlaneseq
        %v756 = vshrl.u32 %v755, 7
        %v757 = vsub.s32 %v754, %v756
        %v758 = vrot.slane %v742, %v757
        %v760 = vunpack.c.l.s4 1966171168
        %v761 = vunpack.c.0.s8 %v760
        %v762 = vlaneseq
        %v763 = vshrl.u32 %v762, 7
        %v764 = vsub.s32 %v761, %v763
        %v765 = vrot.slane %v743, %v764
        %v767 = vunpack.c.l.s4 1966171168
        %v768 = vunpack.c.0.s8 %v767
        %v769 = vlaneseq
        %v770 = vshrl.u32 %v769, 7
        %v771 = vsub.s32 %v768, %v770
        %v772 = vrot.slane %v744, %v771
        %v773 = vcombine.low %v751, %v758
        %v774 = vcombine.low %v765, %v772
        %v776 = vunpack.c.l.s4 1966171168
        %v777 = vunpack.c.0.s8 %v776
        %v778 = vlaneseq
        %v779 = vshrl.u32 %v778, 7
        %v780 = vsub.s32 %v777, %v779
        %v781 = vrot.slane %v773, %v780
        %v783 = vunpack.c.l.s4 1966171168
        %v784 = vunpack.c.0.s8 %v783
        %v785 = vlaneseq
        %v786 = vshrl.u32 %v785, 7
        %v787 = vsub.s32 %v784, %v786
        %v788 = vrot.slane %v774, %v787
        %v789 = vcombine.low %v781, %v788
        %v791 = vunpack.c.l.s4 1966171168
        %v792 = vunpack.c.0.s8 %v791
        %v793 = vlaneseq
        %v794 = vshrl.u32 %v793, 7
        %v795 = vsub.s32 %v792, %v794
        %v796 = vrot.slane %v740, %v795
        %v798 = vunpack.c.l.s4 1966171168
        %v799 = vunpack.c.0.s8 %v798
        %v800 = vlaneseq
        %v801 = vshrl.u32 %v800, 7
        %v802 = vsub.s32 %v799, %v801
        %v803 = vrot.slane %v796, %v802
        %v806 = vpack.c.bf16 %v803, %v789
        %v807 = vld [vmem:[%s3] sm:$0xf]
        %v808 = vld [vmem:[%s3 + $0x4] sm:$0xf]
        %v809 = vld [vmem:[%s3 + $0x8] sm:$0xf]
        %v810 = vld [vmem:[%s3 + $0xc] sm:$0xf]
        %v811 = vld [vmem:[%s3 + $0x10] sm:$0xf]
        %v812 = vld [vmem:[%s3 + $0x14] sm:$0xf]
        %v813 = vld [vmem:[%s3 + $0x18] sm:$0xf]
        %v814 = vld [vmem:[%s3 + $0x1c] sm:$0xf]
        %v815 = vld [vmem:[%s3 + $0x20] sm:$0xf]
        %v816 = vld [vmem:[%s3 + $0x24] sm:$0xf]
        %v817 = vld [vmem:[%s3 + $0x28] sm:$0xf]
        %v818 = vld [vmem:[%s3 + $0x2c] sm:$0xf]
        %v819 = vld [vmem:[%s3 + $0x30] sm:$0xf]
        %v820 = vld [vmem:[%s3 + $0x34] sm:$0xf]
        %v821 = vld [vmem:[%s3 + $0x38] sm:$0xf]
        %v822 = vld [vmem:[%s3 + $0x3c] sm:$0xf]
        %s823 = scalar_lea.vmem [#allocation2], 1
        %v824 = vld [vmem:[%s823] ss:$2 sm:$0x7]
        %s825 = scalar_lea.vmem [#allocation2], 17
        %v826 = vld [vmem:[%s825] ss:$2 sm:$0x7]
        %s827 = scalar_lea.vmem [#allocation2], 33
        %v828 = vld [vmem:[%s827] ss:$2 sm:$0x7]
        %v833 = vunpack.c.l.s4 1966171168
        %v834 = vunpack.c.0.s8 %v833
        %v835 = vlaneseq
        %v836 = vshrl.u32 %v835, 7
        %v837 = vsub.s32 %v834, %v836
        %v838 = vrot.slane %v824, %v837
        %v839 = vcombine.high %v838, %v838
        %v841 = vunpack.c.l.s4 1966171168
        %v842 = vunpack.c.0.s8 %v841
        %v843 = vlaneseq
        %v844 = vshrl.u32 %v843, 7
        %v845 = vsub.s32 %v842, %v844
        %v846 = vrot.slane %v838, %v845
        %v848 = vunpack.c.l.s4 1966171168
        %v849 = vunpack.c.0.s8 %v848
        %v850 = vlaneseq
        %v851 = vshrl.u32 %v850, 7
        %v852 = vsub.s32 %v849, %v851
        %v853 = vrot.slane %v839, %v852
        %v854 = vcombine.high %v846, %v846
        %v856 = vunpack.c.l.s4 1966171168
        %v857 = vunpack.c.0.s8 %v856
        %v858 = vlaneseq
        %v859 = vshrl.u32 %v858, 7
        %v860 = vsub.s32 %v857, %v859
        %v861 = vrot.slane %v826, %v860
        %v862 = vcombine.high %v861, %v861
        %v864 = vunpack.c.l.s4 1966171168
        %v865 = vunpack.c.0.s8 %v864
        %v866 = vlaneseq
        %v867 = vshrl.u32 %v866, 7
        %v868 = vsub.s32 %v865, %v867
        %v869 = vrot.slane %v861, %v868
        %v871 = vunpack.c.l.s4 1966171168
        %v872 = vunpack.c.0.s8 %v871
        %v873 = vlaneseq
        %v874 = vshrl.u32 %v873, 7
        %v875 = vsub.s32 %v872, %v874
        %v876 = vrot.slane %v862, %v875
        %v877 = vcombine.high %v869, %v869
        %v879 = vunpack.c.l.s4 1966171168
        %v880 = vunpack.c.0.s8 %v879
        %v881 = vlaneseq
        %v882 = vshrl.u32 %v881, 7
        %v883 = vsub.s32 %v880, %v882
        %v884 = vrot.slane %v828, %v883
        %v885 = vcombine.high %v884, %v884
        %v887 = vunpack.c.l.s4 1966171168
        %v888 = vunpack.c.0.s8 %v887
        %v889 = vlaneseq
        %v890 = vshrl.u32 %v889, 7
        %v891 = vsub.s32 %v888, %v890
        %v892 = vrot.slane %v884, %v891
        %v894 = vunpack.c.l.s4 1966171168
        %v895 = vunpack.c.0.s8 %v894
        %v896 = vlaneseq
        %v897 = vshrl.u32 %v896, 7
        %v898 = vsub.s32 %v895, %v897
        %v899 = vrot.slane %v885, %v898
        %v900 = vcombine.high %v892, %v892
        %v901 = vcombine.low %v846, %v853
        %v902 = vcombine.low %v854, %v869
        %v903 = vcombine.low %v876, %v877
        %v904 = vcombine.low %v892, %v899
        %v906 = vunpack.c.l.s4 1966171168
        %v907 = vunpack.c.0.s8 %v906
        %v908 = vlaneseq
        %v909 = vshrl.u32 %v908, 7
        %v910 = vsub.s32 %v907, %v909
        %v911 = vrot.slane %v901, %v910
        %v913 = vunpack.c.l.s4 1966171168
        %v914 = vunpack.c.0.s8 %v913
        %v915 = vlaneseq
        %v916 = vshrl.u32 %v915, 7
        %v917 = vsub.s32 %v914, %v916
        %v918 = vrot.slane %v902, %v917
        %v920 = vunpack.c.l.s4 1966171168
        %v921 = vunpack.c.0.s8 %v920
        %v922 = vlaneseq
        %v923 = vshrl.u32 %v922, 7
        %v924 = vsub.s32 %v921, %v923
        %v925 = vrot.slane %v903, %v924
        %v927 = vunpack.c.l.s4 1966171168
        %v928 = vunpack.c.0.s8 %v927
        %v929 = vlaneseq
        %v930 = vshrl.u32 %v929, 7
        %v931 = vsub.s32 %v928, %v930
        %v932 = vrot.slane %v904, %v931
        %v933 = vcombine.low %v911, %v918
        %v934 = vcombine.low %v925, %v932
        %v936 = vunpack.c.l.s4 1966171168
        %v937 = vunpack.c.0.s8 %v936
        %v938 = vlaneseq
        %v939 = vshrl.u32 %v938, 7
        %v940 = vsub.s32 %v937, %v939
        %v941 = vrot.slane %v933, %v940
        %v943 = vunpack.c.l.s4 1966171168
        %v944 = vunpack.c.0.s8 %v943
        %v945 = vlaneseq
        %v946 = vshrl.u32 %v945, 7
        %v947 = vsub.s32 %v944, %v946
        %v948 = vrot.slane %v934, %v947
        %v949 = vcombine.low %v941, %v948
        %v951 = vunpack.c.l.s4 1966171168
        %v952 = vunpack.c.0.s8 %v951
        %v953 = vlaneseq
        %v954 = vshrl.u32 %v953, 7
        %v955 = vsub.s32 %v952, %v954
        %v956 = vrot.slane %v900, %v955
        %v958 = vunpack.c.l.s4 1966171168
        %v959 = vunpack.c.0.s8 %v958
        %v960 = vlaneseq
        %v961 = vshrl.u32 %v960, 7
        %v962 = vsub.s32 %v959, %v961
        %v963 = vrot.slane %v956, %v962
        %v966 = vpack.c.bf16 %v963, %v949
        %s967 = scalar_lea.vmem %s3, 64
        %v968 = vld [vmem:[%s967] sm:$0xf]
        %v969 = vld [vmem:[%s967 + $0x4] sm:$0xf]
        %v970 = vld [vmem:[%s967 + $0x8] sm:$0xf]
        %v971 = vld [vmem:[%s967 + $0xc] sm:$0xf]
        %v972 = vld [vmem:[%s967 + $0x10] sm:$0xf]
        %v973 = vld [vmem:[%s967 + $0x14] sm:$0xf]
        %v974 = vld [vmem:[%s967 + $0x18] sm:$0xf]
        %v975 = vld [vmem:[%s967 + $0x1c] sm:$0xf]
        %v976 = vld [vmem:[%s967 + $0x20] sm:$0xf]
        %v977 = vld [vmem:[%s967 + $0x24] sm:$0xf]
        %v978 = vld [vmem:[%s967 + $0x28] sm:$0xf]
        %v979 = vld [vmem:[%s967 + $0x2c] sm:$0xf]
        %v980 = vld [vmem:[%s967 + $0x30] sm:$0xf]
        %v981 = vld [vmem:[%s967 + $0x34] sm:$0xf]
        %v982 = vld [vmem:[%s967 + $0x38] sm:$0xf]
        %v983 = vld [vmem:[%s967 + $0x3c] sm:$0xf]
        %v1000 = vunpack.c.l.b16 %v968
        %v1001 = vunpack.c.l.b16 %v969
        %v1002 = vunpack.c.l.b16 %v970
        %v1003 = vunpack.c.l.b16 %v971
        %v1004 = vunpack.c.l.b16 %v972
        %v1005 = vunpack.c.l.b16 %v973
        %v1006 = vunpack.c.l.b16 %v974
        %v1007 = vunpack.c.l.b16 %v975
        %v1008 = vunpack.c.l.b16 %v976
        %v1009 = vunpack.c.l.b16 %v977
        %v1010 = vunpack.c.l.b16 %v978
        %v1011 = vunpack.c.l.b16 %v979
        %v1012 = vunpack.c.l.b16 %v980
        %v1013 = vunpack.c.l.b16 %v981
        %v1014 = vunpack.c.l.b16 %v982
        %v1015 = vunpack.c.l.b16 %v983
        %v1016 = vpack.c.b16 %v1001, %v1000
        %v1017 = vpack.c.b16 %v1003, %v1002
        %v1018 = vpack.c.b16 %v1005, %v1004
        %v1019 = vpack.c.b16 %v1007, %v1006
        %v1020 = vpack.c.b16 %v1009, %v1008
        %v1021 = vpack.c.b16 %v1011, %v1010
        %v1022 = vpack.c.b16 %v1013, %v1012
        %v1023 = vpack.c.b16 %v1015, %v1014
        %1032 = vmatprep.subr.bf16.mxu0 0
        %1033 = vmatpush1.bf16.msra.mxu0 %v1023
        %1034 = vmatprep.subr.bf16.mxu0 0
        %1035 = vmatpush1.bf16.msra.mxu0 %v1022
        %1036 = vmatprep.subr.bf16.mxu0 0
        %1037 = vmatpush1.bf16.msra.mxu0 %v1021
        %1038 = vmatprep.subr.bf16.mxu0 0
        %1039 = vmatpush1.bf16.msra.mxu0 %v1020
        %1040 = vmatprep.subr.bf16.mxu0 0
        %1041 = vmatpush1.bf16.msra.mxu0 %v1019
        %1042 = vmatprep.subr.bf16.mxu0 0
        %1043 = vmatpush1.bf16.msra.mxu0 %v1018
        %1044 = vmatprep.subr.bf16.mxu0 0
        %1045 = vmatpush1.bf16.msra.mxu0 %v1017
        %1046 = vmatprep.subr.bf16.mxu0 0
        %1047 = vmatpush1.bf16.msra.mxu0 %v1016
        %1048 = vmatprep.subr.bf16.mxu0 0
        %1049 = vmatpush2.bf16.msra.mxu0 0
        %1050 = vmatprep.subr.bf16.mxu0 0
        %1051 = vmatpush2.bf16.msra.mxu0 0
        %1052 = vmatprep.subr.bf16.mxu0 0
        %1053 = vmatpush2.bf16.msra.mxu0 0
        %1054 = vmatprep.subr.bf16.mxu0 0
        %1055 = vmatpush2.bf16.msra.mxu0 0
        %1056 = vmatprep.subr.bf16.mxu0 0
        %1057 = vmatpush2.bf16.msra.mxu0 0
        %1058 = vmatprep.subr.bf16.mxu0 0
        %1059 = vmatpush2.bf16.msra.mxu0 0
        %1060 = vmatprep.subr.bf16.mxu0 0
        %1061 = vmatpush2.bf16.msra.mxu0 0
        %1062 = vmatprep.subr.bf16.mxu0 0
        %1063 = vmatpush2.bf16.msra.mxu0 0
        %1064 = vmatprep.mubr.bf16.mxu0 0
        %1065 = vmatmul.mubr.bf16.gmra.mxu0 %v966
        %v1066 = vpop.f32.mrf.mxu0
        %v1067 = vadd.f32 0.0, %v1066
        %v1068 = vpop.f32.mrf.mxu0
        %v1069 = vpop.f32.mrf.mxu0
        %v1070 = vadd.f32 0.0, %v1069
        %v1071 = vpop.f32.mrf.mxu0
        %1072 = vdwg.mxu0
        %v1089 = vunpack.c.l.b16 %v807
        %v1090 = vunpack.c.l.b16 %v808
        %v1091 = vunpack.c.l.b16 %v809
        %v1092 = vunpack.c.l.b16 %v810
        %v1093 = vunpack.c.l.b16 %v811
        %v1094 = vunpack.c.l.b16 %v812
        %v1095 = vunpack.c.l.b16 %v813
        %v1096 = vunpack.c.l.b16 %v814
        %v1097 = vunpack.c.l.b16 %v815
        %v1098 = vunpack.c.l.b16 %v816
        %v1099 = vunpack.c.l.b16 %v817
        %v1100 = vunpack.c.l.b16 %v818
        %v1101 = vunpack.c.l.b16 %v819
        %v1102 = vunpack.c.l.b16 %v820
        %v1103 = vunpack.c.l.b16 %v821
        %v1104 = vunpack.c.l.b16 %v822
        %v1105 = vpack.c.b16 %v1090, %v1089
        %v1106 = vpack.c.b16 %v1092, %v1091
        %v1107 = vpack.c.b16 %v1094, %v1093
        %v1108 = vpack.c.b16 %v1096, %v1095
        %v1109 = vpack.c.b16 %v1098, %v1097
        %v1110 = vpack.c.b16 %v1100, %v1099
        %v1111 = vpack.c.b16 %v1102, %v1101
        %v1112 = vpack.c.b16 %v1104, %v1103
        %1121 = vmatprep.subr.bf16.mxu0 0
        %1122 = vmatpush1.bf16.msra.mxu0 %v1112
        %1123 = vmatprep.subr.bf16.mxu0 0
        %1124 = vmatpush1.bf16.msra.mxu0 %v1111
        %1125 = vmatprep.subr.bf16.mxu0 0
        %1126 = vmatpush1.bf16.msra.mxu0 %v1110
        %1127 = vmatprep.subr.bf16.mxu0 0
        %1128 = vmatpush1.bf16.msra.mxu0 %v1109
        %1129 = vmatprep.subr.bf16.mxu0 0
        %1130 = vmatpush1.bf16.msra.mxu0 %v1108
        %1131 = vmatprep.subr.bf16.mxu0 0
        %1132 = vmatpush1.bf16.msra.mxu0 %v1107
        %1133 = vmatprep.subr.bf16.mxu0 0
        %1134 = vmatpush1.bf16.msra.mxu0 %v1106
        %1135 = vmatprep.subr.bf16.mxu0 0
        %1136 = vmatpush1.bf16.msra.mxu0 %v1105
        %1137 = vmatprep.subr.bf16.mxu0 0
        %1138 = vmatpush2.bf16.msra.mxu0 0
        %1139 = vmatprep.subr.bf16.mxu0 0
        %1140 = vmatpush2.bf16.msra.mxu0 0
        %1141 = vmatprep.subr.bf16.mxu0 0
        %1142 = vmatpush2.bf16.msra.mxu0 0
        %1143 = vmatprep.subr.bf16.mxu0 0
        %1144 = vmatpush2.bf16.msra.mxu0 0
        %1145 = vmatprep.subr.bf16.mxu0 0
        %1146 = vmatpush2.bf16.msra.mxu0 0
        %1147 = vmatprep.subr.bf16.mxu0 0
        %1148 = vmatpush2.bf16.msra.mxu0 0
        %1149 = vmatprep.subr.bf16.mxu0 0
        %1150 = vmatpush2.bf16.msra.mxu0 0
        %1151 = vmatprep.subr.bf16.mxu0 0
        %1152 = vmatpush2.bf16.msra.mxu0 0
        %1153 = vmatprep.mubr.bf16.mxu0 0
        %1154 = vmatmul.mubr.bf16.gmra.mxu0 %v806
        %v1155 = vpop.f32.mrf.mxu0
        %v1156 = vadd.f32 %v1067, %v1155
        %v1157 = vpop.f32.mrf.mxu0
        %v1158 = vpop.f32.mrf.mxu0
        %v1159 = vadd.f32 %v1070, %v1158
        %v1160 = vpop.f32.mrf.mxu0
        %1161 = vdwg.mxu0
        %s1162 = scalar_lea.vmem [#allocation2], 2
        %v1163 = vld [vmem:[%s1162] ss:$2 sm:$0x7]
        %s1164 = scalar_lea.vmem [#allocation2], 18
        %v1165 = vld [vmem:[%s1164] ss:$2 sm:$0x7]
        %s1166 = scalar_lea.vmem [#allocation2], 34
        %v1167 = vld [vmem:[%s1166] ss:$2 sm:$0x7]
        %v1172 = vunpack.c.l.s4 1966171168
        %v1173 = vunpack.c.0.s8 %v1172
        %v1174 = vlaneseq
        %v1175 = vshrl.u32 %v1174, 7
        %v1176 = vsub.s32 %v1173, %v1175
        %v1177 = vrot.slane %v1163, %v1176
        %v1178 = vcombine.high %v1177, %v1177
        %v1180 = vunpack.c.l.s4 1966171168
        %v1181 = vunpack.c.0.s8 %v1180
        %v1182 = vlaneseq
        %v1183 = vshrl.u32 %v1182, 7
        %v1184 = vsub.s32 %v1181, %v1183
        %v1185 = vrot.slane %v1177, %v1184
        %v1187 = vunpack.c.l.s4 1966171168
        %v1188 = vunpack.c.0.s8 %v1187
        %v1189 = vlaneseq
        %v1190 = vshrl.u32 %v1189, 7
        %v1191 = vsub.s32 %v1188, %v1190
        %v1192 = vrot.slane %v1178, %v1191
        %v1193 = vcombine.high %v1185, %v1185
        %v1195 = vunpack.c.l.s4 1966171168
        %v1196 = vunpack.c.0.s8 %v1195
        %v1197 = vlaneseq
        %v1198 = vshrl.u32 %v1197, 7
        %v1199 = vsub.s32 %v1196, %v1198
        %v1200 = vrot.slane %v1165, %v1199
        %v1201 = vcombine.high %v1200, %v1200
        %v1203 = vunpack.c.l.s4 1966171168
        %v1204 = vunpack.c.0.s8 %v1203
        %v1205 = vlaneseq
        %v1206 = vshrl.u32 %v1205, 7
        %v1207 = vsub.s32 %v1204, %v1206
        %v1208 = vrot.slane %v1200, %v1207
        %v1210 = vunpack.c.l.s4 1966171168
        %v1211 = vunpack.c.0.s8 %v1210
        %v1212 = vlaneseq
        %v1213 = vshrl.u32 %v1212, 7
        %v1214 = vsub.s32 %v1211, %v1213
        %v1215 = vrot.slane %v1201, %v1214
        %v1216 = vcombine.high %v1208, %v1208
        %v1218 = vunpack.c.l.s4 1966171168
        %v1219 = vunpack.c.0.s8 %v1218
        %v1220 = vlaneseq
        %v1221 = vshrl.u32 %v1220, 7
        %v1222 = vsub.s32 %v1219, %v1221
        %v1223 = vrot.slane %v1167, %v1222
        %v1224 = vcombine.high %v1223, %v1223
        %v1226 = vunpack.c.l.s4 1966171168
        %v1227 = vunpack.c.0.s8 %v1226
        %v1228 = vlaneseq
        %v1229 = vshrl.u32 %v1228, 7
        %v1230 = vsub.s32 %v1227, %v1229
        %v1231 = vrot.slane %v1223, %v1230
        %v1233 = vunpack.c.l.s4 1966171168
        %v1234 = vunpack.c.0.s8 %v1233
        %v1235 = vlaneseq
        %v1236 = vshrl.u32 %v1235, 7
        %v1237 = vsub.s32 %v1234, %v1236
        %v1238 = vrot.slane %v1224, %v1237
        %v1239 = vcombine.high %v1231, %v1231
        %v1240 = vcombine.low %v1185, %v1192
        %v1241 = vcombine.low %v1193, %v1208
        %v1242 = vcombine.low %v1215, %v1216
        %v1243 = vcombine.low %v1231, %v1238
        %v1245 = vunpack.c.l.s4 1966171168
        %v1246 = vunpack.c.0.s8 %v1245
        %v1247 = vlaneseq
        %v1248 = vshrl.u32 %v1247, 7
        %v1249 = vsub.s32 %v1246, %v1248
        %v1250 = vrot.slane %v1240, %v1249
        %v1252 = vunpack.c.l.s4 1966171168
        %v1253 = vunpack.c.0.s8 %v1252
        %v1254 = vlaneseq
        %v1255 = vshrl.u32 %v1254, 7
        %v1256 = vsub.s32 %v1253, %v1255
        %v1257 = vrot.slane %v1241, %v1256
        %v1259 = vunpack.c.l.s4 1966171168
        %v1260 = vunpack.c.0.s8 %v1259
        %v1261 = vlaneseq
        %v1262 = vshrl.u32 %v1261, 7
        %v1263 = vsub.s32 %v1260, %v1262
        %v1264 = vrot.slane %v1242, %v1263
        %v1266 = vunpack.c.l.s4 1966171168
        %v1267 = vunpack.c.0.s8 %v1266
        %v1268 = vlaneseq
        %v1269 = vshrl.u32 %v1268, 7
        %v1270 = vsub.s32 %v1267, %v1269
        %v1271 = vrot.slane %v1243, %v1270
        %v1272 = vcombine.low %v1250, %v1257
        %v1273 = vcombine.low %v1264, %v1271
        %v1275 = vunpack.c.l.s4 1966171168
        %v1276 = vunpack.c.0.s8 %v1275
        %v1277 = vlaneseq
        %v1278 = vshrl.u32 %v1277, 7
        %v1279 = vsub.s32 %v1276, %v1278
        %v1280 = vrot.slane %v1272, %v1279
        %v1282 = vunpack.c.l.s4 1966171168
        %v1283 = vunpack.c.0.s8 %v1282
        %v1284 = vlaneseq
        %v1285 = vshrl.u32 %v1284, 7
        %v1286 = vsub.s32 %v1283, %v1285
        %v1287 = vrot.slane %v1273, %v1286
        %v1288 = vcombine.low %v1280, %v1287
        %v1290 = vunpack.c.l.s4 1966171168
        %v1291 = vunpack.c.0.s8 %v1290
        %v1292 = vlaneseq
        %v1293 = vshrl.u32 %v1292, 7
        %v1294 = vsub.s32 %v1291, %v1293
        %v1295 = vrot.slane %v1239, %v1294
        %v1297 = vunpack.c.l.s4 1966171168
        %v1298 = vunpack.c.0.s8 %v1297
        %v1299 = vlaneseq
        %v1300 = vshrl.u32 %v1299, 7
        %v1301 = vsub.s32 %v1298, %v1300
        %v1302 = vrot.slane %v1295, %v1301
        %v1305 = vpack.c.bf16 %v1302, %v1288
        %s1306 = scalar_lea.vmem %s3, 128
        %v1307 = vld [vmem:[%s1306] sm:$0xf]
        %v1308 = vld [vmem:[%s1306 + $0x4] sm:$0xf]
        %v1309 = vld [vmem:[%s1306 + $0x8] sm:$0xf]
        %v1310 = vld [vmem:[%s1306 + $0xc] sm:$0xf]
        %v1311 = vld [vmem:[%s1306 + $0x10] sm:$0xf]
        %v1312 = vld [vmem:[%s1306 + $0x14] sm:$0xf]
        %v1313 = vld [vmem:[%s1306 + $0x18] sm:$0xf]
        %v1314 = vld [vmem:[%s1306 + $0x1c] sm:$0xf]
        %v1315 = vld [vmem:[%s1306 + $0x20] sm:$0xf]
        %v1316 = vld [vmem:[%s1306 + $0x24] sm:$0xf]
        %v1317 = vld [vmem:[%s1306 + $0x28] sm:$0xf]
        %v1318 = vld [vmem:[%s1306 + $0x2c] sm:$0xf]
        %v1319 = vld [vmem:[%s1306 + $0x30] sm:$0xf]
        %v1320 = vld [vmem:[%s1306 + $0x34] sm:$0xf]
        %v1321 = vld [vmem:[%s1306 + $0x38] sm:$0xf]
        %v1322 = vld [vmem:[%s1306 + $0x3c] sm:$0xf]
        %v1339 = vunpack.c.l.b16 %v1307
        %v1340 = vunpack.c.l.b16 %v1308
        %v1341 = vunpack.c.l.b16 %v1309
        %v1342 = vunpack.c.l.b16 %v1310
        %v1343 = vunpack.c.l.b16 %v1311
        %v1344 = vunpack.c.l.b16 %v1312
        %v1345 = vunpack.c.l.b16 %v1313
        %v1346 = vunpack.c.l.b16 %v1314
        %v1347 = vunpack.c.l.b16 %v1315
        %v1348 = vunpack.c.l.b16 %v1316
        %v1349 = vunpack.c.l.b16 %v1317
        %v1350 = vunpack.c.l.b16 %v1318
        %v1351 = vunpack.c.l.b16 %v1319
        %v1352 = vunpack.c.l.b16 %v1320
        %v1353 = vunpack.c.l.b16 %v1321
        %v1354 = vunpack.c.l.b16 %v1322
        %v1355 = vpack.c.b16 %v1340, %v1339
        %v1356 = vpack.c.b16 %v1342, %v1341
        %v1357 = vpack.c.b16 %v1344, %v1343
        %v1358 = vpack.c.b16 %v1346, %v1345
        %v1359 = vpack.c.b16 %v1348, %v1347
        %v1360 = vpack.c.b16 %v1350, %v1349
        %v1361 = vpack.c.b16 %v1352, %v1351
        %v1362 = vpack.c.b16 %v1354, %v1353
        %1371 = vmatprep.subr.bf16.mxu0 0
        %1372 = vmatpush1.bf16.msra.mxu0 %v1362
        %1373 = vmatprep.subr.bf16.mxu0 0
        %1374 = vmatpush1.bf16.msra.mxu0 %v1361
        %1375 = vmatprep.subr.bf16.mxu0 0
        %1376 = vmatpush1.bf16.msra.mxu0 %v1360
        %1377 = vmatprep.subr.bf16.mxu0 0
        %1378 = vmatpush1.bf16.msra.mxu0 %v1359
        %1379 = vmatprep.subr.bf16.mxu0 0
        %1380 = vmatpush1.bf16.msra.mxu0 %v1358
        %1381 = vmatprep.subr.bf16.mxu0 0
        %1382 = vmatpush1.bf16.msra.mxu0 %v1357
        %1383 = vmatprep.subr.bf16.mxu0 0
        %1384 = vmatpush1.bf16.msra.mxu0 %v1356
        %1385 = vmatprep.subr.bf16.mxu0 0
        %1386 = vmatpush1.bf16.msra.mxu0 %v1355
        %1387 = vmatprep.subr.bf16.mxu0 0
        %1388 = vmatpush2.bf16.msra.mxu0 0
        %1389 = vmatprep.subr.bf16.mxu0 0
        %1390 = vmatpush2.bf16.msra.mxu0 0
        %1391 = vmatprep.subr.bf16.mxu0 0
        %1392 = vmatpush2.bf16.msra.mxu0 0
        %1393 = vmatprep.subr.bf16.mxu0 0
        %1394 = vmatpush2.bf16.msra.mxu0 0
        %1395 = vmatprep.subr.bf16.mxu0 0
        %1396 = vmatpush2.bf16.msra.mxu0 0
        %1397 = vmatprep.subr.bf16.mxu0 0
        %1398 = vmatpush2.bf16.msra.mxu0 0
        %1399 = vmatprep.subr.bf16.mxu0 0
        %1400 = vmatpush2.bf16.msra.mxu0 0
        %1401 = vmatprep.subr.bf16.mxu0 0
        %1402 = vmatpush2.bf16.msra.mxu0 0
        %1403 = vmatprep.mubr.bf16.mxu0 0
        %1404 = vmatmul.mubr.bf16.gmra.mxu0 %v1305
        %v1405 = vpop.f32.mrf.mxu0
        %v1406 = vadd.f32 0.0, %v1405
        %v1407 = vpop.f32.mrf.mxu0
        %v1408 = vpop.f32.mrf.mxu0
        %v1409 = vadd.f32 0.0, %v1408
        %v1410 = vpop.f32.mrf.mxu0
        %1411 = vdwg.mxu0
        %v1412 = vadd.f32 %v1156, %v1406
        %v1413 = vadd.f32 %v1159, %v1409
        %s1414 = scalar_lea.vmem [#allocation2], 3
        %v1415 = vld [vmem:[%s1414] ss:$2 sm:$0x7]
        %s1416 = scalar_lea.vmem [#allocation2], 19
        %v1417 = vld [vmem:[%s1416] ss:$2 sm:$0x7]
        %s1418 = scalar_lea.vmem [#allocation2], 35
        %v1419 = vld [vmem:[%s1418] ss:$2 sm:$0x7]
        %v1424 = vunpack.c.l.s4 1966171168
        %v1425 = vunpack.c.0.s8 %v1424
        %v1426 = vlaneseq
        %v1427 = vshrl.u32 %v1426, 7
        %v1428 = vsub.s32 %v1425, %v1427
        %v1429 = vrot.slane %v1415, %v1428
        %v1430 = vcombine.high %v1429, %v1429
        %v1432 = vunpack.c.l.s4 1966171168
        %v1433 = vunpack.c.0.s8 %v1432
        %v1434 = vlaneseq
        %v1435 = vshrl.u32 %v1434, 7
        %v1436 = vsub.s32 %v1433, %v1435
        %v1437 = vrot.slane %v1429, %v1436
        %v1439 = vunpack.c.l.s4 1966171168
        %v1440 = vunpack.c.0.s8 %v1439
        %v1441 = vlaneseq
        %v1442 = vshrl.u32 %v1441, 7
        %v1443 = vsub.s32 %v1440, %v1442
        %v1444 = vrot.slane %v1430, %v1443
        %v1445 = vcombine.high %v1437, %v1437
        %v1447 = vunpack.c.l.s4 1966171168
        %v1448 = vunpack.c.0.s8 %v1447
        %v1449 = vlaneseq
        %v1450 = vshrl.u32 %v1449, 7
        %v1451 = vsub.s32 %v1448, %v1450
        %v1452 = vrot.slane %v1417, %v1451
        %v1453 = vcombine.high %v1452, %v1452
        %v1455 = vunpack.c.l.s4 1966171168
        %v1456 = vunpack.c.0.s8 %v1455
        %v1457 = vlaneseq
        %v1458 = vshrl.u32 %v1457, 7
        %v1459 = vsub.s32 %v1456, %v1458
        %v1460 = vrot.slane %v1452, %v1459
        %v1462 = vunpack.c.l.s4 1966171168
        %v1463 = vunpack.c.0.s8 %v1462
        %v1464 = vlaneseq
        %v1465 = vshrl.u32 %v1464, 7
        %v1466 = vsub.s32 %v1463, %v1465
        %v1467 = vrot.slane %v1453, %v1466
        %v1468 = vcombine.high %v1460, %v1460
        %v1470 = vunpack.c.l.s4 1966171168
        %v1471 = vunpack.c.0.s8 %v1470
        %v1472 = vlaneseq
        %v1473 = vshrl.u32 %v1472, 7
        %v1474 = vsub.s32 %v1471, %v1473
        %v1475 = vrot.slane %v1419, %v1474
        %v1476 = vcombine.high %v1475, %v1475
        %v1478 = vunpack.c.l.s4 1966171168
        %v1479 = vunpack.c.0.s8 %v1478
        %v1480 = vlaneseq
        %v1481 = vshrl.u32 %v1480, 7
        %v1482 = vsub.s32 %v1479, %v1481
        %v1483 = vrot.slane %v1475, %v1482
        %v1485 = vunpack.c.l.s4 1966171168
        %v1486 = vunpack.c.0.s8 %v1485
        %v1487 = vlaneseq
        %v1488 = vshrl.u32 %v1487, 7
        %v1489 = vsub.s32 %v1486, %v1488
        %v1490 = vrot.slane %v1476, %v1489
        %v1491 = vcombine.high %v1483, %v1483
        %v1492 = vcombine.low %v1437, %v1444
        %v1493 = vcombine.low %v1445, %v1460
        %v1494 = vcombine.low %v1467, %v1468
        %v1495 = vcombine.low %v1483, %v1490
        %v1497 = vunpack.c.l.s4 1966171168
        %v1498 = vunpack.c.0.s8 %v1497
        %v1499 = vlaneseq
        %v1500 = vshrl.u32 %v1499, 7
        %v1501 = vsub.s32 %v1498, %v1500
        %v1502 = vrot.slane %v1492, %v1501
        %v1504 = vunpack.c.l.s4 1966171168
        %v1505 = vunpack.c.0.s8 %v1504
        %v1506 = vlaneseq
        %v1507 = vshrl.u32 %v1506, 7
        %v1508 = vsub.s32 %v1505, %v1507
        %v1509 = vrot.slane %v1493, %v1508
        %v1511 = vunpack.c.l.s4 1966171168
        %v1512 = vunpack.c.0.s8 %v1511
        %v1513 = vlaneseq
        %v1514 = vshrl.u32 %v1513, 7
        %v1515 = vsub.s32 %v1512, %v1514
        %v1516 = vrot.slane %v1494, %v1515
        %v1518 = vunpack.c.l.s4 1966171168
        %v1519 = vunpack.c.0.s8 %v1518
        %v1520 = vlaneseq
        %v1521 = vshrl.u32 %v1520, 7
        %v1522 = vsub.s32 %v1519, %v1521
        %v1523 = vrot.slane %v1495, %v1522
        %v1524 = vcombine.low %v1502, %v1509
        %v1525 = vcombine.low %v1516, %v1523
        %v1527 = vunpack.c.l.s4 1966171168
        %v1528 = vunpack.c.0.s8 %v1527
        %v1529 = vlaneseq
        %v1530 = vshrl.u32 %v1529, 7
        %v1531 = vsub.s32 %v1528, %v1530
        %v1532 = vrot.slane %v1524, %v1531
        %v1534 = vunpack.c.l.s4 1966171168
        %v1535 = vunpack.c.0.s8 %v1534
        %v1536 = vlaneseq
        %v1537 = vshrl.u32 %v1536, 7
        %v1538 = vsub.s32 %v1535, %v1537
        %v1539 = vrot.slane %v1525, %v1538
        %v1540 = vcombine.low %v1532, %v1539
        %v1542 = vunpack.c.l.s4 1966171168
        %v1543 = vunpack.c.0.s8 %v1542
        %v1544 = vlaneseq
        %v1545 = vshrl.u32 %v1544, 7
        %v1546 = vsub.s32 %v1543, %v1545
        %v1547 = vrot.slane %v1491, %v1546
        %v1549 = vunpack.c.l.s4 1966171168
        %v1550 = vunpack.c.0.s8 %v1549
        %v1551 = vlaneseq
        %v1552 = vshrl.u32 %v1551, 7
        %v1553 = vsub.s32 %v1550, %v1552
        %v1554 = vrot.slane %v1547, %v1553
        %v1557 = vpack.c.bf16 %v1554, %v1540
        %s1558 = scalar_lea.vmem %s3, 192
        %v1559 = vld [vmem:[%s1558] sm:$0xf]
        %v1560 = vld [vmem:[%s1558 + $0x4] sm:$0xf]
        %v1561 = vld [vmem:[%s1558 + $0x8] sm:$0xf]
        %v1562 = vld [vmem:[%s1558 + $0xc] sm:$0xf]
        %v1563 = vld [vmem:[%s1558 + $0x10] sm:$0xf]
        %v1564 = vld [vmem:[%s1558 + $0x14] sm:$0xf]
        %v1565 = vld [vmem:[%s1558 + $0x18] sm:$0xf]
        %v1566 = vld [vmem:[%s1558 + $0x1c] sm:$0xf]
        %v1567 = vld [vmem:[%s1558 + $0x20] sm:$0xf]
        %v1568 = vld [vmem:[%s1558 + $0x24] sm:$0xf]
        %v1569 = vld [vmem:[%s1558 + $0x28] sm:$0xf]
        %v1570 = vld [vmem:[%s1558 + $0x2c] sm:$0xf]
        %v1571 = vld [vmem:[%s1558 + $0x30] sm:$0xf]
        %v1572 = vld [vmem:[%s1558 + $0x34] sm:$0xf]
        %v1573 = vld [vmem:[%s1558 + $0x38] sm:$0xf]
        %v1574 = vld [vmem:[%s1558 + $0x3c] sm:$0xf]
        %v1591 = vunpack.c.l.b16 %v1559
        %v1592 = vunpack.c.l.b16 %v1560
        %v1593 = vunpack.c.l.b16 %v1561
        %v1594 = vunpack.c.l.b16 %v1562
        %v1595 = vunpack.c.l.b16 %v1563
        %v1596 = vunpack.c.l.b16 %v1564
        %v1597 = vunpack.c.l.b16 %v1565
        %v1598 = vunpack.c.l.b16 %v1566
        %v1599 = vunpack.c.l.b16 %v1567
        %v1600 = vunpack.c.l.b16 %v1568
        %v1601 = vunpack.c.l.b16 %v1569
        %v1602 = vunpack.c.l.b16 %v1570
        %v1603 = vunpack.c.l.b16 %v1571
        %v1604 = vunpack.c.l.b16 %v1572
        %v1605 = vunpack.c.l.b16 %v1573
        %v1606 = vunpack.c.l.b16 %v1574
        %v1607 = vpack.c.b16 %v1592, %v1591
        %v1608 = vpack.c.b16 %v1594, %v1593
        %v1609 = vpack.c.b16 %v1596, %v1595
        %v1610 = vpack.c.b16 %v1598, %v1597
        %v1611 = vpack.c.b16 %v1600, %v1599
        %v1612 = vpack.c.b16 %v1602, %v1601
        %v1613 = vpack.c.b16 %v1604, %v1603
        %v1614 = vpack.c.b16 %v1606, %v1605
        %1623 = vmatprep.subr.bf16.mxu0 0
        %1624 = vmatpush1.bf16.msra.mxu0 %v1614
        %1625 = vmatprep.subr.bf16.mxu0 0
        %1626 = vmatpush1.bf16.msra.mxu0 %v1613
        %1627 = vmatprep.subr.bf16.mxu0 0
        %1628 = vmatpush1.bf16.msra.mxu0 %v1612
        %1629 = vmatprep.subr.bf16.mxu0 0
        %1630 = vmatpush1.bf16.msra.mxu0 %v1611
        %1631 = vmatprep.subr.bf16.mxu0 0
        %1632 = vmatpush1.bf16.msra.mxu0 %v1610
        %1633 = vmatprep.subr.bf16.mxu0 0
        %1634 = vmatpush1.bf16.msra.mxu0 %v1609
        %1635 = vmatprep.subr.bf16.mxu0 0
        %1636 = vmatpush1.bf16.msra.mxu0 %v1608
        %1637 = vmatprep.subr.bf16.mxu0 0
        %1638 = vmatpush1.bf16.msra.mxu0 %v1607
        %1639 = vmatprep.subr.bf16.mxu0 0
        %1640 = vmatpush2.bf16.msra.mxu0 0
        %1641 = vmatprep.subr.bf16.mxu0 0
        %1642 = vmatpush2.bf16.msra.mxu0 0
        %1643 = vmatprep.subr.bf16.mxu0 0
        %1644 = vmatpush2.bf16.msra.mxu0 0
        %1645 = vmatprep.subr.bf16.mxu0 0
        %1646 = vmatpush2.bf16.msra.mxu0 0
        %1647 = vmatprep.subr.bf16.mxu0 0
        %1648 = vmatpush2.bf16.msra.mxu0 0
        %1649 = vmatprep.subr.bf16.mxu0 0
        %1650 = vmatpush2.bf16.msra.mxu0 0
        %1651 = vmatprep.subr.bf16.mxu0 0
        %1652 = vmatpush2.bf16.msra.mxu0 0
        %1653 = vmatprep.subr.bf16.mxu0 0
        %1654 = vmatpush2.bf16.msra.mxu0 0
        %1655 = vmatprep.mubr.bf16.mxu0 0
        %1656 = vmatmul.mubr.bf16.gmra.mxu0 %v1557
        %v1657 = vpop.f32.mrf.mxu0
        %v1658 = vadd.f32 0.0, %v1657
        %v1659 = vpop.f32.mrf.mxu0
        %v1660 = vpop.f32.mrf.mxu0
        %v1661 = vadd.f32 0.0, %v1660
        %v1662 = vpop.f32.mrf.mxu0
        %1663 = vdwg.mxu0
        %v1664 = vadd.f32 %v1412, %v1658
        %v1665 = vadd.f32 %v1413, %v1661
        %s1666 = scalar_lea.vmem [#allocation2], 8
        %v1667 = vld [vmem:[%s1666] ss:$2 sm:$0x7]
        %s1668 = scalar_lea.vmem %s1666, 16 [#allocation2]
        %v1669 = vld [vmem:[%s1668] ss:$2 sm:$0x7]
        %s1670 = scalar_lea.vmem %s1666, 32 [#allocation2]
        %v1671 = vld [vmem:[%s1670] ss:$2 sm:$0x7]
        %v1676 = vunpack.c.l.s4 1966171168
        %v1677 = vunpack.c.0.s8 %v1676
        %v1678 = vlaneseq
        %v1679 = vshrl.u32 %v1678, 7
        %v1680 = vsub.s32 %v1677, %v1679
        %v1681 = vrot.slane %v1667, %v1680
        %v1682 = vcombine.high %v1681, %v1681
        %v1684 = vunpack.c.l.s4 1966171168
        %v1685 = vunpack.c.0.s8 %v1684
        %v1686 = vlaneseq
        %v1687 = vshrl.u32 %v1686, 7
        %v1688 = vsub.s32 %v1685, %v1687
        %v1689 = vrot.slane %v1681, %v1688
        %v1691 = vunpack.c.l.s4 1966171168
        %v1692 = vunpack.c.0.s8 %v1691
        %v1693 = vlaneseq
        %v1694 = vshrl.u32 %v1693, 7
        %v1695 = vsub.s32 %v1692, %v1694
        %v1696 = vrot.slane %v1682, %v1695
        %v1697 = vcombine.high %v1689, %v1689
        %v1699 = vunpack.c.l.s4 1966171168
        %v1700 = vunpack.c.0.s8 %v1699
        %v1701 = vlaneseq
        %v1702 = vshrl.u32 %v1701, 7
        %v1703 = vsub.s32 %v1700, %v1702
        %v1704 = vrot.slane %v1669, %v1703
        %v1705 = vcombine.high %v1704, %v1704
        %v1707 = vunpack.c.l.s4 1966171168
        %v1708 = vunpack.c.0.s8 %v1707
        %v1709 = vlaneseq
        %v1710 = vshrl.u32 %v1709, 7
        %v1711 = vsub.s32 %v1708, %v1710
        %v1712 = vrot.slane %v1704, %v1711
        %v1714 = vunpack.c.l.s4 1966171168
        %v1715 = vunpack.c.0.s8 %v1714
        %v1716 = vlaneseq
        %v1717 = vshrl.u32 %v1716, 7
        %v1718 = vsub.s32 %v1715, %v1717
        %v1719 = vrot.slane %v1705, %v1718
        %v1720 = vcombine.high %v1712, %v1712
        %v1722 = vunpack.c.l.s4 1966171168
        %v1723 = vunpack.c.0.s8 %v1722
        %v1724 = vlaneseq
        %v1725 = vshrl.u32 %v1724, 7
        %v1726 = vsub.s32 %v1723, %v1725
        %v1727 = vrot.slane %v1671, %v1726
        %v1728 = vcombine.high %v1727, %v1727
        %v1730 = vunpack.c.l.s4 1966171168
        %v1731 = vunpack.c.0.s8 %v1730
        %v1732 = vlaneseq
        %v1733 = vshrl.u32 %v1732, 7
        %v1734 = vsub.s32 %v1731, %v1733
        %v1735 = vrot.slane %v1727, %v1734
        %v1737 = vunpack.c.l.s4 1966171168
        %v1738 = vunpack.c.0.s8 %v1737
        %v1739 = vlaneseq
        %v1740 = vshrl.u32 %v1739, 7
        %v1741 = vsub.s32 %v1738, %v1740
        %v1742 = vrot.slane %v1728, %v1741
        %v1743 = vcombine.high %v1735, %v1735
        %v1744 = vcombine.low %v1689, %v1696
        %v1745 = vcombine.low %v1697, %v1712
        %v1746 = vcombine.low %v1719, %v1720
        %v1747 = vcombine.low %v1735, %v1742
        %v1749 = vunpack.c.l.s4 1966171168
        %v1750 = vunpack.c.0.s8 %v1749
        %v1751 = vlaneseq
        %v1752 = vshrl.u32 %v1751, 7
        %v1753 = vsub.s32 %v1750, %v1752
        %v1754 = vrot.slane %v1744, %v1753
        %v1756 = vunpack.c.l.s4 1966171168
        %v1757 = vunpack.c.0.s8 %v1756
        %v1758 = vlaneseq
        %v1759 = vshrl.u32 %v1758, 7
        %v1760 = vsub.s32 %v1757, %v1759
        %v1761 = vrot.slane %v1745, %v1760
        %v1763 = vunpack.c.l.s4 1966171168
        %v1764 = vunpack.c.0.s8 %v1763
        %v1765 = vlaneseq
        %v1766 = vshrl.u32 %v1765, 7
        %v1767 = vsub.s32 %v1764, %v1766
        %v1768 = vrot.slane %v1746, %v1767
        %v1770 = vunpack.c.l.s4 1966171168
        %v1771 = vunpack.c.0.s8 %v1770
        %v1772 = vlaneseq
        %v1773 = vshrl.u32 %v1772, 7
        %v1774 = vsub.s32 %v1771, %v1773
        %v1775 = vrot.slane %v1747, %v1774
        %v1776 = vcombine.low %v1754, %v1761
        %v1777 = vcombine.low %v1768, %v1775
        %v1779 = vunpack.c.l.s4 1966171168
        %v1780 = vunpack.c.0.s8 %v1779
        %v1781 = vlaneseq
        %v1782 = vshrl.u32 %v1781, 7
        %v1783 = vsub.s32 %v1780, %v1782
        %v1784 = vrot.slane %v1776, %v1783
        %v1786 = vunpack.c.l.s4 1966171168
        %v1787 = vunpack.c.0.s8 %v1786
        %v1788 = vlaneseq
        %v1789 = vshrl.u32 %v1788, 7
        %v1790 = vsub.s32 %v1787, %v1789
        %v1791 = vrot.slane %v1777, %v1790
        %v1792 = vcombine.low %v1784, %v1791
        %v1794 = vunpack.c.l.s4 1966171168
        %v1795 = vunpack.c.0.s8 %v1794
        %v1796 = vlaneseq
        %v1797 = vshrl.u32 %v1796, 7
        %v1798 = vsub.s32 %v1795, %v1797
        %v1799 = vrot.slane %v1743, %v1798
        %v1801 = vunpack.c.l.s4 1966171168
        %v1802 = vunpack.c.0.s8 %v1801
        %v1803 = vlaneseq
        %v1804 = vshrl.u32 %v1803, 7
        %v1805 = vsub.s32 %v1802, %v1804
        %v1806 = vrot.slane %v1799, %v1805
        %v1809 = vpack.c.bf16 %v1806, %v1792
        %s1810 = scalar_lea.vmem %s3, 256
        %v1811 = vld [vmem:[%s1810] sm:$0xf]
        %v1812 = vld [vmem:[%s1810 + $0x4] sm:$0xf]
        %v1813 = vld [vmem:[%s1810 + $0x8] sm:$0xf]
        %v1814 = vld [vmem:[%s1810 + $0xc] sm:$0xf]
        %v1815 = vld [vmem:[%s1810 + $0x10] sm:$0xf]
        %v1816 = vld [vmem:[%s1810 + $0x14] sm:$0xf]
        %v1817 = vld [vmem:[%s1810 + $0x18] sm:$0xf]
        %v1818 = vld [vmem:[%s1810 + $0x1c] sm:$0xf]
        %v1819 = vld [vmem:[%s1810 + $0x20] sm:$0xf]
        %v1820 = vld [vmem:[%s1810 + $0x24] sm:$0xf]
        %v1821 = vld [vmem:[%s1810 + $0x28] sm:$0xf]
        %v1822 = vld [vmem:[%s1810 + $0x2c] sm:$0xf]
        %v1823 = vld [vmem:[%s1810 + $0x30] sm:$0xf]
        %v1824 = vld [vmem:[%s1810 + $0x34] sm:$0xf]
        %v1825 = vld [vmem:[%s1810 + $0x38] sm:$0xf]
        %v1826 = vld [vmem:[%s1810 + $0x3c] sm:$0xf]
        %v1843 = vunpack.c.l.b16 %v1811
        %v1844 = vunpack.c.l.b16 %v1812
        %v1845 = vunpack.c.l.b16 %v1813
        %v1846 = vunpack.c.l.b16 %v1814
        %v1847 = vunpack.c.l.b16 %v1815
        %v1848 = vunpack.c.l.b16 %v1816
        %v1849 = vunpack.c.l.b16 %v1817
        %v1850 = vunpack.c.l.b16 %v1818
        %v1851 = vunpack.c.l.b16 %v1819
        %v1852 = vunpack.c.l.b16 %v1820
        %v1853 = vunpack.c.l.b16 %v1821
        %v1854 = vunpack.c.l.b16 %v1822
        %v1855 = vunpack.c.l.b16 %v1823
        %v1856 = vunpack.c.l.b16 %v1824
        %v1857 = vunpack.c.l.b16 %v1825
        %v1858 = vunpack.c.l.b16 %v1826
        %v1859 = vpack.c.b16 %v1844, %v1843
        %v1860 = vpack.c.b16 %v1846, %v1845
        %v1861 = vpack.c.b16 %v1848, %v1847
        %v1862 = vpack.c.b16 %v1850, %v1849
        %v1863 = vpack.c.b16 %v1852, %v1851
        %v1864 = vpack.c.b16 %v1854, %v1853
        %v1865 = vpack.c.b16 %v1856, %v1855
        %v1866 = vpack.c.b16 %v1858, %v1857
        %1875 = vmatprep.subr.bf16.mxu0 0
        %1876 = vmatpush1.bf16.msra.mxu0 %v1866
        %1877 = vmatprep.subr.bf16.mxu0 0
        %1878 = vmatpush1.bf16.msra.mxu0 %v1865
        %1879 = vmatprep.subr.bf16.mxu0 0
        %1880 = vmatpush1.bf16.msra.mxu0 %v1864
        %1881 = vmatprep.subr.bf16.mxu0 0
        %1882 = vmatpush1.bf16.msra.mxu0 %v1863
        %1883 = vmatprep.subr.bf16.mxu0 0
        %1884 = vmatpush1.bf16.msra.mxu0 %v1862
        %1885 = vmatprep.subr.bf16.mxu0 0
        %1886 = vmatpush1.bf16.msra.mxu0 %v1861
        %1887 = vmatprep.subr.bf16.mxu0 0
        %1888 = vmatpush1.bf16.msra.mxu0 %v1860
        %1889 = vmatprep.subr.bf16.mxu0 0
        %1890 = vmatpush1.bf16.msra.mxu0 %v1859
        %1891 = vmatprep.subr.bf16.mxu0 0
        %1892 = vmatpush2.bf16.msra.mxu0 0
        %1893 = vmatprep.subr.bf16.mxu0 0
        %1894 = vmatpush2.bf16.msra.mxu0 0
        %1895 = vmatprep.subr.bf16.mxu0 0
        %1896 = vmatpush2.bf16.msra.mxu0 0
        %1897 = vmatprep.subr.bf16.mxu0 0
        %1898 = vmatpush2.bf16.msra.mxu0 0
        %1899 = vmatprep.subr.bf16.mxu0 0
        %1900 = vmatpush2.bf16.msra.mxu0 0
        %1901 = vmatprep.subr.bf16.mxu0 0
        %1902 = vmatpush2.bf16.msra.mxu0 0
        %1903 = vmatprep.subr.bf16.mxu0 0
        %1904 = vmatpush2.bf16.msra.mxu0 0
        %1905 = vmatprep.subr.bf16.mxu0 0
        %1906 = vmatpush2.bf16.msra.mxu0 0
        %1907 = vmatprep.mubr.bf16.mxu0 0
        %1908 = vmatmul.mubr.bf16.gmra.mxu0 %v1809
        %v1909 = vpop.f32.mrf.mxu0
        %v1910 = vadd.f32 0.0, %v1909
        %v1911 = vpop.f32.mrf.mxu0
        %v1912 = vpop.f32.mrf.mxu0
        %v1913 = vadd.f32 0.0, %v1912
        %v1914 = vpop.f32.mrf.mxu0
        %1915 = vdwg.mxu0
        %v1916 = vadd.f32 %v1664, %v1910
        %v1917 = vadd.f32 %v1665, %v1913
        %s1918 = scalar_lea.vmem %s1666, 1 [#allocation2]
        %v1919 = vld [vmem:[%s1918] ss:$2 sm:$0x7]
        %s1920 = scalar_lea.vmem %s1666, 17 [#allocation2]
        %v1921 = vld [vmem:[%s1920] ss:$2 sm:$0x7]
        %s1922 = scalar_lea.vmem %s1666, 33 [#allocation2]
        %v1923 = vld [vmem:[%s1922] ss:$2 sm:$0x7]
        %v1928 = vunpack.c.l.s4 1966171168
        %v1929 = vunpack.c.0.s8 %v1928
        %v1930 = vlaneseq
        %v1931 = vshrl.u32 %v1930, 7
        %v1932 = vsub.s32 %v1929, %v1931
        %v1933 = vrot.slane %v1919, %v1932
        %v1934 = vcombine.high %v1933, %v1933
        %v1936 = vunpack.c.l.s4 1966171168
        %v1937 = vunpack.c.0.s8 %v1936
        %v1938 = vlaneseq
        %v1939 = vshrl.u32 %v1938, 7
        %v1940 = vsub.s32 %v1937, %v1939
        %v1941 = vrot.slane %v1933, %v1940
        %v1943 = vunpack.c.l.s4 1966171168
        %v1944 = vunpack.c.0.s8 %v1943
        %v1945 = vlaneseq
        %v1946 = vshrl.u32 %v1945, 7
        %v1947 = vsub.s32 %v1944, %v1946
        %v1948 = vrot.slane %v1934, %v1947
        %v1949 = vcombine.high %v1941, %v1941
        %v1951 = vunpack.c.l.s4 1966171168
        %v1952 = vunpack.c.0.s8 %v1951
        %v1953 = vlaneseq
        %v1954 = vshrl.u32 %v1953, 7
        %v1955 = vsub.s32 %v1952, %v1954
        %v1956 = vrot.slane %v1921, %v1955
        %v1957 = vcombine.high %v1956, %v1956
        %v1959 = vunpack.c.l.s4 1966171168
        %v1960 = vunpack.c.0.s8 %v1959
        %v1961 = vlaneseq
        %v1962 = vshrl.u32 %v1961, 7
        %v1963 = vsub.s32 %v1960, %v1962
        %v1964 = vrot.slane %v1956, %v1963
        %v1966 = vunpack.c.l.s4 1966171168
        %v1967 = vunpack.c.0.s8 %v1966
        %v1968 = vlaneseq
        %v1969 = vshrl.u32 %v1968, 7
        %v1970 = vsub.s32 %v1967, %v1969
        %v1971 = vrot.slane %v1957, %v1970
        %v1972 = vcombine.high %v1964, %v1964
        %v1974 = vunpack.c.l.s4 1966171168
        %v1975 = vunpack.c.0.s8 %v1974
        %v1976 = vlaneseq
        %v1977 = vshrl.u32 %v1976, 7
        %v1978 = vsub.s32 %v1975, %v1977
        %v1979 = vrot.slane %v1923, %v1978
        %v1980 = vcombine.high %v1979, %v1979
        %v1982 = vunpack.c.l.s4 1966171168
        %v1983 = vunpack.c.0.s8 %v1982
        %v1984 = vlaneseq
        %v1985 = vshrl.u32 %v1984, 7
        %v1986 = vsub.s32 %v1983, %v1985
        %v1987 = vrot.slane %v1979, %v1986
        %v1989 = vunpack.c.l.s4 1966171168
        %v1990 = vunpack.c.0.s8 %v1989
        %v1991 = vlaneseq
        %v1992 = vshrl.u32 %v1991, 7
        %v1993 = vsub.s32 %v1990, %v1992
        %v1994 = vrot.slane %v1980, %v1993
        %v1995 = vcombine.high %v1987, %v1987
        %v1996 = vcombine.low %v1941, %v1948
        %v1997 = vcombine.low %v1949, %v1964
        %v1998 = vcombine.low %v1971, %v1972
        %v1999 = vcombine.low %v1987, %v1994
        %v2001 = vunpack.c.l.s4 1966171168
        %v2002 = vunpack.c.0.s8 %v2001
        %v2003 = vlaneseq
        %v2004 = vshrl.u32 %v2003, 7
        %v2005 = vsub.s32 %v2002, %v2004
        %v2006 = vrot.slane %v1996, %v2005
        %v2008 = vunpack.c.l.s4 1966171168
        %v2009 = vunpack.c.0.s8 %v2008
        %v2010 = vlaneseq
        %v2011 = vshrl.u32 %v2010, 7
        %v2012 = vsub.s32 %v2009, %v2011
        %v2013 = vrot.slane %v1997, %v2012
        %v2015 = vunpack.c.l.s4 1966171168
        %v2016 = vunpack.c.0.s8 %v2015
        %v2017 = vlaneseq
        %v2018 = vshrl.u32 %v2017, 7
        %v2019 = vsub.s32 %v2016, %v2018
        %v2020 = vrot.slane %v1998, %v2019
        %v2022 = vunpack.c.l.s4 1966171168
        %v2023 = vunpack.c.0.s8 %v2022
        %v2024 = vlaneseq
        %v2025 = vshrl.u32 %v2024, 7
        %v2026 = vsub.s32 %v2023, %v2025
        %v2027 = vrot.slane %v1999, %v2026
        %v2028 = vcombine.low %v2006, %v2013
        %v2029 = vcombine.low %v2020, %v2027
        %v2031 = vunpack.c.l.s4 1966171168
        %v2032 = vunpack.c.0.s8 %v2031
        %v2033 = vlaneseq
        %v2034 = vshrl.u32 %v2033, 7
        %v2035 = vsub.s32 %v2032, %v2034
        %v2036 = vrot.slane %v2028, %v2035
        %v2038 = vunpack.c.l.s4 1966171168
        %v2039 = vunpack.c.0.s8 %v2038
        %v2040 = vlaneseq
        %v2041 = vshrl.u32 %v2040, 7
        %v2042 = vsub.s32 %v2039, %v2041
        %v2043 = vrot.slane %v2029, %v2042
        %v2044 = vcombine.low %v2036, %v2043
        %v2046 = vunpack.c.l.s4 1966171168
        %v2047 = vunpack.c.0.s8 %v2046
        %v2048 = vlaneseq
        %v2049 = vshrl.u32 %v2048, 7
        %v2050 = vsub.s32 %v2047, %v2049
        %v2051 = vrot.slane %v1995, %v2050
        %v2053 = vunpack.c.l.s4 1966171168
        %v2054 = vunpack.c.0.s8 %v2053
        %v2055 = vlaneseq
        %v2056 = vshrl.u32 %v2055, 7
        %v2057 = vsub.s32 %v2054, %v2056
        %v2058 = vrot.slane %v2051, %v2057
        %v2061 = vpack.c.bf16 %v2058, %v2044
        %s2062 = scalar_lea.vmem %s3, 320
        %v2063 = vld [vmem:[%s2062] sm:$0xf]
        %v2064 = vld [vmem:[%s2062 + $0x4] sm:$0xf]
        %v2065 = vld [vmem:[%s2062 + $0x8] sm:$0xf]
        %v2066 = vld [vmem:[%s2062 + $0xc] sm:$0xf]
        %v2067 = vld [vmem:[%s2062 + $0x10] sm:$0xf]
        %v2068 = vld [vmem:[%s2062 + $0x14] sm:$0xf]
        %v2069 = vld [vmem:[%s2062 + $0x18] sm:$0xf]
        %v2070 = vld [vmem:[%s2062 + $0x1c] sm:$0xf]
        %v2071 = vld [vmem:[%s2062 + $0x20] sm:$0xf]
        %v2072 = vld [vmem:[%s2062 + $0x24] sm:$0xf]
        %v2073 = vld [vmem:[%s2062 + $0x28] sm:$0xf]
        %v2074 = vld [vmem:[%s2062 + $0x2c] sm:$0xf]
        %v2075 = vld [vmem:[%s2062 + $0x30] sm:$0xf]
        %v2076 = vld [vmem:[%s2062 + $0x34] sm:$0xf]
        %v2077 = vld [vmem:[%s2062 + $0x38] sm:$0xf]
        %v2078 = vld [vmem:[%s2062 + $0x3c] sm:$0xf]
        %v2095 = vunpack.c.l.b16 %v2063
        %v2096 = vunpack.c.l.b16 %v2064
        %v2097 = vunpack.c.l.b16 %v2065
        %v2098 = vunpack.c.l.b16 %v2066
        %v2099 = vunpack.c.l.b16 %v2067
        %v2100 = vunpack.c.l.b16 %v2068
        %v2101 = vunpack.c.l.b16 %v2069
        %v2102 = vunpack.c.l.b16 %v2070
        %v2103 = vunpack.c.l.b16 %v2071
        %v2104 = vunpack.c.l.b16 %v2072
        %v2105 = vunpack.c.l.b16 %v2073
        %v2106 = vunpack.c.l.b16 %v2074
        %v2107 = vunpack.c.l.b16 %v2075
        %v2108 = vunpack.c.l.b16 %v2076
        %v2109 = vunpack.c.l.b16 %v2077
        %v2110 = vunpack.c.l.b16 %v2078
        %v2111 = vpack.c.b16 %v2096, %v2095
        %v2112 = vpack.c.b16 %v2098, %v2097
        %v2113 = vpack.c.b16 %v2100, %v2099
        %v2114 = vpack.c.b16 %v2102, %v2101
        %v2115 = vpack.c.b16 %v2104, %v2103
        %v2116 = vpack.c.b16 %v2106, %v2105
        %v2117 = vpack.c.b16 %v2108, %v2107
        %v2118 = vpack.c.b16 %v2110, %v2109
        %2127 = vmatprep.subr.bf16.mxu0 0
        %2128 = vmatpush1.bf16.msra.mxu0 %v2118
        %2129 = vmatprep.subr.bf16.mxu0 0
        %2130 = vmatpush1.bf16.msra.mxu0 %v2117
        %2131 = vmatprep.subr.bf16.mxu0 0
        %2132 = vmatpush1.bf16.msra.mxu0 %v2116
        %2133 = vmatprep.subr.bf16.mxu0 0
        %2134 = vmatpush1.bf16.msra.mxu0 %v2115
        %2135 = vmatprep.subr.bf16.mxu0 0
        %2136 = vmatpush1.bf16.msra.mxu0 %v2114
        %2137 = vmatprep.subr.bf16.mxu0 0
        %2138 = vmatpush1.bf16.msra.mxu0 %v2113
        %2139 = vmatprep.subr.bf16.mxu0 0
        %2140 = vmatpush1.bf16.msra.mxu0 %v2112
        %2141 = vmatprep.subr.bf16.mxu0 0
        %2142 = vmatpush1.bf16.msra.mxu0 %v2111
        %2143 = vmatprep.subr.bf16.mxu0 0
        %2144 = vmatpush2.bf16.msra.mxu0 0
        %2145 = vmatprep.subr.bf16.mxu0 0
        %2146 = vmatpush2.bf16.msra.mxu0 0
        %2147 = vmatprep.subr.bf16.mxu0 0
        %2148 = vmatpush2.bf16.msra.mxu0 0
        %2149 = vmatprep.subr.bf16.mxu0 0
        %2150 = vmatpush2.bf16.msra.mxu0 0
        %2151 = vmatprep.subr.bf16.mxu0 0
        %2152 = vmatpush2.bf16.msra.mxu0 0
        %2153 = vmatprep.subr.bf16.mxu0 0
        %2154 = vmatpush2.bf16.msra.mxu0 0
        %2155 = vmatprep.subr.bf16.mxu0 0
        %2156 = vmatpush2.bf16.msra.mxu0 0
        %2157 = vmatprep.subr.bf16.mxu0 0
        %2158 = vmatpush2.bf16.msra.mxu0 0
        %2159 = vmatprep.mubr.bf16.mxu0 0
        %2160 = vmatmul.mubr.bf16.gmra.mxu0 %v2061
        %v2161 = vpop.f32.mrf.mxu0
        %v2162 = vadd.f32 0.0, %v2161
        %v2163 = vpop.f32.mrf.mxu0
        %v2164 = vpop.f32.mrf.mxu0
        %v2165 = vadd.f32 0.0, %v2164
        %v2166 = vpop.f32.mrf.mxu0
        %2167 = vdwg.mxu0
        %v2168 = vadd.f32 %v1916, %v2162
        %v2169 = vadd.f32 %v1917, %v2165
        %s2170 = scalar_lea.vmem %s1666, 2 [#allocation2]
        %v2171 = vld [vmem:[%s2170] ss:$2 sm:$0x7]
        %s2172 = scalar_lea.vmem %s1666, 18 [#allocation2]
        %v2173 = vld [vmem:[%s2172] ss:$2 sm:$0x7]
        %s2174 = scalar_lea.vmem %s1666, 34 [#allocation2]
        %v2175 = vld [vmem:[%s2174] ss:$2 sm:$0x7]
        %v2180 = vunpack.c.l.s4 1966171168
        %v2181 = vunpack.c.0.s8 %v2180
        %v2182 = vlaneseq
        %v2183 = vshrl.u32 %v2182, 7
        %v2184 = vsub.s32 %v2181, %v2183
        %v2185 = vrot.slane %v2171, %v2184
        %v2186 = vcombine.high %v2185, %v2185
        %v2188 = vunpack.c.l.s4 1966171168
        %v2189 = vunpack.c.0.s8 %v2188
        %v2190 = vlaneseq
        %v2191 = vshrl.u32 %v2190, 7
        %v2192 = vsub.s32 %v2189, %v2191
        %v2193 = vrot.slane %v2185, %v2192
        %v2195 = vunpack.c.l.s4 1966171168
        %v2196 = vunpack.c.0.s8 %v2195
        %v2197 = vlaneseq
        %v2198 = vshrl.u32 %v2197, 7
        %v2199 = vsub.s32 %v2196, %v2198
        %v2200 = vrot.slane %v2186, %v2199
        %v2201 = vcombine.high %v2193, %v2193
        %v2203 = vunpack.c.l.s4 1966171168
        %v2204 = vunpack.c.0.s8 %v2203
        %v2205 = vlaneseq
        %v2206 = vshrl.u32 %v2205, 7
        %v2207 = vsub.s32 %v2204, %v2206
        %v2208 = vrot.slane %v2173, %v2207
        %v2209 = vcombine.high %v2208, %v2208
        %v2211 = vunpack.c.l.s4 1966171168
        %v2212 = vunpack.c.0.s8 %v2211
        %v2213 = vlaneseq
        %v2214 = vshrl.u32 %v2213, 7
        %v2215 = vsub.s32 %v2212, %v2214
        %v2216 = vrot.slane %v2208, %v2215
        %v2218 = vunpack.c.l.s4 1966171168
        %v2219 = vunpack.c.0.s8 %v2218
        %v2220 = vlaneseq
        %v2221 = vshrl.u32 %v2220, 7
        %v2222 = vsub.s32 %v2219, %v2221
        %v2223 = vrot.slane %v2209, %v2222
        %v2224 = vcombine.high %v2216, %v2216
        %v2226 = vunpack.c.l.s4 1966171168
        %v2227 = vunpack.c.0.s8 %v2226
        %v2228 = vlaneseq
        %v2229 = vshrl.u32 %v2228, 7
        %v2230 = vsub.s32 %v2227, %v2229
        %v2231 = vrot.slane %v2175, %v2230
        %v2232 = vcombine.high %v2231, %v2231
        %v2234 = vunpack.c.l.s4 1966171168
        %v2235 = vunpack.c.0.s8 %v2234
        %v2236 = vlaneseq
        %v2237 = vshrl.u32 %v2236, 7
        %v2238 = vsub.s32 %v2235, %v2237
        %v2239 = vrot.slane %v2231, %v2238
        %v2241 = vunpack.c.l.s4 1966171168
        %v2242 = vunpack.c.0.s8 %v2241
        %v2243 = vlaneseq
        %v2244 = vshrl.u32 %v2243, 7
        %v2245 = vsub.s32 %v2242, %v2244
        %v2246 = vrot.slane %v2232, %v2245
        %v2247 = vcombine.high %v2239, %v2239
        %v2248 = vcombine.low %v2193, %v2200
        %v2249 = vcombine.low %v2201, %v2216
        %v2250 = vcombine.low %v2223, %v2224
        %v2251 = vcombine.low %v2239, %v2246
        %v2253 = vunpack.c.l.s4 1966171168
        %v2254 = vunpack.c.0.s8 %v2253
        %v2255 = vlaneseq
        %v2256 = vshrl.u32 %v2255, 7
        %v2257 = vsub.s32 %v2254, %v2256
        %v2258 = vrot.slane %v2248, %v2257
        %v2260 = vunpack.c.l.s4 1966171168
        %v2261 = vunpack.c.0.s8 %v2260
        %v2262 = vlaneseq
        %v2263 = vshrl.u32 %v2262, 7
        %v2264 = vsub.s32 %v2261, %v2263
        %v2265 = vrot.slane %v2249, %v2264
        %v2267 = vunpack.c.l.s4 1966171168
        %v2268 = vunpack.c.0.s8 %v2267
        %v2269 = vlaneseq
        %v2270 = vshrl.u32 %v2269, 7
        %v2271 = vsub.s32 %v2268, %v2270
        %v2272 = vrot.slane %v2250, %v2271
        %v2274 = vunpack.c.l.s4 1966171168
        %v2275 = vunpack.c.0.s8 %v2274
        %v2276 = vlaneseq
        %v2277 = vshrl.u32 %v2276, 7
        %v2278 = vsub.s32 %v2275, %v2277
        %v2279 = vrot.slane %v2251, %v2278
        %v2280 = vcombine.low %v2258, %v2265
        %v2281 = vcombine.low %v2272, %v2279
        %v2283 = vunpack.c.l.s4 1966171168
        %v2284 = vunpack.c.0.s8 %v2283
        %v2285 = vlaneseq
        %v2286 = vshrl.u32 %v2285, 7
        %v2287 = vsub.s32 %v2284, %v2286
        %v2288 = vrot.slane %v2280, %v2287
        %v2290 = vunpack.c.l.s4 1966171168
        %v2291 = vunpack.c.0.s8 %v2290
        %v2292 = vlaneseq
        %v2293 = vshrl.u32 %v2292, 7
        %v2294 = vsub.s32 %v2291, %v2293
        %v2295 = vrot.slane %v2281, %v2294
        %v2296 = vcombine.low %v2288, %v2295
        %v2298 = vunpack.c.l.s4 1966171168
        %v2299 = vunpack.c.0.s8 %v2298
        %v2300 = vlaneseq
        %v2301 = vshrl.u32 %v2300, 7
        %v2302 = vsub.s32 %v2299, %v2301
        %v2303 = vrot.slane %v2247, %v2302
        %v2305 = vunpack.c.l.s4 1966171168
        %v2306 = vunpack.c.0.s8 %v2305
        %v2307 = vlaneseq
        %v2308 = vshrl.u32 %v2307, 7
        %v2309 = vsub.s32 %v2306, %v2308
        %v2310 = vrot.slane %v2303, %v2309
        %v2313 = vpack.c.bf16 %v2310, %v2296
        %s2314 = scalar_lea.vmem %s3, 384
        %v2315 = vld [vmem:[%s2314] sm:$0xf]
        %v2316 = vld [vmem:[%s2314 + $0x4] sm:$0xf]
        %v2317 = vld [vmem:[%s2314 + $0x8] sm:$0xf]
        %v2318 = vld [vmem:[%s2314 + $0xc] sm:$0xf]
        %v2319 = vld [vmem:[%s2314 + $0x10] sm:$0xf]
        %v2320 = vld [vmem:[%s2314 + $0x14] sm:$0xf]
        %v2321 = vld [vmem:[%s2314 + $0x18] sm:$0xf]
        %v2322 = vld [vmem:[%s2314 + $0x1c] sm:$0xf]
        %v2323 = vld [vmem:[%s2314 + $0x20] sm:$0xf]
        %v2324 = vld [vmem:[%s2314 + $0x24] sm:$0xf]
        %v2325 = vld [vmem:[%s2314 + $0x28] sm:$0xf]
        %v2326 = vld [vmem:[%s2314 + $0x2c] sm:$0xf]
        %v2327 = vld [vmem:[%s2314 + $0x30] sm:$0xf]
        %v2328 = vld [vmem:[%s2314 + $0x34] sm:$0xf]
        %v2329 = vld [vmem:[%s2314 + $0x38] sm:$0xf]
        %v2330 = vld [vmem:[%s2314 + $0x3c] sm:$0xf]
        %v2347 = vunpack.c.l.b16 %v2315
        %v2348 = vunpack.c.l.b16 %v2316
        %v2349 = vunpack.c.l.b16 %v2317
        %v2350 = vunpack.c.l.b16 %v2318
        %v2351 = vunpack.c.l.b16 %v2319
        %v2352 = vunpack.c.l.b16 %v2320
        %v2353 = vunpack.c.l.b16 %v2321
        %v2354 = vunpack.c.l.b16 %v2322
        %v2355 = vunpack.c.l.b16 %v2323
        %v2356 = vunpack.c.l.b16 %v2324
        %v2357 = vunpack.c.l.b16 %v2325
        %v2358 = vunpack.c.l.b16 %v2326
        %v2359 = vunpack.c.l.b16 %v2327
        %v2360 = vunpack.c.l.b16 %v2328
        %v2361 = vunpack.c.l.b16 %v2329
        %v2362 = vunpack.c.l.b16 %v2330
        %v2363 = vpack.c.b16 %v2348, %v2347
        %v2364 = vpack.c.b16 %v2350, %v2349
        %v2365 = vpack.c.b16 %v2352, %v2351
        %v2366 = vpack.c.b16 %v2354, %v2353
        %v2367 = vpack.c.b16 %v2356, %v2355
        %v2368 = vpack.c.b16 %v2358, %v2357
        %v2369 = vpack.c.b16 %v2360, %v2359
        %v2370 = vpack.c.b16 %v2362, %v2361
        %2379 = vmatprep.subr.bf16.mxu0 0
        %2380 = vmatpush1.bf16.msra.mxu0 %v2370
        %2381 = vmatprep.subr.bf16.mxu0 0
        %2382 = vmatpush1.bf16.msra.mxu0 %v2369
        %2383 = vmatprep.subr.bf16.mxu0 0
        %2384 = vmatpush1.bf16.msra.mxu0 %v2368
        %2385 = vmatprep.subr.bf16.mxu0 0
        %2386 = vmatpush1.bf16.msra.mxu0 %v2367
        %2387 = vmatprep.subr.bf16.mxu0 0
        %2388 = vmatpush1.bf16.msra.mxu0 %v2366
        %2389 = vmatprep.subr.bf16.mxu0 0
        %2390 = vmatpush1.bf16.msra.mxu0 %v2365
        %2391 = vmatprep.subr.bf16.mxu0 0
        %2392 = vmatpush1.bf16.msra.mxu0 %v2364
        %2393 = vmatprep.subr.bf16.mxu0 0
        %2394 = vmatpush1.bf16.msra.mxu0 %v2363
        %2395 = vmatprep.subr.bf16.mxu0 0
        %2396 = vmatpush2.bf16.msra.mxu0 0
        %2397 = vmatprep.subr.bf16.mxu0 0
        %2398 = vmatpush2.bf16.msra.mxu0 0
        %2399 = vmatprep.subr.bf16.mxu0 0
        %2400 = vmatpush2.bf16.msra.mxu0 0
        %2401 = vmatprep.subr.bf16.mxu0 0
        %2402 = vmatpush2.bf16.msra.mxu0 0
        %2403 = vmatprep.subr.bf16.mxu0 0
        %2404 = vmatpush2.bf16.msra.mxu0 0
        %2405 = vmatprep.subr.bf16.mxu0 0
        %2406 = vmatpush2.bf16.msra.mxu0 0
        %2407 = vmatprep.subr.bf16.mxu0 0
        %2408 = vmatpush2.bf16.msra.mxu0 0
        %2409 = vmatprep.subr.bf16.mxu0 0
        %2410 = vmatpush2.bf16.msra.mxu0 0
        %2411 = vmatprep.mubr.bf16.mxu0 0
        %2412 = vmatmul.mubr.bf16.gmra.mxu0 %v2313
        %v2413 = vpop.f32.mrf.mxu0
        %v2414 = vadd.f32 0.0, %v2413
        %v2415 = vpop.f32.mrf.mxu0
        %v2416 = vpop.f32.mrf.mxu0
        %v2417 = vadd.f32 0.0, %v2416
        %v2418 = vpop.f32.mrf.mxu0
        %2419 = vdwg.mxu0
        %v2420 = vadd.f32 %v2168, %v2414
        %v2421 = vadd.f32 %v2169, %v2417
        %s2422 = scalar_lea.vmem %s1666, 3 [#allocation2]
        %v2423 = vld [vmem:[%s2422] ss:$2 sm:$0x7]
        %s2424 = scalar_lea.vmem %s1666, 19 [#allocation2]
        %v2425 = vld [vmem:[%s2424] ss:$2 sm:$0x7]
        %s2426 = scalar_lea.vmem %s1666, 35 [#allocation2]
        %v2427 = vld [vmem:[%s2426] ss:$2 sm:$0x7]
        %v2432 = vunpack.c.l.s4 1966171168
        %v2433 = vunpack.c.0.s8 %v2432
        %v2434 = vlaneseq
        %v2435 = vshrl.u32 %v2434, 7
        %v2436 = vsub.s32 %v2433, %v2435
        %v2437 = vrot.slane %v2423, %v2436
        %v2438 = vcombine.high %v2437, %v2437
        %v2440 = vunpack.c.l.s4 1966171168
        %v2441 = vunpack.c.0.s8 %v2440
        %v2442 = vlaneseq
        %v2443 = vshrl.u32 %v2442, 7
        %v2444 = vsub.s32 %v2441, %v2443
        %v2445 = vrot.slane %v2437, %v2444
        %v2447 = vunpack.c.l.s4 1966171168
        %v2448 = vunpack.c.0.s8 %v2447
        %v2449 = vlaneseq
        %v2450 = vshrl.u32 %v2449, 7
        %v2451 = vsub.s32 %v2448, %v2450
        %v2452 = vrot.slane %v2438, %v2451
        %v2453 = vcombine.high %v2445, %v2445
        %v2455 = vunpack.c.l.s4 1966171168
        %v2456 = vunpack.c.0.s8 %v2455
        %v2457 = vlaneseq
        %v2458 = vshrl.u32 %v2457, 7
        %v2459 = vsub.s32 %v2456, %v2458
        %v2460 = vrot.slane %v2425, %v2459
        %v2461 = vcombine.high %v2460, %v2460
        %v2463 = vunpack.c.l.s4 1966171168
        %v2464 = vunpack.c.0.s8 %v2463
        %v2465 = vlaneseq
        %v2466 = vshrl.u32 %v2465, 7
        %v2467 = vsub.s32 %v2464, %v2466
        %v2468 = vrot.slane %v2460, %v2467
        %v2470 = vunpack.c.l.s4 1966171168
        %v2471 = vunpack.c.0.s8 %v2470
        %v2472 = vlaneseq
        %v2473 = vshrl.u32 %v2472, 7
        %v2474 = vsub.s32 %v2471, %v2473
        %v2475 = vrot.slane %v2461, %v2474
        %v2476 = vcombine.high %v2468, %v2468
        %v2478 = vunpack.c.l.s4 1966171168
        %v2479 = vunpack.c.0.s8 %v2478
        %v2480 = vlaneseq
        %v2481 = vshrl.u32 %v2480, 7
        %v2482 = vsub.s32 %v2479, %v2481
        %v2483 = vrot.slane %v2427, %v2482
        %v2484 = vcombine.high %v2483, %v2483
        %v2486 = vunpack.c.l.s4 1966171168
        %v2487 = vunpack.c.0.s8 %v2486
        %v2488 = vlaneseq
        %v2489 = vshrl.u32 %v2488, 7
        %v2490 = vsub.s32 %v2487, %v2489
        %v2491 = vrot.slane %v2483, %v2490
        %v2493 = vunpack.c.l.s4 1966171168
        %v2494 = vunpack.c.0.s8 %v2493
        %v2495 = vlaneseq
        %v2496 = vshrl.u32 %v2495, 7
        %v2497 = vsub.s32 %v2494, %v2496
        %v2498 = vrot.slane %v2484, %v2497
        %v2499 = vcombine.high %v2491, %v2491
        %v2500 = vcombine.low %v2445, %v2452
        %v2501 = vcombine.low %v2453, %v2468
        %v2502 = vcombine.low %v2475, %v2476
        %v2503 = vcombine.low %v2491, %v2498
        %v2505 = vunpack.c.l.s4 1966171168
        %v2506 = vunpack.c.0.s8 %v2505
        %v2507 = vlaneseq
        %v2508 = vshrl.u32 %v2507, 7
        %v2509 = vsub.s32 %v2506, %v2508
        %v2510 = vrot.slane %v2500, %v2509
        %v2512 = vunpack.c.l.s4 1966171168
        %v2513 = vunpack.c.0.s8 %v2512
        %v2514 = vlaneseq
        %v2515 = vshrl.u32 %v2514, 7
        %v2516 = vsub.s32 %v2513, %v2515
        %v2517 = vrot.slane %v2501, %v2516
        %v2519 = vunpack.c.l.s4 1966171168
        %v2520 = vunpack.c.0.s8 %v2519
        %v2521 = vlaneseq
        %v2522 = vshrl.u32 %v2521, 7
        %v2523 = vsub.s32 %v2520, %v2522
        %v2524 = vrot.slane %v2502, %v2523
        %v2526 = vunpack.c.l.s4 1966171168
        %v2527 = vunpack.c.0.s8 %v2526
        %v2528 = vlaneseq
        %v2529 = vshrl.u32 %v2528, 7
        %v2530 = vsub.s32 %v2527, %v2529
        %v2531 = vrot.slane %v2503, %v2530
        %v2532 = vcombine.low %v2510, %v2517
        %v2533 = vcombine.low %v2524, %v2531
        %v2535 = vunpack.c.l.s4 1966171168
        %v2536 = vunpack.c.0.s8 %v2535
        %v2537 = vlaneseq
        %v2538 = vshrl.u32 %v2537, 7
        %v2539 = vsub.s32 %v2536, %v2538
        %v2540 = vrot.slane %v2532, %v2539
        %v2542 = vunpack.c.l.s4 1966171168
        %v2543 = vunpack.c.0.s8 %v2542
        %v2544 = vlaneseq
        %v2545 = vshrl.u32 %v2544, 7
        %v2546 = vsub.s32 %v2543, %v2545
        %v2547 = vrot.slane %v2533, %v2546
        %v2548 = vcombine.low %v2540, %v2547
        %v2550 = vunpack.c.l.s4 1966171168
        %v2551 = vunpack.c.0.s8 %v2550
        %v2552 = vlaneseq
        %v2553 = vshrl.u32 %v2552, 7
        %v2554 = vsub.s32 %v2551, %v2553
        %v2555 = vrot.slane %v2499, %v2554
        %v2557 = vunpack.c.l.s4 1966171168
        %v2558 = vunpack.c.0.s8 %v2557
        %v2559 = vlaneseq
        %v2560 = vshrl.u32 %v2559, 7
        %v2561 = vsub.s32 %v2558, %v2560
        %v2562 = vrot.slane %v2555, %v2561
        %v2565 = vpack.c.bf16 %v2562, %v2548
        %s2566 = scalar_lea.vmem %s3, 448
        %v2567 = vld [vmem:[%s2566] sm:$0xf]
        %v2568 = vld [vmem:[%s2566 + $0x4] sm:$0xf]
        %v2569 = vld [vmem:[%s2566 + $0x8] sm:$0xf]
        %v2570 = vld [vmem:[%s2566 + $0xc] sm:$0xf]
        %v2571 = vld [vmem:[%s2566 + $0x10] sm:$0xf]
        %v2572 = vld [vmem:[%s2566 + $0x14] sm:$0xf]
        %v2573 = vld [vmem:[%s2566 + $0x18] sm:$0xf]
        %v2574 = vld [vmem:[%s2566 + $0x1c] sm:$0xf]
        %v2575 = vld [vmem:[%s2566 + $0x20] sm:$0xf]
        %v2576 = vld [vmem:[%s2566 + $0x24] sm:$0xf]
        %v2577 = vld [vmem:[%s2566 + $0x28] sm:$0xf]
        %v2578 = vld [vmem:[%s2566 + $0x2c] sm:$0xf]
        %v2579 = vld [vmem:[%s2566 + $0x30] sm:$0xf]
        %v2580 = vld [vmem:[%s2566 + $0x34] sm:$0xf]
        %v2581 = vld [vmem:[%s2566 + $0x38] sm:$0xf]
        %v2582 = vld [vmem:[%s2566 + $0x3c] sm:$0xf]
        %v2599 = vunpack.c.l.b16 %v2567
        %v2600 = vunpack.c.l.b16 %v2568
        %v2601 = vunpack.c.l.b16 %v2569
        %v2602 = vunpack.c.l.b16 %v2570
        %v2603 = vunpack.c.l.b16 %v2571
        %v2604 = vunpack.c.l.b16 %v2572
        %v2605 = vunpack.c.l.b16 %v2573
        %v2606 = vunpack.c.l.b16 %v2574
        %v2607 = vunpack.c.l.b16 %v2575
        %v2608 = vunpack.c.l.b16 %v2576
        %v2609 = vunpack.c.l.b16 %v2577
        %v2610 = vunpack.c.l.b16 %v2578
        %v2611 = vunpack.c.l.b16 %v2579
        %v2612 = vunpack.c.l.b16 %v2580
        %v2613 = vunpack.c.l.b16 %v2581
        %v2614 = vunpack.c.l.b16 %v2582
        %v2615 = vpack.c.b16 %v2600, %v2599
        %v2616 = vpack.c.b16 %v2602, %v2601
        %v2617 = vpack.c.b16 %v2604, %v2603
        %v2618 = vpack.c.b16 %v2606, %v2605
        %v2619 = vpack.c.b16 %v2608, %v2607
        %v2620 = vpack.c.b16 %v2610, %v2609
        %v2621 = vpack.c.b16 %v2612, %v2611
        %v2622 = vpack.c.b16 %v2614, %v2613
        %2631 = vmatprep.subr.bf16.mxu0 0
        %2632 = vmatpush1.bf16.msra.mxu0 %v2622
        %2633 = vmatprep.subr.bf16.mxu0 0
        %2634 = vmatpush1.bf16.msra.mxu0 %v2621
        %2635 = vmatprep.subr.bf16.mxu0 0
        %2636 = vmatpush1.bf16.msra.mxu0 %v2620
        %2637 = vmatprep.subr.bf16.mxu0 0
        %2638 = vmatpush1.bf16.msra.mxu0 %v2619
        %2639 = vmatprep.subr.bf16.mxu0 0
        %2640 = vmatpush1.bf16.msra.mxu0 %v2618
        %2641 = vmatprep.subr.bf16.mxu0 0
        %2642 = vmatpush1.bf16.msra.mxu0 %v2617
        %2643 = vmatprep.subr.bf16.mxu0 0
        %2644 = vmatpush1.bf16.msra.mxu0 %v2616
        %2645 = vmatprep.subr.bf16.mxu0 0
        %2646 = vmatpush1.bf16.msra.mxu0 %v2615
        %2647 = vmatprep.subr.bf16.mxu0 0
        %2648 = vmatpush2.bf16.msra.mxu0 0
        %2649 = vmatprep.subr.bf16.mxu0 0
        %2650 = vmatpush2.bf16.msra.mxu0 0
        %2651 = vmatprep.subr.bf16.mxu0 0
        %2652 = vmatpush2.bf16.msra.mxu0 0
        %2653 = vmatprep.subr.bf16.mxu0 0
        %2654 = vmatpush2.bf16.msra.mxu0 0
        %2655 = vmatprep.subr.bf16.mxu0 0
        %2656 = vmatpush2.bf16.msra.mxu0 0
        %2657 = vmatprep.subr.bf16.mxu0 0
        %2658 = vmatpush2.bf16.msra.mxu0 0
        %2659 = vmatprep.subr.bf16.mxu0 0
        %2660 = vmatpush2.bf16.msra.mxu0 0
        %2661 = vmatprep.subr.bf16.mxu0 0
        %2662 = vmatpush2.bf16.msra.mxu0 0
        %2663 = vmatprep.mubr.bf16.mxu0 0
        %2664 = vmatmul.mubr.bf16.gmra.mxu0 %v2565
        %v2665 = vpop.f32.mrf.mxu0
        %v2666 = vadd.f32 0.0, %v2665
        %v2667 = vpop.f32.mrf.mxu0
        %v2668 = vpop.f32.mrf.mxu0
        %v2669 = vadd.f32 0.0, %v2668
        %v2670 = vpop.f32.mrf.mxu0
        %2671 = vdwg.mxu0
        %v2672 = vadd.f32 %v2420, %v2666
        %v2673 = vadd.f32 %v2421, %v2669
        %s2674 = scalar_lea.vmem [#allocation2], 16
        %v2675 = vld [vmem:[%s2674] ss:$2 sm:$0x7]
        %s2676 = scalar_lea.vmem %s2674, 16 [#allocation2]
        %v2677 = vld [vmem:[%s2676] ss:$2 sm:$0x7]
        %s2678 = scalar_lea.vmem %s2674, 32 [#allocation2]
        %v2679 = vld [vmem:[%s2678] ss:$2 sm:$0x7]
        %v2684 = vunpack.c.l.s4 1966171168
        %v2685 = vunpack.c.0.s8 %v2684
        %v2686 = vlaneseq
        %v2687 = vshrl.u32 %v2686, 7
        %v2688 = vsub.s32 %v2685, %v2687
        %v2689 = vrot.slane %v2675, %v2688
        %v2690 = vcombine.high %v2689, %v2689
        %v2692 = vunpack.c.l.s4 1966171168
        %v2693 = vunpack.c.0.s8 %v2692
        %v2694 = vlaneseq
        %v2695 = vshrl.u32 %v2694, 7
        %v2696 = vsub.s32 %v2693, %v2695
        %v2697 = vrot.slane %v2689, %v2696
        %v2699 = vunpack.c.l.s4 1966171168
        %v2700 = vunpack.c.0.s8 %v2699
        %v2701 = vlaneseq
        %v2702 = vshrl.u32 %v2701, 7
        %v2703 = vsub.s32 %v2700, %v2702
        %v2704 = vrot.slane %v2690, %v2703
        %v2705 = vcombine.high %v2697, %v2697
        %v2707 = vunpack.c.l.s4 1966171168
        %v2708 = vunpack.c.0.s8 %v2707
        %v2709 = vlaneseq
        %v2710 = vshrl.u32 %v2709, 7
        %v2711 = vsub.s32 %v2708, %v2710
        %v2712 = vrot.slane %v2677, %v2711
        %v2713 = vcombine.high %v2712, %v2712
        %v2715 = vunpack.c.l.s4 1966171168
        %v2716 = vunpack.c.0.s8 %v2715
        %v2717 = vlaneseq
        %v2718 = vshrl.u32 %v2717, 7
        %v2719 = vsub.s32 %v2716, %v2718
        %v2720 = vrot.slane %v2712, %v2719
        %v2722 = vunpack.c.l.s4 1966171168
        %v2723 = vunpack.c.0.s8 %v2722
        %v2724 = vlaneseq
        %v2725 = vshrl.u32 %v2724, 7
        %v2726 = vsub.s32 %v2723, %v2725
        %v2727 = vrot.slane %v2713, %v2726
        %v2728 = vcombine.high %v2720, %v2720
        %v2730 = vunpack.c.l.s4 1966171168
        %v2731 = vunpack.c.0.s8 %v2730
        %v2732 = vlaneseq
        %v2733 = vshrl.u32 %v2732, 7
        %v2734 = vsub.s32 %v2731, %v2733
        %v2735 = vrot.slane %v2679, %v2734
        %v2736 = vcombine.high %v2735, %v2735
        %v2738 = vunpack.c.l.s4 1966171168
        %v2739 = vunpack.c.0.s8 %v2738
        %v2740 = vlaneseq
        %v2741 = vshrl.u32 %v2740, 7
        %v2742 = vsub.s32 %v2739, %v2741
        %v2743 = vrot.slane %v2735, %v2742
        %v2745 = vunpack.c.l.s4 1966171168
        %v2746 = vunpack.c.0.s8 %v2745
        %v2747 = vlaneseq
        %v2748 = vshrl.u32 %v2747, 7
        %v2749 = vsub.s32 %v2746, %v2748
        %v2750 = vrot.slane %v2736, %v2749
        %v2751 = vcombine.high %v2743, %v2743
        %v2752 = vcombine.low %v2697, %v2704
        %v2753 = vcombine.low %v2705, %v2720
        %v2754 = vcombine.low %v2727, %v2728
        %v2755 = vcombine.low %v2743, %v2750
        %v2757 = vunpack.c.l.s4 1966171168
        %v2758 = vunpack.c.0.s8 %v2757
        %v2759 = vlaneseq
        %v2760 = vshrl.u32 %v2759, 7
        %v2761 = vsub.s32 %v2758, %v2760
        %v2762 = vrot.slane %v2752, %v2761
        %v2764 = vunpack.c.l.s4 1966171168
        %v2765 = vunpack.c.0.s8 %v2764
        %v2766 = vlaneseq
        %v2767 = vshrl.u32 %v2766, 7
        %v2768 = vsub.s32 %v2765, %v2767
        %v2769 = vrot.slane %v2753, %v2768
        %v2771 = vunpack.c.l.s4 1966171168
        %v2772 = vunpack.c.0.s8 %v2771
        %v2773 = vlaneseq
        %v2774 = vshrl.u32 %v2773, 7
        %v2775 = vsub.s32 %v2772, %v2774
        %v2776 = vrot.slane %v2754, %v2775
        %v2778 = vunpack.c.l.s4 1966171168
        %v2779 = vunpack.c.0.s8 %v2778
        %v2780 = vlaneseq
        %v2781 = vshrl.u32 %v2780, 7
        %v2782 = vsub.s32 %v2779, %v2781
        %v2783 = vrot.slane %v2755, %v2782
        %v2784 = vcombine.low %v2762, %v2769
        %v2785 = vcombine.low %v2776, %v2783
        %v2787 = vunpack.c.l.s4 1966171168
        %v2788 = vunpack.c.0.s8 %v2787
        %v2789 = vlaneseq
        %v2790 = vshrl.u32 %v2789, 7
        %v2791 = vsub.s32 %v2788, %v2790
        %v2792 = vrot.slane %v2784, %v2791
        %v2794 = vunpack.c.l.s4 1966171168
        %v2795 = vunpack.c.0.s8 %v2794
        %v2796 = vlaneseq
        %v2797 = vshrl.u32 %v2796, 7
        %v2798 = vsub.s32 %v2795, %v2797
        %v2799 = vrot.slane %v2785, %v2798
        %v2800 = vcombine.low %v2792, %v2799
        %v2802 = vunpack.c.l.s4 1966171168
        %v2803 = vunpack.c.0.s8 %v2802
        %v2804 = vlaneseq
        %v2805 = vshrl.u32 %v2804, 7
        %v2806 = vsub.s32 %v2803, %v2805
        %v2807 = vrot.slane %v2751, %v2806
        %v2809 = vunpack.c.l.s4 1966171168
        %v2810 = vunpack.c.0.s8 %v2809
        %v2811 = vlaneseq
        %v2812 = vshrl.u32 %v2811, 7
        %v2813 = vsub.s32 %v2810, %v2812
        %v2814 = vrot.slane %v2807, %v2813
        %v2817 = vpack.c.bf16 %v2814, %v2800
        %s2818 = scalar_lea.vmem %s3, 512
        %v2819 = vld [vmem:[%s2818] sm:$0xf]
        %v2820 = vld [vmem:[%s2818 + $0x4] sm:$0xf]
        %v2821 = vld [vmem:[%s2818 + $0x8] sm:$0xf]
        %v2822 = vld [vmem:[%s2818 + $0xc] sm:$0xf]
        %v2823 = vld [vmem:[%s2818 + $0x10] sm:$0xf]
        %v2824 = vld [vmem:[%s2818 + $0x14] sm:$0xf]
        %v2825 = vld [vmem:[%s2818 + $0x18] sm:$0xf]
        %v2826 = vld [vmem:[%s2818 + $0x1c] sm:$0xf]
        %v2827 = vld [vmem:[%s2818 + $0x20] sm:$0xf]
        %v2828 = vld [vmem:[%s2818 + $0x24] sm:$0xf]
        %v2829 = vld [vmem:[%s2818 + $0x28] sm:$0xf]
        %v2830 = vld [vmem:[%s2818 + $0x2c] sm:$0xf]
        %v2831 = vld [vmem:[%s2818 + $0x30] sm:$0xf]
        %v2832 = vld [vmem:[%s2818 + $0x34] sm:$0xf]
        %v2833 = vld [vmem:[%s2818 + $0x38] sm:$0xf]
        %v2834 = vld [vmem:[%s2818 + $0x3c] sm:$0xf]
        %v2851 = vunpack.c.l.b16 %v2819
        %v2852 = vunpack.c.l.b16 %v2820
        %v2853 = vunpack.c.l.b16 %v2821
        %v2854 = vunpack.c.l.b16 %v2822
        %v2855 = vunpack.c.l.b16 %v2823
        %v2856 = vunpack.c.l.b16 %v2824
        %v2857 = vunpack.c.l.b16 %v2825
        %v2858 = vunpack.c.l.b16 %v2826
        %v2859 = vunpack.c.l.b16 %v2827
        %v2860 = vunpack.c.l.b16 %v2828
        %v2861 = vunpack.c.l.b16 %v2829
        %v2862 = vunpack.c.l.b16 %v2830
        %v2863 = vunpack.c.l.b16 %v2831
        %v2864 = vunpack.c.l.b16 %v2832
        %v2865 = vunpack.c.l.b16 %v2833
        %v2866 = vunpack.c.l.b16 %v2834
        %v2867 = vpack.c.b16 %v2852, %v2851
        %v2868 = vpack.c.b16 %v2854, %v2853
        %v2869 = vpack.c.b16 %v2856, %v2855
        %v2870 = vpack.c.b16 %v2858, %v2857
        %v2871 = vpack.c.b16 %v2860, %v2859
        %v2872 = vpack.c.b16 %v2862, %v2861
        %v2873 = vpack.c.b16 %v2864, %v2863
        %v2874 = vpack.c.b16 %v2866, %v2865
        %2883 = vmatprep.subr.bf16.mxu0 0
        %2884 = vmatpush1.bf16.msra.mxu0 %v2874
        %2885 = vmatprep.subr.bf16.mxu0 0
        %2886 = vmatpush1.bf16.msra.mxu0 %v2873
        %2887 = vmatprep.subr.bf16.mxu0 0
        %2888 = vmatpush1.bf16.msra.mxu0 %v2872
        %2889 = vmatprep.subr.bf16.mxu0 0
        %2890 = vmatpush1.bf16.msra.mxu0 %v2871
        %2891 = vmatprep.subr.bf16.mxu0 0
        %2892 = vmatpush1.bf16.msra.mxu0 %v2870
        %2893 = vmatprep.subr.bf16.mxu0 0
        %2894 = vmatpush1.bf16.msra.mxu0 %v2869
        %2895 = vmatprep.subr.bf16.mxu0 0
        %2896 = vmatpush1.bf16.msra.mxu0 %v2868
        %2897 = vmatprep.subr.bf16.mxu0 0
        %2898 = vmatpush1.bf16.msra.mxu0 %v2867
        %2899 = vmatprep.subr.bf16.mxu0 0
        %2900 = vmatpush2.bf16.msra.mxu0 0
        %2901 = vmatprep.subr.bf16.mxu0 0
        %2902 = vmatpush2.bf16.msra.mxu0 0
        %2903 = vmatprep.subr.bf16.mxu0 0
        %2904 = vmatpush2.bf16.msra.mxu0 0
        %2905 = vmatprep.subr.bf16.mxu0 0
        %2906 = vmatpush2.bf16.msra.mxu0 0
        %2907 = vmatprep.subr.bf16.mxu0 0
        %2908 = vmatpush2.bf16.msra.mxu0 0
        %2909 = vmatprep.subr.bf16.mxu0 0
        %2910 = vmatpush2.bf16.msra.mxu0 0
        %2911 = vmatprep.subr.bf16.mxu0 0
        %2912 = vmatpush2.bf16.msra.mxu0 0
        %2913 = vmatprep.subr.bf16.mxu0 0
        %2914 = vmatpush2.bf16.msra.mxu0 0
        %2915 = vmatprep.mubr.bf16.mxu0 0
        %2916 = vmatmul.mubr.bf16.gmra.mxu0 %v2817
        %v2917 = vpop.f32.mrf.mxu0
        %v2918 = vadd.f32 0.0, %v2917
        %v2919 = vpop.f32.mrf.mxu0
        %v2920 = vpop.f32.mrf.mxu0
        %v2921 = vadd.f32 0.0, %v2920
        %v2922 = vpop.f32.mrf.mxu0
        %2923 = vdwg.mxu0
        %v2924 = vadd.f32 %v2672, %v2918
        %v2925 = vadd.f32 %v2673, %v2921
        %s2926 = scalar_lea.vmem %s2674, 1 [#allocation2]
        %v2927 = vld [vmem:[%s2926] ss:$2 sm:$0x7]
        %s2928 = scalar_lea.vmem %s2674, 17 [#allocation2]
        %v2929 = vld [vmem:[%s2928] ss:$2 sm:$0x7]
        %s2930 = scalar_lea.vmem %s2674, 33 [#allocation2]
        %v2931 = vld [vmem:[%s2930] ss:$2 sm:$0x7]
        %v2936 = vunpack.c.l.s4 1966171168
        %v2937 = vunpack.c.0.s8 %v2936
        %v2938 = vlaneseq
        %v2939 = vshrl.u32 %v2938, 7
        %v2940 = vsub.s32 %v2937, %v2939
        %v2941 = vrot.slane %v2927, %v2940
        %v2942 = vcombine.high %v2941, %v2941
        %v2944 = vunpack.c.l.s4 1966171168
        %v2945 = vunpack.c.0.s8 %v2944
        %v2946 = vlaneseq
        %v2947 = vshrl.u32 %v2946, 7
        %v2948 = vsub.s32 %v2945, %v2947
        %v2949 = vrot.slane %v2941, %v2948
        %v2951 = vunpack.c.l.s4 1966171168
        %v2952 = vunpack.c.0.s8 %v2951
        %v2953 = vlaneseq
        %v2954 = vshrl.u32 %v2953, 7
        %v2955 = vsub.s32 %v2952, %v2954
        %v2956 = vrot.slane %v2942, %v2955
        %v2957 = vcombine.high %v2949, %v2949
        %v2959 = vunpack.c.l.s4 1966171168
        %v2960 = vunpack.c.0.s8 %v2959
        %v2961 = vlaneseq
        %v2962 = vshrl.u32 %v2961, 7
        %v2963 = vsub.s32 %v2960, %v2962
        %v2964 = vrot.slane %v2929, %v2963
        %v2965 = vcombine.high %v2964, %v2964
        %v2967 = vunpack.c.l.s4 1966171168
        %v2968 = vunpack.c.0.s8 %v2967
        %v2969 = vlaneseq
        %v2970 = vshrl.u32 %v2969, 7
        %v2971 = vsub.s32 %v2968, %v2970
        %v2972 = vrot.slane %v2964, %v2971
        %v2974 = vunpack.c.l.s4 1966171168
        %v2975 = vunpack.c.0.s8 %v2974
        %v2976 = vlaneseq
        %v2977 = vshrl.u32 %v2976, 7
        %v2978 = vsub.s32 %v2975, %v2977
        %v2979 = vrot.slane %v2965, %v2978
        %v2980 = vcombine.high %v2972, %v2972
        %v2982 = vunpack.c.l.s4 1966171168
        %v2983 = vunpack.c.0.s8 %v2982
        %v2984 = vlaneseq
        %v2985 = vshrl.u32 %v2984, 7
        %v2986 = vsub.s32 %v2983, %v2985
        %v2987 = vrot.slane %v2931, %v2986
        %v2988 = vcombine.high %v2987, %v2987
        %v2990 = vunpack.c.l.s4 1966171168
        %v2991 = vunpack.c.0.s8 %v2990
        %v2992 = vlaneseq
        %v2993 = vshrl.u32 %v2992, 7
        %v2994 = vsub.s32 %v2991, %v2993
        %v2995 = vrot.slane %v2987, %v2994
        %v2997 = vunpack.c.l.s4 1966171168
        %v2998 = vunpack.c.0.s8 %v2997
        %v2999 = vlaneseq
        %v3000 = vshrl.u32 %v2999, 7
        %v3001 = vsub.s32 %v2998, %v3000
        %v3002 = vrot.slane %v2988, %v3001
        %v3003 = vcombine.high %v2995, %v2995
        %v3004 = vcombine.low %v2949, %v2956
        %v3005 = vcombine.low %v2957, %v2972
        %v3006 = vcombine.low %v2979, %v2980
        %v3007 = vcombine.low %v2995, %v3002
        %v3009 = vunpack.c.l.s4 1966171168
        %v3010 = vunpack.c.0.s8 %v3009
        %v3011 = vlaneseq
        %v3012 = vshrl.u32 %v3011, 7
        %v3013 = vsub.s32 %v3010, %v3012
        %v3014 = vrot.slane %v3004, %v3013
        %v3016 = vunpack.c.l.s4 1966171168
        %v3017 = vunpack.c.0.s8 %v3016
        %v3018 = vlaneseq
        %v3019 = vshrl.u32 %v3018, 7
        %v3020 = vsub.s32 %v3017, %v3019
        %v3021 = vrot.slane %v3005, %v3020
        %v3023 = vunpack.c.l.s4 1966171168
        %v3024 = vunpack.c.0.s8 %v3023
        %v3025 = vlaneseq
        %v3026 = vshrl.u32 %v3025, 7
        %v3027 = vsub.s32 %v3024, %v3026
        %v3028 = vrot.slane %v3006, %v3027
        %v3030 = vunpack.c.l.s4 1966171168
        %v3031 = vunpack.c.0.s8 %v3030
        %v3032 = vlaneseq
        %v3033 = vshrl.u32 %v3032, 7
        %v3034 = vsub.s32 %v3031, %v3033
        %v3035 = vrot.slane %v3007, %v3034
        %v3036 = vcombine.low %v3014, %v3021
        %v3037 = vcombine.low %v3028, %v3035
        %v3039 = vunpack.c.l.s4 1966171168
        %v3040 = vunpack.c.0.s8 %v3039
        %v3041 = vlaneseq
        %v3042 = vshrl.u32 %v3041, 7
        %v3043 = vsub.s32 %v3040, %v3042
        %v3044 = vrot.slane %v3036, %v3043
        %v3046 = vunpack.c.l.s4 1966171168
        %v3047 = vunpack.c.0.s8 %v3046
        %v3048 = vlaneseq
        %v3049 = vshrl.u32 %v3048, 7
        %v3050 = vsub.s32 %v3047, %v3049
        %v3051 = vrot.slane %v3037, %v3050
        %v3052 = vcombine.low %v3044, %v3051
        %v3054 = vunpack.c.l.s4 1966171168
        %v3055 = vunpack.c.0.s8 %v3054
        %v3056 = vlaneseq
        %v3057 = vshrl.u32 %v3056, 7
        %v3058 = vsub.s32 %v3055, %v3057
        %v3059 = vrot.slane %v3003, %v3058
        %v3061 = vunpack.c.l.s4 1966171168
        %v3062 = vunpack.c.0.s8 %v3061
        %v3063 = vlaneseq
        %v3064 = vshrl.u32 %v3063, 7
        %v3065 = vsub.s32 %v3062, %v3064
        %v3066 = vrot.slane %v3059, %v3065
        %v3069 = vpack.c.bf16 %v3066, %v3052
        %s3070 = scalar_lea.vmem %s3, 576
        %v3071 = vld [vmem:[%s3070] sm:$0xf]
        %v3072 = vld [vmem:[%s3070 + $0x4] sm:$0xf]
        %v3073 = vld [vmem:[%s3070 + $0x8] sm:$0xf]
        %v3074 = vld [vmem:[%s3070 + $0xc] sm:$0xf]
        %v3075 = vld [vmem:[%s3070 + $0x10] sm:$0xf]
        %v3076 = vld [vmem:[%s3070 + $0x14] sm:$0xf]
        %v3077 = vld [vmem:[%s3070 + $0x18] sm:$0xf]
        %v3078 = vld [vmem:[%s3070 + $0x1c] sm:$0xf]
        %v3079 = vld [vmem:[%s3070 + $0x20] sm:$0xf]
        %v3080 = vld [vmem:[%s3070 + $0x24] sm:$0xf]
        %v3081 = vld [vmem:[%s3070 + $0x28] sm:$0xf]
        %v3082 = vld [vmem:[%s3070 + $0x2c] sm:$0xf]
        %v3083 = vld [vmem:[%s3070 + $0x30] sm:$0xf]
        %v3084 = vld [vmem:[%s3070 + $0x34] sm:$0xf]
        %v3085 = vld [vmem:[%s3070 + $0x38] sm:$0xf]
        %v3086 = vld [vmem:[%s3070 + $0x3c] sm:$0xf]
        %v3103 = vunpack.c.l.b16 %v3071
        %v3104 = vunpack.c.l.b16 %v3072
        %v3105 = vunpack.c.l.b16 %v3073
        %v3106 = vunpack.c.l.b16 %v3074
        %v3107 = vunpack.c.l.b16 %v3075
        %v3108 = vunpack.c.l.b16 %v3076
        %v3109 = vunpack.c.l.b16 %v3077
        %v3110 = vunpack.c.l.b16 %v3078
        %v3111 = vunpack.c.l.b16 %v3079
        %v3112 = vunpack.c.l.b16 %v3080
        %v3113 = vunpack.c.l.b16 %v3081
        %v3114 = vunpack.c.l.b16 %v3082
        %v3115 = vunpack.c.l.b16 %v3083
        %v3116 = vunpack.c.l.b16 %v3084
        %v3117 = vunpack.c.l.b16 %v3085
        %v3118 = vunpack.c.l.b16 %v3086
        %v3119 = vpack.c.b16 %v3104, %v3103
        %v3120 = vpack.c.b16 %v3106, %v3105
        %v3121 = vpack.c.b16 %v3108, %v3107
        %v3122 = vpack.c.b16 %v3110, %v3109
        %v3123 = vpack.c.b16 %v3112, %v3111
        %v3124 = vpack.c.b16 %v3114, %v3113
        %v3125 = vpack.c.b16 %v3116, %v3115
        %v3126 = vpack.c.b16 %v3118, %v3117
        %3135 = vmatprep.subr.bf16.mxu0 0
        %3136 = vmatpush1.bf16.msra.mxu0 %v3126
        %3137 = vmatprep.subr.bf16.mxu0 0
        %3138 = vmatpush1.bf16.msra.mxu0 %v3125
        %3139 = vmatprep.subr.bf16.mxu0 0
        %3140 = vmatpush1.bf16.msra.mxu0 %v3124
        %3141 = vmatprep.subr.bf16.mxu0 0
        %3142 = vmatpush1.bf16.msra.mxu0 %v3123
        %3143 = vmatprep.subr.bf16.mxu0 0
        %3144 = vmatpush1.bf16.msra.mxu0 %v3122
        %3145 = vmatprep.subr.bf16.mxu0 0
        %3146 = vmatpush1.bf16.msra.mxu0 %v3121
        %3147 = vmatprep.subr.bf16.mxu0 0
        %3148 = vmatpush1.bf16.msra.mxu0 %v3120
        %3149 = vmatprep.subr.bf16.mxu0 0
        %3150 = vmatpush1.bf16.msra.mxu0 %v3119
        %3151 = vmatprep.subr.bf16.mxu0 0
        %3152 = vmatpush2.bf16.msra.mxu0 0
        %3153 = vmatprep.subr.bf16.mxu0 0
        %3154 = vmatpush2.bf16.msra.mxu0 0
        %3155 = vmatprep.subr.bf16.mxu0 0
        %3156 = vmatpush2.bf16.msra.mxu0 0
        %3157 = vmatprep.subr.bf16.mxu0 0
        %3158 = vmatpush2.bf16.msra.mxu0 0
        %3159 = vmatprep.subr.bf16.mxu0 0
        %3160 = vmatpush2.bf16.msra.mxu0 0
        %3161 = vmatprep.subr.bf16.mxu0 0
        %3162 = vmatpush2.bf16.msra.mxu0 0
        %3163 = vmatprep.subr.bf16.mxu0 0
        %3164 = vmatpush2.bf16.msra.mxu0 0
        %3165 = vmatprep.subr.bf16.mxu0 0
        %3166 = vmatpush2.bf16.msra.mxu0 0
        %3167 = vmatprep.mubr.bf16.mxu0 0
        %3168 = vmatmul.mubr.bf16.gmra.mxu0 %v3069
        %v3169 = vpop.f32.mrf.mxu0
        %v3170 = vadd.f32 0.0, %v3169
        %v3171 = vpop.f32.mrf.mxu0
        %v3172 = vpop.f32.mrf.mxu0
        %v3173 = vadd.f32 0.0, %v3172
        %v3174 = vpop.f32.mrf.mxu0
        %3175 = vdwg.mxu0
        %v3176 = vadd.f32 %v2924, %v3170
        %v3177 = vadd.f32 %v2925, %v3173
        %s3178 = scalar_lea.vmem %s2674, 2 [#allocation2]
        %v3179 = vld [vmem:[%s3178] ss:$2 sm:$0x7]
        %s3180 = scalar_lea.vmem %s2674, 18 [#allocation2]
        %v3181 = vld [vmem:[%s3180] ss:$2 sm:$0x7]
        %s3182 = scalar_lea.vmem %s2674, 34 [#allocation2]
        %v3183 = vld [vmem:[%s3182] ss:$2 sm:$0x7]
        %v3188 = vunpack.c.l.s4 1966171168
        %v3189 = vunpack.c.0.s8 %v3188
        %v3190 = vlaneseq
        %v3191 = vshrl.u32 %v3190, 7
        %v3192 = vsub.s32 %v3189, %v3191
        %v3193 = vrot.slane %v3179, %v3192
        %v3194 = vcombine.high %v3193, %v3193
        %v3196 = vunpack.c.l.s4 1966171168
        %v3197 = vunpack.c.0.s8 %v3196
        %v3198 = vlaneseq
        %v3199 = vshrl.u32 %v3198, 7
        %v3200 = vsub.s32 %v3197, %v3199
        %v3201 = vrot.slane %v3193, %v3200
        %v3203 = vunpack.c.l.s4 1966171168
        %v3204 = vunpack.c.0.s8 %v3203
        %v3205 = vlaneseq
        %v3206 = vshrl.u32 %v3205, 7
        %v3207 = vsub.s32 %v3204, %v3206
        %v3208 = vrot.slane %v3194, %v3207
        %v3209 = vcombine.high %v3201, %v3201
        %v3211 = vunpack.c.l.s4 1966171168
        %v3212 = vunpack.c.0.s8 %v3211
        %v3213 = vlaneseq
        %v3214 = vshrl.u32 %v3213, 7
        %v3215 = vsub.s32 %v3212, %v3214
        %v3216 = vrot.slane %v3181, %v3215
        %v3217 = vcombine.high %v3216, %v3216
        %v3219 = vunpack.c.l.s4 1966171168
        %v3220 = vunpack.c.0.s8 %v3219
        %v3221 = vlaneseq
        %v3222 = vshrl.u32 %v3221, 7
        %v3223 = vsub.s32 %v3220, %v3222
        %v3224 = vrot.slane %v3216, %v3223
        %v3226 = vunpack.c.l.s4 1966171168
        %v3227 = vunpack.c.0.s8 %v3226
        %v3228 = vlaneseq
        %v3229 = vshrl.u32 %v3228, 7
        %v3230 = vsub.s32 %v3227, %v3229
        %v3231 = vrot.slane %v3217, %v3230
        %v3232 = vcombine.high %v3224, %v3224
        %v3234 = vunpack.c.l.s4 1966171168
        %v3235 = vunpack.c.0.s8 %v3234
        %v3236 = vlaneseq
        %v3237 = vshrl.u32 %v3236, 7
        %v3238 = vsub.s32 %v3235, %v3237
        %v3239 = vrot.slane %v3183, %v3238
        %v3240 = vcombine.high %v3239, %v3239
        %v3242 = vunpack.c.l.s4 1966171168
        %v3243 = vunpack.c.0.s8 %v3242
        %v3244 = vlaneseq
        %v3245 = vshrl.u32 %v3244, 7
        %v3246 = vsub.s32 %v3243, %v3245
        %v3247 = vrot.slane %v3239, %v3246
        %v3249 = vunpack.c.l.s4 1966171168
        %v3250 = vunpack.c.0.s8 %v3249
        %v3251 = vlaneseq
        %v3252 = vshrl.u32 %v3251, 7
        %v3253 = vsub.s32 %v3250, %v3252
        %v3254 = vrot.slane %v3240, %v3253
        %v3255 = vcombine.high %v3247, %v3247
        %v3256 = vcombine.low %v3201, %v3208
        %v3257 = vcombine.low %v3209, %v3224
        %v3258 = vcombine.low %v3231, %v3232
        %v3259 = vcombine.low %v3247, %v3254
        %v3261 = vunpack.c.l.s4 1966171168
        %v3262 = vunpack.c.0.s8 %v3261
        %v3263 = vlaneseq
        %v3264 = vshrl.u32 %v3263, 7
        %v3265 = vsub.s32 %v3262, %v3264
        %v3266 = vrot.slane %v3256, %v3265
        %v3268 = vunpack.c.l.s4 1966171168
        %v3269 = vunpack.c.0.s8 %v3268
        %v3270 = vlaneseq
        %v3271 = vshrl.u32 %v3270, 7
        %v3272 = vsub.s32 %v3269, %v3271
        %v3273 = vrot.slane %v3257, %v3272
        %v3275 = vunpack.c.l.s4 1966171168
        %v3276 = vunpack.c.0.s8 %v3275
        %v3277 = vlaneseq
        %v3278 = vshrl.u32 %v3277, 7
        %v3279 = vsub.s32 %v3276, %v3278
        %v3280 = vrot.slane %v3258, %v3279
        %v3282 = vunpack.c.l.s4 1966171168
        %v3283 = vunpack.c.0.s8 %v3282
        %v3284 = vlaneseq
        %v3285 = vshrl.u32 %v3284, 7
        %v3286 = vsub.s32 %v3283, %v3285
        %v3287 = vrot.slane %v3259, %v3286
        %v3288 = vcombine.low %v3266, %v3273
        %v3289 = vcombine.low %v3280, %v3287
        %v3291 = vunpack.c.l.s4 1966171168
        %v3292 = vunpack.c.0.s8 %v3291
        %v3293 = vlaneseq
        %v3294 = vshrl.u32 %v3293, 7
        %v3295 = vsub.s32 %v3292, %v3294
        %v3296 = vrot.slane %v3288, %v3295
        %v3298 = vunpack.c.l.s4 1966171168
        %v3299 = vunpack.c.0.s8 %v3298
        %v3300 = vlaneseq
        %v3301 = vshrl.u32 %v3300, 7
        %v3302 = vsub.s32 %v3299, %v3301
        %v3303 = vrot.slane %v3289, %v3302
        %v3304 = vcombine.low %v3296, %v3303
        %v3306 = vunpack.c.l.s4 1966171168
        %v3307 = vunpack.c.0.s8 %v3306
        %v3308 = vlaneseq
        %v3309 = vshrl.u32 %v3308, 7
        %v3310 = vsub.s32 %v3307, %v3309
        %v3311 = vrot.slane %v3255, %v3310
        %v3313 = vunpack.c.l.s4 1966171168
        %v3314 = vunpack.c.0.s8 %v3313
        %v3315 = vlaneseq
        %v3316 = vshrl.u32 %v3315, 7
        %v3317 = vsub.s32 %v3314, %v3316
        %v3318 = vrot.slane %v3311, %v3317
        %v3321 = vpack.c.bf16 %v3318, %v3304
        %s3322 = scalar_lea.vmem %s3, 640
        %v3323 = vld [vmem:[%s3322] sm:$0xf]
        %v3324 = vld [vmem:[%s3322 + $0x4] sm:$0xf]
        %v3325 = vld [vmem:[%s3322 + $0x8] sm:$0xf]
        %v3326 = vld [vmem:[%s3322 + $0xc] sm:$0xf]
        %v3327 = vld [vmem:[%s3322 + $0x10] sm:$0xf]
        %v3328 = vld [vmem:[%s3322 + $0x14] sm:$0xf]
        %v3329 = vld [vmem:[%s3322 + $0x18] sm:$0xf]
        %v3330 = vld [vmem:[%s3322 + $0x1c] sm:$0xf]
        %v3331 = vld [vmem:[%s3322 + $0x20] sm:$0xf]
        %v3332 = vld [vmem:[%s3322 + $0x24] sm:$0xf]
        %v3333 = vld [vmem:[%s3322 + $0x28] sm:$0xf]
        %v3334 = vld [vmem:[%s3322 + $0x2c] sm:$0xf]
        %v3335 = vld [vmem:[%s3322 + $0x30] sm:$0xf]
        %v3336 = vld [vmem:[%s3322 + $0x34] sm:$0xf]
        %v3337 = vld [vmem:[%s3322 + $0x38] sm:$0xf]
        %v3338 = vld [vmem:[%s3322 + $0x3c] sm:$0xf]
        %v3355 = vunpack.c.l.b16 %v3323
        %v3356 = vunpack.c.l.b16 %v3324
        %v3357 = vunpack.c.l.b16 %v3325
        %v3358 = vunpack.c.l.b16 %v3326
        %v3359 = vunpack.c.l.b16 %v3327
        %v3360 = vunpack.c.l.b16 %v3328
        %v3361 = vunpack.c.l.b16 %v3329
        %v3362 = vunpack.c.l.b16 %v3330
        %v3363 = vunpack.c.l.b16 %v3331
        %v3364 = vunpack.c.l.b16 %v3332
        %v3365 = vunpack.c.l.b16 %v3333
        %v3366 = vunpack.c.l.b16 %v3334
        %v3367 = vunpack.c.l.b16 %v3335
        %v3368 = vunpack.c.l.b16 %v3336
        %v3369 = vunpack.c.l.b16 %v3337
        %v3370 = vunpack.c.l.b16 %v3338
        %v3371 = vpack.c.b16 %v3356, %v3355
        %v3372 = vpack.c.b16 %v3358, %v3357
        %v3373 = vpack.c.b16 %v3360, %v3359
        %v3374 = vpack.c.b16 %v3362, %v3361
        %v3375 = vpack.c.b16 %v3364, %v3363
        %v3376 = vpack.c.b16 %v3366, %v3365
        %v3377 = vpack.c.b16 %v3368, %v3367
        %v3378 = vpack.c.b16 %v3370, %v3369
        %3387 = vmatprep.subr.bf16.mxu0 0
        %3388 = vmatpush1.bf16.msra.mxu0 %v3378
        %3389 = vmatprep.subr.bf16.mxu0 0
        %3390 = vmatpush1.bf16.msra.mxu0 %v3377
        %3391 = vmatprep.subr.bf16.mxu0 0
        %3392 = vmatpush1.bf16.msra.mxu0 %v3376
        %3393 = vmatprep.subr.bf16.mxu0 0
        %3394 = vmatpush1.bf16.msra.mxu0 %v3375
        %3395 = vmatprep.subr.bf16.mxu0 0
        %3396 = vmatpush1.bf16.msra.mxu0 %v3374
        %3397 = vmatprep.subr.bf16.mxu0 0
        %3398 = vmatpush1.bf16.msra.mxu0 %v3373
        %3399 = vmatprep.subr.bf16.mxu0 0
        %3400 = vmatpush1.bf16.msra.mxu0 %v3372
        %3401 = vmatprep.subr.bf16.mxu0 0
        %3402 = vmatpush1.bf16.msra.mxu0 %v3371
        %3403 = vmatprep.subr.bf16.mxu0 0
        %3404 = vmatpush2.bf16.msra.mxu0 0
        %3405 = vmatprep.subr.bf16.mxu0 0
        %3406 = vmatpush2.bf16.msra.mxu0 0
        %3407 = vmatprep.subr.bf16.mxu0 0
        %3408 = vmatpush2.bf16.msra.mxu0 0
        %3409 = vmatprep.subr.bf16.mxu0 0
        %3410 = vmatpush2.bf16.msra.mxu0 0
        %3411 = vmatprep.subr.bf16.mxu0 0
        %3412 = vmatpush2.bf16.msra.mxu0 0
        %3413 = vmatprep.subr.bf16.mxu0 0
        %3414 = vmatpush2.bf16.msra.mxu0 0
        %3415 = vmatprep.subr.bf16.mxu0 0
        %3416 = vmatpush2.bf16.msra.mxu0 0
        %3417 = vmatprep.subr.bf16.mxu0 0
        %3418 = vmatpush2.bf16.msra.mxu0 0
        %3419 = vmatprep.mubr.bf16.mxu0 0
        %3420 = vmatmul.mubr.bf16.gmra.mxu0 %v3321
        %v3421 = vpop.f32.mrf.mxu0
        %v3422 = vadd.f32 0.0, %v3421
        %v3423 = vpop.f32.mrf.mxu0
        %v3424 = vpop.f32.mrf.mxu0
        %v3425 = vadd.f32 0.0, %v3424
        %v3426 = vpop.f32.mrf.mxu0
        %3427 = vdwg.mxu0
        %v3428 = vadd.f32 %v3176, %v3422
        %v3429 = vadd.f32 %v3177, %v3425
        %s3430 = scalar_lea.vmem %s2674, 3 [#allocation2]
        %v3431 = vld [vmem:[%s3430] ss:$2 sm:$0x7]
        %s3432 = scalar_lea.vmem %s2674, 19 [#allocation2]
        %v3433 = vld [vmem:[%s3432] ss:$2 sm:$0x7]
        %s3434 = scalar_lea.vmem %s2674, 35 [#allocation2]
        %v3435 = vld [vmem:[%s3434] ss:$2 sm:$0x7]
        %v3440 = vunpack.c.l.s4 1966171168
        %v3441 = vunpack.c.0.s8 %v3440
        %v3442 = vlaneseq
        %v3443 = vshrl.u32 %v3442, 7
        %v3444 = vsub.s32 %v3441, %v3443
        %v3445 = vrot.slane %v3431, %v3444
        %v3446 = vcombine.high %v3445, %v3445
        %v3448 = vunpack.c.l.s4 1966171168
        %v3449 = vunpack.c.0.s8 %v3448
        %v3450 = vlaneseq
        %v3451 = vshrl.u32 %v3450, 7
        %v3452 = vsub.s32 %v3449, %v3451
        %v3453 = vrot.slane %v3445, %v3452
        %v3455 = vunpack.c.l.s4 1966171168
        %v3456 = vunpack.c.0.s8 %v3455
        %v3457 = vlaneseq
        %v3458 = vshrl.u32 %v3457, 7
        %v3459 = vsub.s32 %v3456, %v3458
        %v3460 = vrot.slane %v3446, %v3459
        %v3461 = vcombine.high %v3453, %v3453
        %v3463 = vunpack.c.l.s4 1966171168
        %v3464 = vunpack.c.0.s8 %v3463
        %v3465 = vlaneseq
        %v3466 = vshrl.u32 %v3465, 7
        %v3467 = vsub.s32 %v3464, %v3466
        %v3468 = vrot.slane %v3433, %v3467
        %v3469 = vcombine.high %v3468, %v3468
        %v3471 = vunpack.c.l.s4 1966171168
        %v3472 = vunpack.c.0.s8 %v3471
        %v3473 = vlaneseq
        %v3474 = vshrl.u32 %v3473, 7
        %v3475 = vsub.s32 %v3472, %v3474
        %v3476 = vrot.slane %v3468, %v3475
        %v3478 = vunpack.c.l.s4 1966171168
        %v3479 = vunpack.c.0.s8 %v3478
        %v3480 = vlaneseq
        %v3481 = vshrl.u32 %v3480, 7
        %v3482 = vsub.s32 %v3479, %v3481
        %v3483 = vrot.slane %v3469, %v3482
        %v3484 = vcombine.high %v3476, %v3476
        %v3486 = vunpack.c.l.s4 1966171168
        %v3487 = vunpack.c.0.s8 %v3486
        %v3488 = vlaneseq
        %v3489 = vshrl.u32 %v3488, 7
        %v3490 = vsub.s32 %v3487, %v3489
        %v3491 = vrot.slane %v3435, %v3490
        %v3492 = vcombine.high %v3491, %v3491
        %v3494 = vunpack.c.l.s4 1966171168
        %v3495 = vunpack.c.0.s8 %v3494
        %v3496 = vlaneseq
        %v3497 = vshrl.u32 %v3496, 7
        %v3498 = vsub.s32 %v3495, %v3497
        %v3499 = vrot.slane %v3491, %v3498
        %v3501 = vunpack.c.l.s4 1966171168
        %v3502 = vunpack.c.0.s8 %v3501
        %v3503 = vlaneseq
        %v3504 = vshrl.u32 %v3503, 7
        %v3505 = vsub.s32 %v3502, %v3504
        %v3506 = vrot.slane %v3492, %v3505
        %v3507 = vcombine.high %v3499, %v3499
        %v3508 = vcombine.low %v3453, %v3460
        %v3509 = vcombine.low %v3461, %v3476
        %v3510 = vcombine.low %v3483, %v3484
        %v3511 = vcombine.low %v3499, %v3506
        %v3513 = vunpack.c.l.s4 1966171168
        %v3514 = vunpack.c.0.s8 %v3513
        %v3515 = vlaneseq
        %v3516 = vshrl.u32 %v3515, 7
        %v3517 = vsub.s32 %v3514, %v3516
        %v3518 = vrot.slane %v3508, %v3517
        %v3520 = vunpack.c.l.s4 1966171168
        %v3521 = vunpack.c.0.s8 %v3520
        %v3522 = vlaneseq
        %v3523 = vshrl.u32 %v3522, 7
        %v3524 = vsub.s32 %v3521, %v3523
        %v3525 = vrot.slane %v3509, %v3524
        %v3527 = vunpack.c.l.s4 1966171168
        %v3528 = vunpack.c.0.s8 %v3527
        %v3529 = vlaneseq
        %v3530 = vshrl.u32 %v3529, 7
        %v3531 = vsub.s32 %v3528, %v3530
        %v3532 = vrot.slane %v3510, %v3531
        %v3534 = vunpack.c.l.s4 1966171168
        %v3535 = vunpack.c.0.s8 %v3534
        %v3536 = vlaneseq
        %v3537 = vshrl.u32 %v3536, 7
        %v3538 = vsub.s32 %v3535, %v3537
        %v3539 = vrot.slane %v3511, %v3538
        %v3540 = vcombine.low %v3518, %v3525
        %v3541 = vcombine.low %v3532, %v3539
        %v3543 = vunpack.c.l.s4 1966171168
        %v3544 = vunpack.c.0.s8 %v3543
        %v3545 = vlaneseq
        %v3546 = vshrl.u32 %v3545, 7
        %v3547 = vsub.s32 %v3544, %v3546
        %v3548 = vrot.slane %v3540, %v3547
        %v3550 = vunpack.c.l.s4 1966171168
        %v3551 = vunpack.c.0.s8 %v3550
        %v3552 = vlaneseq
        %v3553 = vshrl.u32 %v3552, 7
        %v3554 = vsub.s32 %v3551, %v3553
        %v3555 = vrot.slane %v3541, %v3554
        %v3556 = vcombine.low %v3548, %v3555
        %v3558 = vunpack.c.l.s4 1966171168
        %v3559 = vunpack.c.0.s8 %v3558
        %v3560 = vlaneseq
        %v3561 = vshrl.u32 %v3560, 7
        %v3562 = vsub.s32 %v3559, %v3561
        %v3563 = vrot.slane %v3507, %v3562
        %v3565 = vunpack.c.l.s4 1966171168
        %v3566 = vunpack.c.0.s8 %v3565
        %v3567 = vlaneseq
        %v3568 = vshrl.u32 %v3567, 7
        %v3569 = vsub.s32 %v3566, %v3568
        %v3570 = vrot.slane %v3563, %v3569
        %v3573 = vpack.c.bf16 %v3570, %v3556
        %s3574 = scalar_lea.vmem %s3, 704
        %v3575 = vld [vmem:[%s3574] sm:$0xf]
        %v3576 = vld [vmem:[%s3574 + $0x4] sm:$0xf]
        %v3577 = vld [vmem:[%s3574 + $0x8] sm:$0xf]
        %v3578 = vld [vmem:[%s3574 + $0xc] sm:$0xf]
        %v3579 = vld [vmem:[%s3574 + $0x10] sm:$0xf]
        %v3580 = vld [vmem:[%s3574 + $0x14] sm:$0xf]
        %v3581 = vld [vmem:[%s3574 + $0x18] sm:$0xf]
        %v3582 = vld [vmem:[%s3574 + $0x1c] sm:$0xf]
        %v3583 = vld [vmem:[%s3574 + $0x20] sm:$0xf]
        %v3584 = vld [vmem:[%s3574 + $0x24] sm:$0xf]
        %v3585 = vld [vmem:[%s3574 + $0x28] sm:$0xf]
        %v3586 = vld [vmem:[%s3574 + $0x2c] sm:$0xf]
        %v3587 = vld [vmem:[%s3574 + $0x30] sm:$0xf]
        %v3588 = vld [vmem:[%s3574 + $0x34] sm:$0xf]
        %v3589 = vld [vmem:[%s3574 + $0x38] sm:$0xf]
        %v3590 = vld [vmem:[%s3574 + $0x3c] sm:$0xf]
        %v3607 = vunpack.c.l.b16 %v3575
        %v3608 = vunpack.c.l.b16 %v3576
        %v3609 = vunpack.c.l.b16 %v3577
        %v3610 = vunpack.c.l.b16 %v3578
        %v3611 = vunpack.c.l.b16 %v3579
        %v3612 = vunpack.c.l.b16 %v3580
        %v3613 = vunpack.c.l.b16 %v3581
        %v3614 = vunpack.c.l.b16 %v3582
        %v3615 = vunpack.c.l.b16 %v3583
        %v3616 = vunpack.c.l.b16 %v3584
        %v3617 = vunpack.c.l.b16 %v3585
        %v3618 = vunpack.c.l.b16 %v3586
        %v3619 = vunpack.c.l.b16 %v3587
        %v3620 = vunpack.c.l.b16 %v3588
        %v3621 = vunpack.c.l.b16 %v3589
        %v3622 = vunpack.c.l.b16 %v3590
        %v3623 = vpack.c.b16 %v3608, %v3607
        %v3624 = vpack.c.b16 %v3610, %v3609
        %v3625 = vpack.c.b16 %v3612, %v3611
        %v3626 = vpack.c.b16 %v3614, %v3613
        %v3627 = vpack.c.b16 %v3616, %v3615
        %v3628 = vpack.c.b16 %v3618, %v3617
        %v3629 = vpack.c.b16 %v3620, %v3619
        %v3630 = vpack.c.b16 %v3622, %v3621
        %3639 = vmatprep.subr.bf16.mxu0 0
        %3640 = vmatpush1.bf16.msra.mxu0 %v3630
        %3641 = vmatprep.subr.bf16.mxu0 0
        %3642 = vmatpush1.bf16.msra.mxu0 %v3629
        %3643 = vmatprep.subr.bf16.mxu0 0
        %3644 = vmatpush1.bf16.msra.mxu0 %v3628
        %3645 = vmatprep.subr.bf16.mxu0 0
        %3646 = vmatpush1.bf16.msra.mxu0 %v3627
        %3647 = vmatprep.subr.bf16.mxu0 0
        %3648 = vmatpush1.bf16.msra.mxu0 %v3626
        %3649 = vmatprep.subr.bf16.mxu0 0
        %3650 = vmatpush1.bf16.msra.mxu0 %v3625
        %3651 = vmatprep.subr.bf16.mxu0 0
        %3652 = vmatpush1.bf16.msra.mxu0 %v3624
        %3653 = vmatprep.subr.bf16.mxu0 0
        %3654 = vmatpush1.bf16.msra.mxu0 %v3623
        %3655 = vmatprep.subr.bf16.mxu0 0
        %3656 = vmatpush2.bf16.msra.mxu0 0
        %3657 = vmatprep.subr.bf16.mxu0 0
        %3658 = vmatpush2.bf16.msra.mxu0 0
        %3659 = vmatprep.subr.bf16.mxu0 0
        %3660 = vmatpush2.bf16.msra.mxu0 0
        %3661 = vmatprep.subr.bf16.mxu0 0
        %3662 = vmatpush2.bf16.msra.mxu0 0
        %3663 = vmatprep.subr.bf16.mxu0 0
        %3664 = vmatpush2.bf16.msra.mxu0 0
        %3665 = vmatprep.subr.bf16.mxu0 0
        %3666 = vmatpush2.bf16.msra.mxu0 0
        %3667 = vmatprep.subr.bf16.mxu0 0
        %3668 = vmatpush2.bf16.msra.mxu0 0
        %3669 = vmatprep.subr.bf16.mxu0 0
        %3670 = vmatpush2.bf16.msra.mxu0 0
        %3671 = vmatprep.mubr.bf16.mxu0 0
        %3672 = vmatmul.mubr.bf16.gmra.mxu0 %v3573
        %v3673 = vpop.f32.mrf.mxu0
        %v3674 = vadd.f32 0.0, %v3673
        %v3675 = vpop.f32.mrf.mxu0
        %v3676 = vpop.f32.mrf.mxu0
        %v3677 = vadd.f32 0.0, %v3676
        %v3678 = vpop.f32.mrf.mxu0
        %3679 = vdwg.mxu0
        %v3680 = vadd.f32 %v3428, %v3674
        %v3681 = vadd.f32 %v3429, %v3677
        %s3682 = scalar_lea.vmem [#allocation2], 24
        %v3683 = vld [vmem:[%s3682] ss:$2 sm:$0x7]
        %s3684 = scalar_lea.vmem %s3682, 16 [#allocation2]
        %v3685 = vld [vmem:[%s3684] ss:$2 sm:$0x7]
        %s3686 = scalar_lea.vmem %s3682, 32 [#allocation2]
        %v3687 = vld [vmem:[%s3686] ss:$2 sm:$0x7]
        %v3692 = vunpack.c.l.s4 1966171168
        %v3693 = vunpack.c.0.s8 %v3692
        %v3694 = vlaneseq
        %v3695 = vshrl.u32 %v3694, 7
        %v3696 = vsub.s32 %v3693, %v3695
        %v3697 = vrot.slane %v3683, %v3696
        %v3698 = vcombine.high %v3697, %v3697
        %v3700 = vunpack.c.l.s4 1966171168
        %v3701 = vunpack.c.0.s8 %v3700
        %v3702 = vlaneseq
        %v3703 = vshrl.u32 %v3702, 7
        %v3704 = vsub.s32 %v3701, %v3703
        %v3705 = vrot.slane %v3697, %v3704
        %v3707 = vunpack.c.l.s4 1966171168
        %v3708 = vunpack.c.0.s8 %v3707
        %v3709 = vlaneseq
        %v3710 = vshrl.u32 %v3709, 7
        %v3711 = vsub.s32 %v3708, %v3710
        %v3712 = vrot.slane %v3698, %v3711
        %v3713 = vcombine.high %v3705, %v3705
        %v3715 = vunpack.c.l.s4 1966171168
        %v3716 = vunpack.c.0.s8 %v3715
        %v3717 = vlaneseq
        %v3718 = vshrl.u32 %v3717, 7
        %v3719 = vsub.s32 %v3716, %v3718
        %v3720 = vrot.slane %v3685, %v3719
        %v3721 = vcombine.high %v3720, %v3720
        %v3723 = vunpack.c.l.s4 1966171168
        %v3724 = vunpack.c.0.s8 %v3723
        %v3725 = vlaneseq
        %v3726 = vshrl.u32 %v3725, 7
        %v3727 = vsub.s32 %v3724, %v3726
        %v3728 = vrot.slane %v3720, %v3727
        %v3730 = vunpack.c.l.s4 1966171168
        %v3731 = vunpack.c.0.s8 %v3730
        %v3732 = vlaneseq
        %v3733 = vshrl.u32 %v3732, 7
        %v3734 = vsub.s32 %v3731, %v3733
        %v3735 = vrot.slane %v3721, %v3734
        %v3736 = vcombine.high %v3728, %v3728
        %v3738 = vunpack.c.l.s4 1966171168
        %v3739 = vunpack.c.0.s8 %v3738
        %v3740 = vlaneseq
        %v3741 = vshrl.u32 %v3740, 7
        %v3742 = vsub.s32 %v3739, %v3741
        %v3743 = vrot.slane %v3687, %v3742
        %v3744 = vcombine.high %v3743, %v3743
        %v3746 = vunpack.c.l.s4 1966171168
        %v3747 = vunpack.c.0.s8 %v3746
        %v3748 = vlaneseq
        %v3749 = vshrl.u32 %v3748, 7
        %v3750 = vsub.s32 %v3747, %v3749
        %v3751 = vrot.slane %v3743, %v3750
        %v3753 = vunpack.c.l.s4 1966171168
        %v3754 = vunpack.c.0.s8 %v3753
        %v3755 = vlaneseq
        %v3756 = vshrl.u32 %v3755, 7
        %v3757 = vsub.s32 %v3754, %v3756
        %v3758 = vrot.slane %v3744, %v3757
        %v3759 = vcombine.high %v3751, %v3751
        %v3760 = vcombine.low %v3705, %v3712
        %v3761 = vcombine.low %v3713, %v3728
        %v3762 = vcombine.low %v3735, %v3736
        %v3763 = vcombine.low %v3751, %v3758
        %v3765 = vunpack.c.l.s4 1966171168
        %v3766 = vunpack.c.0.s8 %v3765
        %v3767 = vlaneseq
        %v3768 = vshrl.u32 %v3767, 7
        %v3769 = vsub.s32 %v3766, %v3768
        %v3770 = vrot.slane %v3760, %v3769
        %v3772 = vunpack.c.l.s4 1966171168
        %v3773 = vunpack.c.0.s8 %v3772
        %v3774 = vlaneseq
        %v3775 = vshrl.u32 %v3774, 7
        %v3776 = vsub.s32 %v3773, %v3775
        %v3777 = vrot.slane %v3761, %v3776
        %v3779 = vunpack.c.l.s4 1966171168
        %v3780 = vunpack.c.0.s8 %v3779
        %v3781 = vlaneseq
        %v3782 = vshrl.u32 %v3781, 7
        %v3783 = vsub.s32 %v3780, %v3782
        %v3784 = vrot.slane %v3762, %v3783
        %v3786 = vunpack.c.l.s4 1966171168
        %v3787 = vunpack.c.0.s8 %v3786
        %v3788 = vlaneseq
        %v3789 = vshrl.u32 %v3788, 7
        %v3790 = vsub.s32 %v3787, %v3789
        %v3791 = vrot.slane %v3763, %v3790
        %v3792 = vcombine.low %v3770, %v3777
        %v3793 = vcombine.low %v3784, %v3791
        %v3795 = vunpack.c.l.s4 1966171168
        %v3796 = vunpack.c.0.s8 %v3795
        %v3797 = vlaneseq
        %v3798 = vshrl.u32 %v3797, 7
        %v3799 = vsub.s32 %v3796, %v3798
        %v3800 = vrot.slane %v3792, %v3799
        %v3802 = vunpack.c.l.s4 1966171168
        %v3803 = vunpack.c.0.s8 %v3802
        %v3804 = vlaneseq
        %v3805 = vshrl.u32 %v3804, 7
        %v3806 = vsub.s32 %v3803, %v3805
        %v3807 = vrot.slane %v3793, %v3806
        %v3808 = vcombine.low %v3800, %v3807
        %v3810 = vunpack.c.l.s4 1966171168
        %v3811 = vunpack.c.0.s8 %v3810
        %v3812 = vlaneseq
        %v3813 = vshrl.u32 %v3812, 7
        %v3814 = vsub.s32 %v3811, %v3813
        %v3815 = vrot.slane %v3759, %v3814
        %v3817 = vunpack.c.l.s4 1966171168
        %v3818 = vunpack.c.0.s8 %v3817
        %v3819 = vlaneseq
        %v3820 = vshrl.u32 %v3819, 7
        %v3821 = vsub.s32 %v3818, %v3820
        %v3822 = vrot.slane %v3815, %v3821
        %v3825 = vpack.c.bf16 %v3822, %v3808
        %s3826 = scalar_lea.vmem %s3, 768
        %v3827 = vld [vmem:[%s3826] sm:$0xf]
        %v3828 = vld [vmem:[%s3826 + $0x4] sm:$0xf]
        %v3829 = vld [vmem:[%s3826 + $0x8] sm:$0xf]
        %v3830 = vld [vmem:[%s3826 + $0xc] sm:$0xf]
        %v3831 = vld [vmem:[%s3826 + $0x10] sm:$0xf]
        %v3832 = vld [vmem:[%s3826 + $0x14] sm:$0xf]
        %v3833 = vld [vmem:[%s3826 + $0x18] sm:$0xf]
        %v3834 = vld [vmem:[%s3826 + $0x1c] sm:$0xf]
        %v3835 = vld [vmem:[%s3826 + $0x20] sm:$0xf]
        %v3836 = vld [vmem:[%s3826 + $0x24] sm:$0xf]
        %v3837 = vld [vmem:[%s3826 + $0x28] sm:$0xf]
        %v3838 = vld [vmem:[%s3826 + $0x2c] sm:$0xf]
        %v3839 = vld [vmem:[%s3826 + $0x30] sm:$0xf]
        %v3840 = vld [vmem:[%s3826 + $0x34] sm:$0xf]
        %v3841 = vld [vmem:[%s3826 + $0x38] sm:$0xf]
        %v3842 = vld [vmem:[%s3826 + $0x3c] sm:$0xf]
        %v3859 = vunpack.c.l.b16 %v3827
        %v3860 = vunpack.c.l.b16 %v3828
        %v3861 = vunpack.c.l.b16 %v3829
        %v3862 = vunpack.c.l.b16 %v3830
        %v3863 = vunpack.c.l.b16 %v3831
        %v3864 = vunpack.c.l.b16 %v3832
        %v3865 = vunpack.c.l.b16 %v3833
        %v3866 = vunpack.c.l.b16 %v3834
        %v3867 = vunpack.c.l.b16 %v3835
        %v3868 = vunpack.c.l.b16 %v3836
        %v3869 = vunpack.c.l.b16 %v3837
        %v3870 = vunpack.c.l.b16 %v3838
        %v3871 = vunpack.c.l.b16 %v3839
        %v3872 = vunpack.c.l.b16 %v3840
        %v3873 = vunpack.c.l.b16 %v3841
        %v3874 = vunpack.c.l.b16 %v3842
        %v3875 = vpack.c.b16 %v3860, %v3859
        %v3876 = vpack.c.b16 %v3862, %v3861
        %v3877 = vpack.c.b16 %v3864, %v3863
        %v3878 = vpack.c.b16 %v3866, %v3865
        %v3879 = vpack.c.b16 %v3868, %v3867
        %v3880 = vpack.c.b16 %v3870, %v3869
        %v3881 = vpack.c.b16 %v3872, %v3871
        %v3882 = vpack.c.b16 %v3874, %v3873
        %3891 = vmatprep.subr.bf16.mxu0 0
        %3892 = vmatpush1.bf16.msra.mxu0 %v3882
        %3893 = vmatprep.subr.bf16.mxu0 0
        %3894 = vmatpush1.bf16.msra.mxu0 %v3881
        %3895 = vmatprep.subr.bf16.mxu0 0
        %3896 = vmatpush1.bf16.msra.mxu0 %v3880
        %3897 = vmatprep.subr.bf16.mxu0 0
        %3898 = vmatpush1.bf16.msra.mxu0 %v3879
        %3899 = vmatprep.subr.bf16.mxu0 0
        %3900 = vmatpush1.bf16.msra.mxu0 %v3878
        %3901 = vmatprep.subr.bf16.mxu0 0
        %3902 = vmatpush1.bf16.msra.mxu0 %v3877
        %3903 = vmatprep.subr.bf16.mxu0 0
        %3904 = vmatpush1.bf16.msra.mxu0 %v3876
        %3905 = vmatprep.subr.bf16.mxu0 0
        %3906 = vmatpush1.bf16.msra.mxu0 %v3875
        %3907 = vmatprep.subr.bf16.mxu0 0
        %3908 = vmatpush2.bf16.msra.mxu0 0
        %3909 = vmatprep.subr.bf16.mxu0 0
        %3910 = vmatpush2.bf16.msra.mxu0 0
        %3911 = vmatprep.subr.bf16.mxu0 0
        %3912 = vmatpush2.bf16.msra.mxu0 0
        %3913 = vmatprep.subr.bf16.mxu0 0
        %3914 = vmatpush2.bf16.msra.mxu0 0
        %3915 = vmatprep.subr.bf16.mxu0 0
        %3916 = vmatpush2.bf16.msra.mxu0 0
        %3917 = vmatprep.subr.bf16.mxu0 0
        %3918 = vmatpush2.bf16.msra.mxu0 0
        %3919 = vmatprep.subr.bf16.mxu0 0
        %3920 = vmatpush2.bf16.msra.mxu0 0
        %3921 = vmatprep.subr.bf16.mxu0 0
        %3922 = vmatpush2.bf16.msra.mxu0 0
        %3923 = vmatprep.mubr.bf16.mxu0 0
        %3924 = vmatmul.mubr.bf16.gmra.mxu0 %v3825
        %v3925 = vpop.f32.mrf.mxu0
        %v3926 = vadd.f32 0.0, %v3925
        %v3927 = vpop.f32.mrf.mxu0
        %v3928 = vpop.f32.mrf.mxu0
        %v3929 = vadd.f32 0.0, %v3928
        %v3930 = vpop.f32.mrf.mxu0
        %3931 = vdwg.mxu0
        %v3932 = vadd.f32 %v3680, %v3926
        %v3933 = vadd.f32 %v3681, %v3929
        %s3934 = scalar_lea.vmem %s3682, 1 [#allocation2]
        %v3935 = vld [vmem:[%s3934] ss:$2 sm:$0x7]
        %s3936 = scalar_lea.vmem %s3682, 17 [#allocation2]
        %v3937 = vld [vmem:[%s3936] ss:$2 sm:$0x7]
        %s3938 = scalar_lea.vmem %s3682, 33 [#allocation2]
        %v3939 = vld [vmem:[%s3938] ss:$2 sm:$0x7]
        %v3944 = vunpack.c.l.s4 1966171168
        %v3945 = vunpack.c.0.s8 %v3944
        %v3946 = vlaneseq
        %v3947 = vshrl.u32 %v3946, 7
        %v3948 = vsub.s32 %v3945, %v3947
        %v3949 = vrot.slane %v3935, %v3948
        %v3950 = vcombine.high %v3949, %v3949
        %v3952 = vunpack.c.l.s4 1966171168
        %v3953 = vunpack.c.0.s8 %v3952
        %v3954 = vlaneseq
        %v3955 = vshrl.u32 %v3954, 7
        %v3956 = vsub.s32 %v3953, %v3955
        %v3957 = vrot.slane %v3949, %v3956
        %v3959 = vunpack.c.l.s4 1966171168
        %v3960 = vunpack.c.0.s8 %v3959
        %v3961 = vlaneseq
        %v3962 = vshrl.u32 %v3961, 7
        %v3963 = vsub.s32 %v3960, %v3962
        %v3964 = vrot.slane %v3950, %v3963
        %v3965 = vcombine.high %v3957, %v3957
        %v3967 = vunpack.c.l.s4 1966171168
        %v3968 = vunpack.c.0.s8 %v3967
        %v3969 = vlaneseq
        %v3970 = vshrl.u32 %v3969, 7
        %v3971 = vsub.s32 %v3968, %v3970
        %v3972 = vrot.slane %v3937, %v3971
        %v3973 = vcombine.high %v3972, %v3972
        %v3975 = vunpack.c.l.s4 1966171168
        %v3976 = vunpack.c.0.s8 %v3975
        %v3977 = vlaneseq
        %v3978 = vshrl.u32 %v3977, 7
        %v3979 = vsub.s32 %v3976, %v3978
        %v3980 = vrot.slane %v3972, %v3979
        %v3982 = vunpack.c.l.s4 1966171168
        %v3983 = vunpack.c.0.s8 %v3982
        %v3984 = vlaneseq
        %v3985 = vshrl.u32 %v3984, 7
        %v3986 = vsub.s32 %v3983, %v3985
        %v3987 = vrot.slane %v3973, %v3986
        %v3988 = vcombine.high %v3980, %v3980
        %v3990 = vunpack.c.l.s4 1966171168
        %v3991 = vunpack.c.0.s8 %v3990
        %v3992 = vlaneseq
        %v3993 = vshrl.u32 %v3992, 7
        %v3994 = vsub.s32 %v3991, %v3993
        %v3995 = vrot.slane %v3939, %v3994
        %v3996 = vcombine.high %v3995, %v3995
        %v3998 = vunpack.c.l.s4 1966171168
        %v3999 = vunpack.c.0.s8 %v3998
        %v4000 = vlaneseq
        %v4001 = vshrl.u32 %v4000, 7
        %v4002 = vsub.s32 %v3999, %v4001
        %v4003 = vrot.slane %v3995, %v4002
        %v4005 = vunpack.c.l.s4 1966171168
        %v4006 = vunpack.c.0.s8 %v4005
        %v4007 = vlaneseq
        %v4008 = vshrl.u32 %v4007, 7
        %v4009 = vsub.s32 %v4006, %v4008
        %v4010 = vrot.slane %v3996, %v4009
        %v4011 = vcombine.high %v4003, %v4003
        %v4012 = vcombine.low %v3957, %v3964
        %v4013 = vcombine.low %v3965, %v3980
        %v4014 = vcombine.low %v3987, %v3988
        %v4015 = vcombine.low %v4003, %v4010
        %v4017 = vunpack.c.l.s4 1966171168
        %v4018 = vunpack.c.0.s8 %v4017
        %v4019 = vlaneseq
        %v4020 = vshrl.u32 %v4019, 7
        %v4021 = vsub.s32 %v4018, %v4020
        %v4022 = vrot.slane %v4012, %v4021
        %v4024 = vunpack.c.l.s4 1966171168
        %v4025 = vunpack.c.0.s8 %v4024
        %v4026 = vlaneseq
        %v4027 = vshrl.u32 %v4026, 7
        %v4028 = vsub.s32 %v4025, %v4027
        %v4029 = vrot.slane %v4013, %v4028
        %v4031 = vunpack.c.l.s4 1966171168
        %v4032 = vunpack.c.0.s8 %v4031
        %v4033 = vlaneseq
        %v4034 = vshrl.u32 %v4033, 7
        %v4035 = vsub.s32 %v4032, %v4034
        %v4036 = vrot.slane %v4014, %v4035
        %v4038 = vunpack.c.l.s4 1966171168
        %v4039 = vunpack.c.0.s8 %v4038
        %v4040 = vlaneseq
        %v4041 = vshrl.u32 %v4040, 7
        %v4042 = vsub.s32 %v4039, %v4041
        %v4043 = vrot.slane %v4015, %v4042
        %v4044 = vcombine.low %v4022, %v4029
        %v4045 = vcombine.low %v4036, %v4043
        %v4047 = vunpack.c.l.s4 1966171168
        %v4048 = vunpack.c.0.s8 %v4047
        %v4049 = vlaneseq
        %v4050 = vshrl.u32 %v4049, 7
        %v4051 = vsub.s32 %v4048, %v4050
        %v4052 = vrot.slane %v4044, %v4051
        %v4054 = vunpack.c.l.s4 1966171168
        %v4055 = vunpack.c.0.s8 %v4054
        %v4056 = vlaneseq
        %v4057 = vshrl.u32 %v4056, 7
        %v4058 = vsub.s32 %v4055, %v4057
        %v4059 = vrot.slane %v4045, %v4058
        %v4060 = vcombine.low %v4052, %v4059
        %v4062 = vunpack.c.l.s4 1966171168
        %v4063 = vunpack.c.0.s8 %v4062
        %v4064 = vlaneseq
        %v4065 = vshrl.u32 %v4064, 7
        %v4066 = vsub.s32 %v4063, %v4065
        %v4067 = vrot.slane %v4011, %v4066
        %v4069 = vunpack.c.l.s4 1966171168
        %v4070 = vunpack.c.0.s8 %v4069
        %v4071 = vlaneseq
        %v4072 = vshrl.u32 %v4071, 7
        %v4073 = vsub.s32 %v4070, %v4072
        %v4074 = vrot.slane %v4067, %v4073
        %v4077 = vpack.c.bf16 %v4074, %v4060
        %s4078 = scalar_lea.vmem %s3, 832
        %v4079 = vld [vmem:[%s4078] sm:$0xf]
        %v4080 = vld [vmem:[%s4078 + $0x4] sm:$0xf]
        %v4081 = vld [vmem:[%s4078 + $0x8] sm:$0xf]
        %v4082 = vld [vmem:[%s4078 + $0xc] sm:$0xf]
        %v4083 = vld [vmem:[%s4078 + $0x10] sm:$0xf]
        %v4084 = vld [vmem:[%s4078 + $0x14] sm:$0xf]
        %v4085 = vld [vmem:[%s4078 + $0x18] sm:$0xf]
        %v4086 = vld [vmem:[%s4078 + $0x1c] sm:$0xf]
        %v4087 = vld [vmem:[%s4078 + $0x20] sm:$0xf]
        %v4088 = vld [vmem:[%s4078 + $0x24] sm:$0xf]
        %v4089 = vld [vmem:[%s4078 + $0x28] sm:$0xf]
        %v4090 = vld [vmem:[%s4078 + $0x2c] sm:$0xf]
        %v4091 = vld [vmem:[%s4078 + $0x30] sm:$0xf]
        %v4092 = vld [vmem:[%s4078 + $0x34] sm:$0xf]
        %v4093 = vld [vmem:[%s4078 + $0x38] sm:$0xf]
        %v4094 = vld [vmem:[%s4078 + $0x3c] sm:$0xf]
        %v4111 = vunpack.c.l.b16 %v4079
        %v4112 = vunpack.c.l.b16 %v4080
        %v4113 = vunpack.c.l.b16 %v4081
        %v4114 = vunpack.c.l.b16 %v4082
        %v4115 = vunpack.c.l.b16 %v4083
        %v4116 = vunpack.c.l.b16 %v4084
        %v4117 = vunpack.c.l.b16 %v4085
        %v4118 = vunpack.c.l.b16 %v4086
        %v4119 = vunpack.c.l.b16 %v4087
        %v4120 = vunpack.c.l.b16 %v4088
        %v4121 = vunpack.c.l.b16 %v4089
        %v4122 = vunpack.c.l.b16 %v4090
        %v4123 = vunpack.c.l.b16 %v4091
        %v4124 = vunpack.c.l.b16 %v4092
        %v4125 = vunpack.c.l.b16 %v4093
        %v4126 = vunpack.c.l.b16 %v4094
        %v4127 = vpack.c.b16 %v4112, %v4111
        %v4128 = vpack.c.b16 %v4114, %v4113
        %v4129 = vpack.c.b16 %v4116, %v4115
        %v4130 = vpack.c.b16 %v4118, %v4117
        %v4131 = vpack.c.b16 %v4120, %v4119
        %v4132 = vpack.c.b16 %v4122, %v4121
        %v4133 = vpack.c.b16 %v4124, %v4123
        %v4134 = vpack.c.b16 %v4126, %v4125
        %4143 = vmatprep.subr.bf16.mxu0 0
        %4144 = vmatpush1.bf16.msra.mxu0 %v4134
        %4145 = vmatprep.subr.bf16.mxu0 0
        %4146 = vmatpush1.bf16.msra.mxu0 %v4133
        %4147 = vmatprep.subr.bf16.mxu0 0
        %4148 = vmatpush1.bf16.msra.mxu0 %v4132
        %4149 = vmatprep.subr.bf16.mxu0 0
        %4150 = vmatpush1.bf16.msra.mxu0 %v4131
        %4151 = vmatprep.subr.bf16.mxu0 0
        %4152 = vmatpush1.bf16.msra.mxu0 %v4130
        %4153 = vmatprep.subr.bf16.mxu0 0
        %4154 = vmatpush1.bf16.msra.mxu0 %v4129
        %4155 = vmatprep.subr.bf16.mxu0 0
        %4156 = vmatpush1.bf16.msra.mxu0 %v4128
        %4157 = vmatprep.subr.bf16.mxu0 0
        %4158 = vmatpush1.bf16.msra.mxu0 %v4127
        %4159 = vmatprep.subr.bf16.mxu0 0
        %4160 = vmatpush2.bf16.msra.mxu0 0
        %4161 = vmatprep.subr.bf16.mxu0 0
        %4162 = vmatpush2.bf16.msra.mxu0 0
        %4163 = vmatprep.subr.bf16.mxu0 0
        %4164 = vmatpush2.bf16.msra.mxu0 0
        %4165 = vmatprep.subr.bf16.mxu0 0
        %4166 = vmatpush2.bf16.msra.mxu0 0
        %4167 = vmatprep.subr.bf16.mxu0 0
        %4168 = vmatpush2.bf16.msra.mxu0 0
        %4169 = vmatprep.subr.bf16.mxu0 0
        %4170 = vmatpush2.bf16.msra.mxu0 0
        %4171 = vmatprep.subr.bf16.mxu0 0
        %4172 = vmatpush2.bf16.msra.mxu0 0
        %4173 = vmatprep.subr.bf16.mxu0 0
        %4174 = vmatpush2.bf16.msra.mxu0 0
        %4175 = vmatprep.mubr.bf16.mxu0 0
        %4176 = vmatmul.mubr.bf16.gmra.mxu0 %v4077
        %v4177 = vpop.f32.mrf.mxu0
        %v4178 = vadd.f32 0.0, %v4177
        %v4179 = vpop.f32.mrf.mxu0
        %v4180 = vpop.f32.mrf.mxu0
        %v4181 = vadd.f32 0.0, %v4180
        %v4182 = vpop.f32.mrf.mxu0
        %4183 = vdwg.mxu0
        %v4184 = vadd.f32 %v3932, %v4178
        %v4185 = vadd.f32 %v3933, %v4181
        %s4186 = scalar_lea.vmem %s3682, 2 [#allocation2]
        %v4187 = vld [vmem:[%s4186] ss:$2 sm:$0x7]
        %s4188 = scalar_lea.vmem %s3682, 18 [#allocation2]
        %v4189 = vld [vmem:[%s4188] ss:$2 sm:$0x7]
        %s4190 = scalar_lea.vmem %s3682, 34 [#allocation2]
        %v4191 = vld [vmem:[%s4190] ss:$2 sm:$0x7]
        %v4196 = vunpack.c.l.s4 1966171168
        %v4197 = vunpack.c.0.s8 %v4196
        %v4198 = vlaneseq
        %v4199 = vshrl.u32 %v4198, 7
        %v4200 = vsub.s32 %v4197, %v4199
        %v4201 = vrot.slane %v4187, %v4200
        %v4202 = vcombine.high %v4201, %v4201
        %v4204 = vunpack.c.l.s4 1966171168
        %v4205 = vunpack.c.0.s8 %v4204
        %v4206 = vlaneseq
        %v4207 = vshrl.u32 %v4206, 7
        %v4208 = vsub.s32 %v4205, %v4207
        %v4209 = vrot.slane %v4201, %v4208
        %v4211 = vunpack.c.l.s4 1966171168
        %v4212 = vunpack.c.0.s8 %v4211
        %v4213 = vlaneseq
        %v4214 = vshrl.u32 %v4213, 7
        %v4215 = vsub.s32 %v4212, %v4214
        %v4216 = vrot.slane %v4202, %v4215
        %v4217 = vcombine.high %v4209, %v4209
        %v4219 = vunpack.c.l.s4 1966171168
        %v4220 = vunpack.c.0.s8 %v4219
        %v4221 = vlaneseq
        %v4222 = vshrl.u32 %v4221, 7
        %v4223 = vsub.s32 %v4220, %v4222
        %v4224 = vrot.slane %v4189, %v4223
        %v4225 = vcombine.high %v4224, %v4224
        %v4227 = vunpack.c.l.s4 1966171168
        %v4228 = vunpack.c.0.s8 %v4227
        %v4229 = vlaneseq
        %v4230 = vshrl.u32 %v4229, 7
        %v4231 = vsub.s32 %v4228, %v4230
        %v4232 = vrot.slane %v4224, %v4231
        %v4234 = vunpack.c.l.s4 1966171168
        %v4235 = vunpack.c.0.s8 %v4234
        %v4236 = vlaneseq
        %v4237 = vshrl.u32 %v4236, 7
        %v4238 = vsub.s32 %v4235, %v4237
        %v4239 = vrot.slane %v4225, %v4238
        %v4240 = vcombine.high %v4232, %v4232
        %v4242 = vunpack.c.l.s4 1966171168
        %v4243 = vunpack.c.0.s8 %v4242
        %v4244 = vlaneseq
        %v4245 = vshrl.u32 %v4244, 7
        %v4246 = vsub.s32 %v4243, %v4245
        %v4247 = vrot.slane %v4191, %v4246
        %v4248 = vcombine.high %v4247, %v4247
        %v4250 = vunpack.c.l.s4 1966171168
        %v4251 = vunpack.c.0.s8 %v4250
        %v4252 = vlaneseq
        %v4253 = vshrl.u32 %v4252, 7
        %v4254 = vsub.s32 %v4251, %v4253
        %v4255 = vrot.slane %v4247, %v4254
        %v4257 = vunpack.c.l.s4 1966171168
        %v4258 = vunpack.c.0.s8 %v4257
        %v4259 = vlaneseq
        %v4260 = vshrl.u32 %v4259, 7
        %v4261 = vsub.s32 %v4258, %v4260
        %v4262 = vrot.slane %v4248, %v4261
        %v4263 = vcombine.high %v4255, %v4255
        %v4264 = vcombine.low %v4209, %v4216
        %v4265 = vcombine.low %v4217, %v4232
        %v4266 = vcombine.low %v4239, %v4240
        %v4267 = vcombine.low %v4255, %v4262
        %v4269 = vunpack.c.l.s4 1966171168
        %v4270 = vunpack.c.0.s8 %v4269
        %v4271 = vlaneseq
        %v4272 = vshrl.u32 %v4271, 7
        %v4273 = vsub.s32 %v4270, %v4272
        %v4274 = vrot.slane %v4264, %v4273
        %v4276 = vunpack.c.l.s4 1966171168
        %v4277 = vunpack.c.0.s8 %v4276
        %v4278 = vlaneseq
        %v4279 = vshrl.u32 %v4278, 7
        %v4280 = vsub.s32 %v4277, %v4279
        %v4281 = vrot.slane %v4265, %v4280
        %v4283 = vunpack.c.l.s4 1966171168
        %v4284 = vunpack.c.0.s8 %v4283
        %v4285 = vlaneseq
        %v4286 = vshrl.u32 %v4285, 7
        %v4287 = vsub.s32 %v4284, %v4286
        %v4288 = vrot.slane %v4266, %v4287
        %v4290 = vunpack.c.l.s4 1966171168
        %v4291 = vunpack.c.0.s8 %v4290
        %v4292 = vlaneseq
        %v4293 = vshrl.u32 %v4292, 7
        %v4294 = vsub.s32 %v4291, %v4293
        %v4295 = vrot.slane %v4267, %v4294
        %v4296 = vcombine.low %v4274, %v4281
        %v4297 = vcombine.low %v4288, %v4295
        %v4299 = vunpack.c.l.s4 1966171168
        %v4300 = vunpack.c.0.s8 %v4299
        %v4301 = vlaneseq
        %v4302 = vshrl.u32 %v4301, 7
        %v4303 = vsub.s32 %v4300, %v4302
        %v4304 = vrot.slane %v4296, %v4303
        %v4306 = vunpack.c.l.s4 1966171168
        %v4307 = vunpack.c.0.s8 %v4306
        %v4308 = vlaneseq
        %v4309 = vshrl.u32 %v4308, 7
        %v4310 = vsub.s32 %v4307, %v4309
        %v4311 = vrot.slane %v4297, %v4310
        %v4312 = vcombine.low %v4304, %v4311
        %v4314 = vunpack.c.l.s4 1966171168
        %v4315 = vunpack.c.0.s8 %v4314
        %v4316 = vlaneseq
        %v4317 = vshrl.u32 %v4316, 7
        %v4318 = vsub.s32 %v4315, %v4317
        %v4319 = vrot.slane %v4263, %v4318
        %v4321 = vunpack.c.l.s4 1966171168
        %v4322 = vunpack.c.0.s8 %v4321
        %v4323 = vlaneseq
        %v4324 = vshrl.u32 %v4323, 7
        %v4325 = vsub.s32 %v4322, %v4324
        %v4326 = vrot.slane %v4319, %v4325
        %v4329 = vpack.c.bf16 %v4326, %v4312
        %s4330 = scalar_lea.vmem %s3, 896
        %v4331 = vld [vmem:[%s4330] sm:$0xf]
        %v4332 = vld [vmem:[%s4330 + $0x4] sm:$0xf]
        %v4333 = vld [vmem:[%s4330 + $0x8] sm:$0xf]
        %v4334 = vld [vmem:[%s4330 + $0xc] sm:$0xf]
        %v4335 = vld [vmem:[%s4330 + $0x10] sm:$0xf]
        %v4336 = vld [vmem:[%s4330 + $0x14] sm:$0xf]
        %v4337 = vld [vmem:[%s4330 + $0x18] sm:$0xf]
        %v4338 = vld [vmem:[%s4330 + $0x1c] sm:$0xf]
        %v4339 = vld [vmem:[%s4330 + $0x20] sm:$0xf]
        %v4340 = vld [vmem:[%s4330 + $0x24] sm:$0xf]
        %v4341 = vld [vmem:[%s4330 + $0x28] sm:$0xf]
        %v4342 = vld [vmem:[%s4330 + $0x2c] sm:$0xf]
        %v4343 = vld [vmem:[%s4330 + $0x30] sm:$0xf]
        %v4344 = vld [vmem:[%s4330 + $0x34] sm:$0xf]
        %v4345 = vld [vmem:[%s4330 + $0x38] sm:$0xf]
        %v4346 = vld [vmem:[%s4330 + $0x3c] sm:$0xf]
        %v4363 = vunpack.c.l.b16 %v4331
        %v4364 = vunpack.c.l.b16 %v4332
        %v4365 = vunpack.c.l.b16 %v4333
        %v4366 = vunpack.c.l.b16 %v4334
        %v4367 = vunpack.c.l.b16 %v4335
        %v4368 = vunpack.c.l.b16 %v4336
        %v4369 = vunpack.c.l.b16 %v4337
        %v4370 = vunpack.c.l.b16 %v4338
        %v4371 = vunpack.c.l.b16 %v4339
        %v4372 = vunpack.c.l.b16 %v4340
        %v4373 = vunpack.c.l.b16 %v4341
        %v4374 = vunpack.c.l.b16 %v4342
        %v4375 = vunpack.c.l.b16 %v4343
        %v4376 = vunpack.c.l.b16 %v4344
        %v4377 = vunpack.c.l.b16 %v4345
        %v4378 = vunpack.c.l.b16 %v4346
        %v4379 = vpack.c.b16 %v4364, %v4363
        %v4380 = vpack.c.b16 %v4366, %v4365
        %v4381 = vpack.c.b16 %v4368, %v4367
        %v4382 = vpack.c.b16 %v4370, %v4369
        %v4383 = vpack.c.b16 %v4372, %v4371
        %v4384 = vpack.c.b16 %v4374, %v4373
        %v4385 = vpack.c.b16 %v4376, %v4375
        %v4386 = vpack.c.b16 %v4378, %v4377
        %4395 = vmatprep.subr.bf16.mxu0 0
        %4396 = vmatpush1.bf16.msra.mxu0 %v4386
        %4397 = vmatprep.subr.bf16.mxu0 0
        %4398 = vmatpush1.bf16.msra.mxu0 %v4385
        %4399 = vmatprep.subr.bf16.mxu0 0
        %4400 = vmatpush1.bf16.msra.mxu0 %v4384
        %4401 = vmatprep.subr.bf16.mxu0 0
        %4402 = vmatpush1.bf16.msra.mxu0 %v4383
        %4403 = vmatprep.subr.bf16.mxu0 0
        %4404 = vmatpush1.bf16.msra.mxu0 %v4382
        %4405 = vmatprep.subr.bf16.mxu0 0
        %4406 = vmatpush1.bf16.msra.mxu0 %v4381
        %4407 = vmatprep.subr.bf16.mxu0 0
        %4408 = vmatpush1.bf16.msra.mxu0 %v4380
        %4409 = vmatprep.subr.bf16.mxu0 0
        %4410 = vmatpush1.bf16.msra.mxu0 %v4379
        %4411 = vmatprep.subr.bf16.mxu0 0
        %4412 = vmatpush2.bf16.msra.mxu0 0
        %4413 = vmatprep.subr.bf16.mxu0 0
        %4414 = vmatpush2.bf16.msra.mxu0 0
        %4415 = vmatprep.subr.bf16.mxu0 0
        %4416 = vmatpush2.bf16.msra.mxu0 0
        %4417 = vmatprep.subr.bf16.mxu0 0
        %4418 = vmatpush2.bf16.msra.mxu0 0
        %4419 = vmatprep.subr.bf16.mxu0 0
        %4420 = vmatpush2.bf16.msra.mxu0 0
        %4421 = vmatprep.subr.bf16.mxu0 0
        %4422 = vmatpush2.bf16.msra.mxu0 0
        %4423 = vmatprep.subr.bf16.mxu0 0
        %4424 = vmatpush2.bf16.msra.mxu0 0
        %4425 = vmatprep.subr.bf16.mxu0 0
        %4426 = vmatpush2.bf16.msra.mxu0 0
        %4427 = vmatprep.mubr.bf16.mxu0 0
        %4428 = vmatmul.mubr.bf16.gmra.mxu0 %v4329
        %v4429 = vpop.f32.mrf.mxu0
        %v4430 = vadd.f32 0.0, %v4429
        %v4431 = vpop.f32.mrf.mxu0
        %v4432 = vpop.f32.mrf.mxu0
        %v4433 = vadd.f32 0.0, %v4432
        %v4434 = vpop.f32.mrf.mxu0
        %4435 = vdwg.mxu0
        %v4436 = vadd.f32 %v4184, %v4430
        %v4437 = vadd.f32 %v4185, %v4433
        %s4438 = scalar_lea.vmem %s3682, 3 [#allocation2]
        %v4439 = vld [vmem:[%s4438] ss:$2 sm:$0x7]
        %s4440 = scalar_lea.vmem %s3682, 19 [#allocation2]
        %v4441 = vld [vmem:[%s4440] ss:$2 sm:$0x7]
        %s4442 = scalar_lea.vmem %s3682, 35 [#allocation2]
        %v4443 = vld [vmem:[%s4442] ss:$2 sm:$0x7]
        %v4448 = vunpack.c.l.s4 1966171168
        %v4449 = vunpack.c.0.s8 %v4448
        %v4450 = vlaneseq
        %v4451 = vshrl.u32 %v4450, 7
        %v4452 = vsub.s32 %v4449, %v4451
        %v4453 = vrot.slane %v4439, %v4452
        %v4454 = vcombine.high %v4453, %v4453
        %v4456 = vunpack.c.l.s4 1966171168
        %v4457 = vunpack.c.0.s8 %v4456
        %v4458 = vlaneseq
        %v4459 = vshrl.u32 %v4458, 7
        %v4460 = vsub.s32 %v4457, %v4459
        %v4461 = vrot.slane %v4453, %v4460
        %v4463 = vunpack.c.l.s4 1966171168
        %v4464 = vunpack.c.0.s8 %v4463
        %v4465 = vlaneseq
        %v4466 = vshrl.u32 %v4465, 7
        %v4467 = vsub.s32 %v4464, %v4466
        %v4468 = vrot.slane %v4454, %v4467
        %v4469 = vcombine.high %v4461, %v4461
        %v4471 = vunpack.c.l.s4 1966171168
        %v4472 = vunpack.c.0.s8 %v4471
        %v4473 = vlaneseq
        %v4474 = vshrl.u32 %v4473, 7
        %v4475 = vsub.s32 %v4472, %v4474
        %v4476 = vrot.slane %v4441, %v4475
        %v4477 = vcombine.high %v4476, %v4476
        %v4479 = vunpack.c.l.s4 1966171168
        %v4480 = vunpack.c.0.s8 %v4479
        %v4481 = vlaneseq
        %v4482 = vshrl.u32 %v4481, 7
        %v4483 = vsub.s32 %v4480, %v4482
        %v4484 = vrot.slane %v4476, %v4483
        %v4486 = vunpack.c.l.s4 1966171168
        %v4487 = vunpack.c.0.s8 %v4486
        %v4488 = vlaneseq
        %v4489 = vshrl.u32 %v4488, 7
        %v4490 = vsub.s32 %v4487, %v4489
        %v4491 = vrot.slane %v4477, %v4490
        %v4492 = vcombine.high %v4484, %v4484
        %v4494 = vunpack.c.l.s4 1966171168
        %v4495 = vunpack.c.0.s8 %v4494
        %v4496 = vlaneseq
        %v4497 = vshrl.u32 %v4496, 7
        %v4498 = vsub.s32 %v4495, %v4497
        %v4499 = vrot.slane %v4443, %v4498
        %v4500 = vcombine.high %v4499, %v4499
        %v4502 = vunpack.c.l.s4 1966171168
        %v4503 = vunpack.c.0.s8 %v4502
        %v4504 = vlaneseq
        %v4505 = vshrl.u32 %v4504, 7
        %v4506 = vsub.s32 %v4503, %v4505
        %v4507 = vrot.slane %v4499, %v4506
        %v4509 = vunpack.c.l.s4 1966171168
        %v4510 = vunpack.c.0.s8 %v4509
        %v4511 = vlaneseq
        %v4512 = vshrl.u32 %v4511, 7
        %v4513 = vsub.s32 %v4510, %v4512
        %v4514 = vrot.slane %v4500, %v4513
        %v4515 = vcombine.high %v4507, %v4507
        %v4516 = vcombine.low %v4461, %v4468
        %v4517 = vcombine.low %v4469, %v4484
        %v4518 = vcombine.low %v4491, %v4492
        %v4519 = vcombine.low %v4507, %v4514
        %v4521 = vunpack.c.l.s4 1966171168
        %v4522 = vunpack.c.0.s8 %v4521
        %v4523 = vlaneseq
        %v4524 = vshrl.u32 %v4523, 7
        %v4525 = vsub.s32 %v4522, %v4524
        %v4526 = vrot.slane %v4516, %v4525
        %v4528 = vunpack.c.l.s4 1966171168
        %v4529 = vunpack.c.0.s8 %v4528
        %v4530 = vlaneseq
        %v4531 = vshrl.u32 %v4530, 7
        %v4532 = vsub.s32 %v4529, %v4531
        %v4533 = vrot.slane %v4517, %v4532
        %v4535 = vunpack.c.l.s4 1966171168
        %v4536 = vunpack.c.0.s8 %v4535
        %v4537 = vlaneseq
        %v4538 = vshrl.u32 %v4537, 7
        %v4539 = vsub.s32 %v4536, %v4538
        %v4540 = vrot.slane %v4518, %v4539
        %v4542 = vunpack.c.l.s4 1966171168
        %v4543 = vunpack.c.0.s8 %v4542
        %v4544 = vlaneseq
        %v4545 = vshrl.u32 %v4544, 7
        %v4546 = vsub.s32 %v4543, %v4545
        %v4547 = vrot.slane %v4519, %v4546
        %v4548 = vcombine.low %v4526, %v4533
        %v4549 = vcombine.low %v4540, %v4547
        %v4551 = vunpack.c.l.s4 1966171168
        %v4552 = vunpack.c.0.s8 %v4551
        %v4553 = vlaneseq
        %v4554 = vshrl.u32 %v4553, 7
        %v4555 = vsub.s32 %v4552, %v4554
        %v4556 = vrot.slane %v4548, %v4555
        %v4558 = vunpack.c.l.s4 1966171168
        %v4559 = vunpack.c.0.s8 %v4558
        %v4560 = vlaneseq
        %v4561 = vshrl.u32 %v4560, 7
        %v4562 = vsub.s32 %v4559, %v4561
        %v4563 = vrot.slane %v4549, %v4562
        %v4564 = vcombine.low %v4556, %v4563
        %v4566 = vunpack.c.l.s4 1966171168
        %v4567 = vunpack.c.0.s8 %v4566
        %v4568 = vlaneseq
        %v4569 = vshrl.u32 %v4568, 7
        %v4570 = vsub.s32 %v4567, %v4569
        %v4571 = vrot.slane %v4515, %v4570
        %v4573 = vunpack.c.l.s4 1966171168
        %v4574 = vunpack.c.0.s8 %v4573
        %v4575 = vlaneseq
        %v4576 = vshrl.u32 %v4575, 7
        %v4577 = vsub.s32 %v4574, %v4576
        %v4578 = vrot.slane %v4571, %v4577
        %v4581 = vpack.c.bf16 %v4578, %v4564
        %s4582 = scalar_lea.vmem %s3, 960
        %v4583 = vld [vmem:[%s4582] sm:$0xf]
        %v4584 = vld [vmem:[%s4582 + $0x4] sm:$0xf]
        %v4585 = vld [vmem:[%s4582 + $0x8] sm:$0xf]
        %v4586 = vld [vmem:[%s4582 + $0xc] sm:$0xf]
        %v4587 = vld [vmem:[%s4582 + $0x10] sm:$0xf]
        %v4588 = vld [vmem:[%s4582 + $0x14] sm:$0xf]
        %v4589 = vld [vmem:[%s4582 + $0x18] sm:$0xf]
        %v4590 = vld [vmem:[%s4582 + $0x1c] sm:$0xf]
        %v4591 = vld [vmem:[%s4582 + $0x20] sm:$0xf]
        %v4592 = vld [vmem:[%s4582 + $0x24] sm:$0xf]
        %v4593 = vld [vmem:[%s4582 + $0x28] sm:$0xf]
        %v4594 = vld [vmem:[%s4582 + $0x2c] sm:$0xf]
        %v4595 = vld [vmem:[%s4582 + $0x30] sm:$0xf]
        %v4596 = vld [vmem:[%s4582 + $0x34] sm:$0xf]
        %v4597 = vld [vmem:[%s4582 + $0x38] sm:$0xf]
        %v4598 = vld [vmem:[%s4582 + $0x3c] sm:$0xf]
        %v4615 = vunpack.c.l.b16 %v4583
        %v4616 = vunpack.c.l.b16 %v4584
        %v4617 = vunpack.c.l.b16 %v4585
        %v4618 = vunpack.c.l.b16 %v4586
        %v4619 = vunpack.c.l.b16 %v4587
        %v4620 = vunpack.c.l.b16 %v4588
        %v4621 = vunpack.c.l.b16 %v4589
        %v4622 = vunpack.c.l.b16 %v4590
        %v4623 = vunpack.c.l.b16 %v4591
        %v4624 = vunpack.c.l.b16 %v4592
        %v4625 = vunpack.c.l.b16 %v4593
        %v4626 = vunpack.c.l.b16 %v4594
        %v4627 = vunpack.c.l.b16 %v4595
        %v4628 = vunpack.c.l.b16 %v4596
        %v4629 = vunpack.c.l.b16 %v4597
        %v4630 = vunpack.c.l.b16 %v4598
        %v4631 = vpack.c.b16 %v4616, %v4615
        %v4632 = vpack.c.b16 %v4618, %v4617
        %v4633 = vpack.c.b16 %v4620, %v4619
        %v4634 = vpack.c.b16 %v4622, %v4621
        %v4635 = vpack.c.b16 %v4624, %v4623
        %v4636 = vpack.c.b16 %v4626, %v4625
        %v4637 = vpack.c.b16 %v4628, %v4627
        %v4638 = vpack.c.b16 %v4630, %v4629
        %4647 = vmatprep.subr.bf16.mxu0 0
        %4648 = vmatpush1.bf16.msra.mxu0 %v4638
        %4649 = vmatprep.subr.bf16.mxu0 0
        %4650 = vmatpush1.bf16.msra.mxu0 %v4637
        %4651 = vmatprep.subr.bf16.mxu0 0
        %4652 = vmatpush1.bf16.msra.mxu0 %v4636
        %4653 = vmatprep.subr.bf16.mxu0 0
        %4654 = vmatpush1.bf16.msra.mxu0 %v4635
        %4655 = vmatprep.subr.bf16.mxu0 0
        %4656 = vmatpush1.bf16.msra.mxu0 %v4634
        %4657 = vmatprep.subr.bf16.mxu0 0
        %4658 = vmatpush1.bf16.msra.mxu0 %v4633
        %4659 = vmatprep.subr.bf16.mxu0 0
        %4660 = vmatpush1.bf16.msra.mxu0 %v4632
        %4661 = vmatprep.subr.bf16.mxu0 0
        %4662 = vmatpush1.bf16.msra.mxu0 %v4631
        %4663 = vmatprep.subr.bf16.mxu0 0
        %4664 = vmatpush2.bf16.msra.mxu0 0
        %4665 = vmatprep.subr.bf16.mxu0 0
        %4666 = vmatpush2.bf16.msra.mxu0 0
        %4667 = vmatprep.subr.bf16.mxu0 0
        %4668 = vmatpush2.bf16.msra.mxu0 0
        %4669 = vmatprep.subr.bf16.mxu0 0
        %4670 = vmatpush2.bf16.msra.mxu0 0
        %4671 = vmatprep.subr.bf16.mxu0 0
        %4672 = vmatpush2.bf16.msra.mxu0 0
        %4673 = vmatprep.subr.bf16.mxu0 0
        %4674 = vmatpush2.bf16.msra.mxu0 0
        %4675 = vmatprep.subr.bf16.mxu0 0
        %4676 = vmatpush2.bf16.msra.mxu0 0
        %4677 = vmatprep.subr.bf16.mxu0 0
        %4678 = vmatpush2.bf16.msra.mxu0 0
        %4679 = vmatprep.mubr.bf16.mxu0 0
        %4680 = vmatmul.mubr.bf16.gmra.mxu0 %v4581
        %v4681 = vpop.f32.mrf.mxu0
        %v4682 = vadd.f32 0.0, %v4681
        %v4683 = vpop.f32.mrf.mxu0
        %v4684 = vpop.f32.mrf.mxu0
        %v4685 = vadd.f32 0.0, %v4684
        %v4686 = vpop.f32.mrf.mxu0
        %4687 = vdwg.mxu0
        %v4688 = vadd.f32 %v4436, %v4682
        %v4689 = vadd.f32 %v4437, %v4685
        %v4690 = vld [vmem:[%s4] sm:$0x1]
        %v4692 = vlaneseq
        %v4693 = vshrl.u32 %v4692, 7
        %v4694 = vsub.s32 0, %v4693
        %v4695 = vrot.slane %v4690, %v4694
        %v4697 = vadd.f32 %v4688, %v4695
        %v4698 = vadd.f32 %v4689, %v4695
        %v4699 = vmax.f32 %v4697, 0.0
        %v4700 = vmax.f32 %v4698, 0.0
        %v4703 = vcombine.high %v4699, %v4699
        %v4705 = vunpack.c.l.s4 1966171168
        %v4706 = vunpack.c.0.s8 %v4705
        %v4707 = vlaneseq
        %v4708 = vshrl.u32 %v4707, 7
        %v4709 = vsub.s32 %v4706, %v4708
        %v4710 = vrot.slane %v4699, %v4709
        %v4712 = vunpack.c.l.s4 1966171168
        %v4713 = vunpack.c.0.s8 %v4712
        %v4714 = vlaneseq
        %v4715 = vshrl.u32 %v4714, 7
        %v4716 = vsub.s32 %v4713, %v4715
        %v4717 = vrot.slane %v4703, %v4716
        %v4718 = vcombine.high %v4710, %v4710
        %v4719 = vcombine.high %v4717, %v4717
        %v4721 = vunpack.c.l.s4 1966171168
        %v4722 = vunpack.c.0.s8 %v4721
        %v4723 = vlaneseq
        %v4724 = vshrl.u32 %v4723, 7
        %v4725 = vsub.s32 %v4722, %v4724
        %v4726 = vrot.slane %v4710, %v4725
        %v4728 = vunpack.c.l.s4 1966171168
        %v4729 = vunpack.c.0.s8 %v4728
        %v4730 = vlaneseq
        %v4731 = vshrl.u32 %v4730, 7
        %v4732 = vsub.s32 %v4729, %v4731
        %v4733 = vrot.slane %v4717, %v4732
        %v4735 = vunpack.c.l.s4 1966171168
        %v4736 = vunpack.c.0.s8 %v4735
        %v4737 = vlaneseq
        %v4738 = vshrl.u32 %v4737, 7
        %v4739 = vsub.s32 %v4736, %v4738
        %v4740 = vrot.slane %v4718, %v4739
        %v4742 = vunpack.c.l.s4 1966171168
        %v4743 = vunpack.c.0.s8 %v4742
        %v4744 = vlaneseq
        %v4745 = vshrl.u32 %v4744, 7
        %v4746 = vsub.s32 %v4743, %v4745
        %v4747 = vrot.slane %v4719, %v4746
        %v4748 = vcombine.high %v4726, %v4726
        %v4749 = vcombine.high %v4733, %v4733
        %v4750 = vcombine.high %v4740, %v4740
        %v4751 = vcombine.high %v4747, %v4747
        %v4753 = vunpack.c.l.s4 1966171168
        %v4754 = vunpack.c.0.s8 %v4753
        %v4755 = vlaneseq
        %v4756 = vshrl.u32 %v4755, 7
        %v4757 = vsub.s32 %v4754, %v4756
        %v4758 = vrot.slane %v4700, %v4757
        %v4760 = vunpack.c.l.s4 1966171168
        %v4761 = vunpack.c.0.s8 %v4760
        %v4762 = vlaneseq
        %v4763 = vshrl.u32 %v4762, 7
        %v4764 = vsub.s32 %v4761, %v4763
        %v4765 = vrot.slane %v4758, %v4764
        %v4766 = vcombine.low %v4726, %v4740
        %v4768 = vunpack.c.l.s4 1966171168
        %v4769 = vunpack.c.0.s8 %v4768
        %v4770 = vlaneseq
        %v4771 = vshrl.u32 %v4770, 7
        %v4772 = vsub.s32 %v4769, %v4771
        %v4773 = vrot.slane %v4766, %v4772
        %v4775 = vunpack.c.l.s4 1966171168
        %v4776 = vunpack.c.0.s8 %v4775
        %v4777 = vlaneseq
        %v4778 = vshrl.u32 %v4777, 7
        %v4779 = vsub.s32 %v4776, %v4778
        %v4780 = vrot.slane %v4748, %v4779
        %v4781 = vcombine.low %v4773, %v4780
        %v4783 = vunpack.c.l.s4 1966171168
        %v4784 = vunpack.c.0.s8 %v4783
        %v4785 = vlaneseq
        %v4786 = vshrl.u32 %v4785, 7
        %v4787 = vsub.s32 %v4784, %v4786
        %v4788 = vrot.slane %v4781, %v4787
        %v4789 = vcombine.low %v4750, %v4733
        %v4791 = vunpack.c.l.s4 1966171168
        %v4792 = vunpack.c.0.s8 %v4791
        %v4793 = vlaneseq
        %v4794 = vshrl.u32 %v4793, 7
        %v4795 = vsub.s32 %v4792, %v4794
        %v4796 = vrot.slane %v4789, %v4795
        %v4798 = vunpack.c.l.s4 1966171168
        %v4799 = vunpack.c.0.s8 %v4798
        %v4800 = vlaneseq
        %v4801 = vshrl.u32 %v4800, 7
        %v4802 = vsub.s32 %v4799, %v4801
        %v4803 = vrot.slane %v4747, %v4802
        %v4804 = vcombine.low %v4796, %v4803
        %v4806 = vunpack.c.l.s4 1966171168
        %v4807 = vunpack.c.0.s8 %v4806
        %v4808 = vlaneseq
        %v4809 = vshrl.u32 %v4808, 7
        %v4810 = vsub.s32 %v4807, %v4809
        %v4811 = vrot.slane %v4804, %v4810
        %v4812 = vcombine.low %v4749, %v4751
        %v4814 = vunpack.c.l.s4 1966171168
        %v4815 = vunpack.c.0.s8 %v4814
        %v4816 = vlaneseq
        %v4817 = vshrl.u32 %v4816, 7
        %v4818 = vsub.s32 %v4815, %v4817
        %v4819 = vrot.slane %v4812, %v4818
        %v4821 = vunpack.c.l.s4 1966171168
        %v4822 = vunpack.c.0.s8 %v4821
        %v4823 = vlaneseq
        %v4824 = vshrl.u32 %v4823, 7
        %v4825 = vsub.s32 %v4822, %v4824
        %v4826 = vrot.slane %v4765, %v4825
        %v4827 = vcombine.low %v4819, %v4826
        %v4829 = vunpack.c.l.s4 1966171168
        %v4830 = vunpack.c.0.s8 %v4829
        %v4831 = vlaneseq
        %v4832 = vshrl.u32 %v4831, 7
        %v4833 = vsub.s32 %v4830, %v4832
        %v4834 = vrot.slane %v4827, %v4833
        %v4838 = vpack.c.bf16 %v4788, %v4788
        %v4839 = vpack.c.bf16 %v4811, %v4811
        %v4840 = vpack.c.bf16 %v4834, %v4834
        %vm4841 = vcmask 1041408
        %vm4842 = vsmask.f32 1280
        %vm4843 = vmand %vm4841, %vm4842
        %v4844 = vld [vmem:[#allocation3] sm:$0x3]
        %v4845 = vsel %vm4843, %v4838, %v4844
        %4846 = vst [vmem:[#allocation3] sm:$0x3] %v4845
        %v4847 = vld [vmem:[#allocation3 + $0x2] sm:$0x3]
        %v4848 = vsel %vm4843, %v4839, %v4847
        %4849 = vst [vmem:[#allocation3 + $0x2] sm:$0x3] %v4848
        %v4850 = vld [vmem:[#allocation3 + $0x4] sm:$0x3]
        %v4851 = vsel %vm4843, %v4840, %v4850
        %4852 = vst [vmem:[#allocation3 + $0x4] sm:$0x3] %v4851
        %v4853 = vld [vmem:[#allocation3] sm:$0x1]
        %v4854 = vld [vmem:[%s5] sm:$0xf]
        %v4855 = vld [vmem:[%s5 + $0x4] sm:$0xf]
        %v4856 = vld [vmem:[%s5 + $0x8] sm:$0xf]
        %v4857 = vld [vmem:[%s5 + $0xc] sm:$0xf]
        %v4858 = vld [vmem:[%s5 + $0x10] sm:$0xf]
        %v4859 = vld [vmem:[%s5 + $0x14] sm:$0xf]
        %v4860 = vld [vmem:[%s5 + $0x18] sm:$0xf]
        %v4861 = vld [vmem:[%s5 + $0x1c] sm:$0xf]
        %v4862 = vld [vmem:[%s5 + $0x20] sm:$0xf]
        %v4863 = vld [vmem:[%s5 + $0x24] sm:$0xf]
        %v4864 = vld [vmem:[%s5 + $0x28] sm:$0xf]
        %v4865 = vld [vmem:[%s5 + $0x2c] sm:$0xf]
        %v4866 = vld [vmem:[%s5 + $0x30] sm:$0xf]
        %v4867 = vld [vmem:[%s5 + $0x34] sm:$0xf]
        %v4868 = vld [vmem:[%s5 + $0x38] sm:$0xf]
        %v4869 = vld [vmem:[%s5 + $0x3c] sm:$0xf]
        %s4870 = scalar_lea.vmem %s5, 64
        %v4871 = vld [vmem:[%s4870] sm:$0xf]
        %v4872 = vld [vmem:[%s4870 + $0x4] sm:$0xf]
        %v4873 = vld [vmem:[%s4870 + $0x8] sm:$0xf]
        %v4874 = vld [vmem:[%s4870 + $0xc] sm:$0xf]
        %v4875 = vld [vmem:[%s4870 + $0x10] sm:$0xf]
        %v4876 = vld [vmem:[%s4870 + $0x14] sm:$0xf]
        %v4877 = vld [vmem:[%s4870 + $0x18] sm:$0xf]
        %v4878 = vld [vmem:[%s4870 + $0x1c] sm:$0xf]
        %v4879 = vld [vmem:[%s4870 + $0x20] sm:$0xf]
        %v4880 = vld [vmem:[%s4870 + $0x24] sm:$0xf]
        %v4881 = vld [vmem:[%s4870 + $0x28] sm:$0xf]
        %v4882 = vld [vmem:[%s4870 + $0x2c] sm:$0xf]
        %v4883 = vld [vmem:[%s4870 + $0x30] sm:$0xf]
        %v4884 = vld [vmem:[%s4870 + $0x34] sm:$0xf]
        %v4885 = vld [vmem:[%s4870 + $0x38] sm:$0xf]
        %v4886 = vld [vmem:[%s4870 + $0x3c] sm:$0xf]
        %v4889 = vunpack.c.l.s4 1983009808
        %v4890 = vunpack.c.0.s8 %v4889
        %v4891 = vlaneseq
        %v4892 = vshrl.u32 %v4891, 7
        %v4893 = vsub.s32 %v4890, %v4892
        %v4894 = vrot.slane %v4853, %v4893
        %v4896 = vshrl.u32 %v4894, 16
        %v4915 = vunpack.c.l.b16 %v4871
        %v4916 = vunpack.c.l.b16 %v4872
        %v4917 = vunpack.c.l.b16 %v4873
        %v4918 = vunpack.c.l.b16 %v4874
        %v4919 = vunpack.c.l.b16 %v4875
        %v4920 = vunpack.c.l.b16 %v4876
        %v4921 = vunpack.c.l.b16 %v4877
        %v4922 = vunpack.c.l.b16 %v4878
        %v4923 = vunpack.c.l.b16 %v4879
        %v4924 = vunpack.c.l.b16 %v4880
        %v4925 = vunpack.c.l.b16 %v4881
        %v4926 = vunpack.c.l.b16 %v4882
        %v4927 = vunpack.c.l.b16 %v4883
        %v4928 = vunpack.c.l.b16 %v4884
        %v4929 = vunpack.c.l.b16 %v4885
        %v4930 = vunpack.c.l.b16 %v4886
        %v4931 = vpack.c.b16 %v4916, %v4915
        %v4932 = vpack.c.b16 %v4918, %v4917
        %v4933 = vpack.c.b16 %v4920, %v4919
        %v4934 = vpack.c.b16 %v4922, %v4921
        %v4935 = vpack.c.b16 %v4924, %v4923
        %v4936 = vpack.c.b16 %v4926, %v4925
        %v4937 = vpack.c.b16 %v4928, %v4927
        %v4938 = vpack.c.b16 %v4930, %v4929
        %4947 = vmatprep.subr.bf16.mxu0 0
        %4948 = vmatpush1.bf16.msra.mxu0 %v4938
        %4949 = vmatprep.subr.bf16.mxu0 0
        %4950 = vmatpush1.bf16.msra.mxu0 %v4937
        %4951 = vmatprep.subr.bf16.mxu0 0
        %4952 = vmatpush1.bf16.msra.mxu0 %v4936
        %4953 = vmatprep.subr.bf16.mxu0 0
        %4954 = vmatpush1.bf16.msra.mxu0 %v4935
        %4955 = vmatprep.subr.bf16.mxu0 0
        %4956 = vmatpush1.bf16.msra.mxu0 %v4934
        %4957 = vmatprep.subr.bf16.mxu0 0
        %4958 = vmatpush1.bf16.msra.mxu0 %v4933
        %4959 = vmatprep.subr.bf16.mxu0 0
        %4960 = vmatpush1.bf16.msra.mxu0 %v4932
        %4961 = vmatprep.subr.bf16.mxu0 0
        %4962 = vmatpush1.bf16.msra.mxu0 %v4931
        %4963 = vmatprep.subr.bf16.mxu0 0
        %4964 = vmatpush2.bf16.msra.mxu0 0
        %4965 = vmatprep.subr.bf16.mxu0 0
        %4966 = vmatpush2.bf16.msra.mxu0 0
        %4967 = vmatprep.subr.bf16.mxu0 0
        %4968 = vmatpush2.bf16.msra.mxu0 0
        %4969 = vmatprep.subr.bf16.mxu0 0
        %4970 = vmatpush2.bf16.msra.mxu0 0
        %4971 = vmatprep.subr.bf16.mxu0 0
        %4972 = vmatpush2.bf16.msra.mxu0 0
        %4973 = vmatprep.subr.bf16.mxu0 0
        %4974 = vmatpush2.bf16.msra.mxu0 0
        %4975 = vmatprep.subr.bf16.mxu0 0
        %4976 = vmatpush2.bf16.msra.mxu0 0
        %4977 = vmatprep.subr.bf16.mxu0 0
        %4978 = vmatpush2.bf16.msra.mxu0 0
        %4979 = vmatprep.mubr.bf16.mxu0 0
        %4980 = vmatmul.mubr.bf16.gmra.mxu0 %v4896
        %v4981 = vpop.f32.mrf.mxu0
        %v4982 = vadd.f32 0.0, %v4981
        %v4983 = vpop.f32.mrf.mxu0
        %v4984 = vpop.f32.mrf.mxu0
        %v4985 = vpop.f32.mrf.mxu0
        %4986 = vdwg.mxu0
        %v5003 = vunpack.c.l.b16 %v4854
        %v5004 = vunpack.c.l.b16 %v4855
        %v5005 = vunpack.c.l.b16 %v4856
        %v5006 = vunpack.c.l.b16 %v4857
        %v5007 = vunpack.c.l.b16 %v4858
        %v5008 = vunpack.c.l.b16 %v4859
        %v5009 = vunpack.c.l.b16 %v4860
        %v5010 = vunpack.c.l.b16 %v4861
        %v5011 = vunpack.c.l.b16 %v4862
        %v5012 = vunpack.c.l.b16 %v4863
        %v5013 = vunpack.c.l.b16 %v4864
        %v5014 = vunpack.c.l.b16 %v4865
        %v5015 = vunpack.c.l.b16 %v4866
        %v5016 = vunpack.c.l.b16 %v4867
        %v5017 = vunpack.c.l.b16 %v4868
        %v5018 = vunpack.c.l.b16 %v4869
        %v5019 = vpack.c.b16 %v5004, %v5003
        %v5020 = vpack.c.b16 %v5006, %v5005
        %v5021 = vpack.c.b16 %v5008, %v5007
        %v5022 = vpack.c.b16 %v5010, %v5009
        %v5023 = vpack.c.b16 %v5012, %v5011
        %v5024 = vpack.c.b16 %v5014, %v5013
        %v5025 = vpack.c.b16 %v5016, %v5015
        %v5026 = vpack.c.b16 %v5018, %v5017
        %5035 = vmatprep.subr.bf16.mxu0 0
        %5036 = vmatpush1.bf16.msra.mxu0 %v5026
        %5037 = vmatprep.subr.bf16.mxu0 0
        %5038 = vmatpush1.bf16.msra.mxu0 %v5025
        %5039 = vmatprep.subr.bf16.mxu0 0
        %5040 = vmatpush1.bf16.msra.mxu0 %v5024
        %5041 = vmatprep.subr.bf16.mxu0 0
        %5042 = vmatpush1.bf16.msra.mxu0 %v5023
        %5043 = vmatprep.subr.bf16.mxu0 0
        %5044 = vmatpush1.bf16.msra.mxu0 %v5022
        %5045 = vmatprep.subr.bf16.mxu0 0
        %5046 = vmatpush1.bf16.msra.mxu0 %v5021
        %5047 = vmatprep.subr.bf16.mxu0 0
        %5048 = vmatpush1.bf16.msra.mxu0 %v5020
        %5049 = vmatprep.subr.bf16.mxu0 0
        %5050 = vmatpush1.bf16.msra.mxu0 %v5019
        %5051 = vmatprep.subr.bf16.mxu0 0
        %5052 = vmatpush2.bf16.msra.mxu0 0
        %5053 = vmatprep.subr.bf16.mxu0 0
        %5054 = vmatpush2.bf16.msra.mxu0 0
        %5055 = vmatprep.subr.bf16.mxu0 0
        %5056 = vmatpush2.bf16.msra.mxu0 0
        %5057 = vmatprep.subr.bf16.mxu0 0
        %5058 = vmatpush2.bf16.msra.mxu0 0
        %5059 = vmatprep.subr.bf16.mxu0 0
        %5060 = vmatpush2.bf16.msra.mxu0 0
        %5061 = vmatprep.subr.bf16.mxu0 0
        %5062 = vmatpush2.bf16.msra.mxu0 0
        %5063 = vmatprep.subr.bf16.mxu0 0
        %5064 = vmatpush2.bf16.msra.mxu0 0
        %5065 = vmatprep.subr.bf16.mxu0 0
        %5066 = vmatpush2.bf16.msra.mxu0 0
        %5067 = vmatprep.mubr.bf16.mxu0 0
        %5068 = vmatmul.mubr.bf16.gmra.mxu0 %v4853
        %v5069 = vpop.f32.mrf.mxu0
        %v5070 = vadd.f32 %v4982, %v5069
        %v5071 = vpop.f32.mrf.mxu0
        %v5072 = vpop.f32.mrf.mxu0
        %v5073 = vpop.f32.mrf.mxu0
        %5074 = vdwg.mxu0
        %v5075 = vld [vmem:[#allocation3] sm:$0x2]
        %s5076 = scalar_lea.vmem %s5, 128
        %v5077 = vld [vmem:[%s5076] sm:$0xf]
        %v5078 = vld [vmem:[%s5076 + $0x4] sm:$0xf]
        %v5079 = vld [vmem:[%s5076 + $0x8] sm:$0xf]
        %v5080 = vld [vmem:[%s5076 + $0xc] sm:$0xf]
        %v5081 = vld [vmem:[%s5076 + $0x10] sm:$0xf]
        %v5082 = vld [vmem:[%s5076 + $0x14] sm:$0xf]
        %v5083 = vld [vmem:[%s5076 + $0x18] sm:$0xf]
        %v5084 = vld [vmem:[%s5076 + $0x1c] sm:$0xf]
        %v5085 = vld [vmem:[%s5076 + $0x20] sm:$0xf]
        %v5086 = vld [vmem:[%s5076 + $0x24] sm:$0xf]
        %v5087 = vld [vmem:[%s5076 + $0x28] sm:$0xf]
        %v5088 = vld [vmem:[%s5076 + $0x2c] sm:$0xf]
        %v5089 = vld [vmem:[%s5076 + $0x30] sm:$0xf]
        %v5090 = vld [vmem:[%s5076 + $0x34] sm:$0xf]
        %v5091 = vld [vmem:[%s5076 + $0x38] sm:$0xf]
        %v5092 = vld [vmem:[%s5076 + $0x3c] sm:$0xf]
        %v5095 = vunpack.c.l.s4 1983009808
        %v5096 = vunpack.c.0.s8 %v5095
        %v5097 = vlaneseq
        %v5098 = vshrl.u32 %v5097, 7
        %v5099 = vsub.s32 %v5096, %v5098
        %v5100 = vrot.slane %v5075, %v5099
        %v5101 = vrot.slane %v5100, 1
        %v5119 = vunpack.c.l.b16 %v5077
        %v5120 = vunpack.c.l.b16 %v5078
        %v5121 = vunpack.c.l.b16 %v5079
        %v5122 = vunpack.c.l.b16 %v5080
        %v5123 = vunpack.c.l.b16 %v5081
        %v5124 = vunpack.c.l.b16 %v5082
        %v5125 = vunpack.c.l.b16 %v5083
        %v5126 = vunpack.c.l.b16 %v5084
        %v5127 = vunpack.c.l.b16 %v5085
        %v5128 = vunpack.c.l.b16 %v5086
        %v5129 = vunpack.c.l.b16 %v5087
        %v5130 = vunpack.c.l.b16 %v5088
        %v5131 = vunpack.c.l.b16 %v5089
        %v5132 = vunpack.c.l.b16 %v5090
        %v5133 = vunpack.c.l.b16 %v5091
        %v5134 = vunpack.c.l.b16 %v5092
        %v5135 = vpack.c.b16 %v5120, %v5119
        %v5136 = vpack.c.b16 %v5122, %v5121
        %v5137 = vpack.c.b16 %v5124, %v5123
        %v5138 = vpack.c.b16 %v5126, %v5125
        %v5139 = vpack.c.b16 %v5128, %v5127
        %v5140 = vpack.c.b16 %v5130, %v5129
        %v5141 = vpack.c.b16 %v5132, %v5131
        %v5142 = vpack.c.b16 %v5134, %v5133
        %5151 = vmatprep.subr.bf16.mxu0 0
        %5152 = vmatpush1.bf16.msra.mxu0 %v5142
        %5153 = vmatprep.subr.bf16.mxu0 0
        %5154 = vmatpush1.bf16.msra.mxu0 %v5141
        %5155 = vmatprep.subr.bf16.mxu0 0
        %5156 = vmatpush1.bf16.msra.mxu0 %v5140
        %5157 = vmatprep.subr.bf16.mxu0 0
        %5158 = vmatpush1.bf16.msra.mxu0 %v5139
        %5159 = vmatprep.subr.bf16.mxu0 0
        %5160 = vmatpush1.bf16.msra.mxu0 %v5138
        %5161 = vmatprep.subr.bf16.mxu0 0
        %5162 = vmatpush1.bf16.msra.mxu0 %v5137
        %5163 = vmatprep.subr.bf16.mxu0 0
        %5164 = vmatpush1.bf16.msra.mxu0 %v5136
        %5165 = vmatprep.subr.bf16.mxu0 0
        %5166 = vmatpush1.bf16.msra.mxu0 %v5135
        %5167 = vmatprep.subr.bf16.mxu0 0
        %5168 = vmatpush2.bf16.msra.mxu0 0
        %5169 = vmatprep.subr.bf16.mxu0 0
        %5170 = vmatpush2.bf16.msra.mxu0 0
        %5171 = vmatprep.subr.bf16.mxu0 0
        %5172 = vmatpush2.bf16.msra.mxu0 0
        %5173 = vmatprep.subr.bf16.mxu0 0
        %5174 = vmatpush2.bf16.msra.mxu0 0
        %5175 = vmatprep.subr.bf16.mxu0 0
        %5176 = vmatpush2.bf16.msra.mxu0 0
        %5177 = vmatprep.subr.bf16.mxu0 0
        %5178 = vmatpush2.bf16.msra.mxu0 0
        %5179 = vmatprep.subr.bf16.mxu0 0
        %5180 = vmatpush2.bf16.msra.mxu0 0
        %5181 = vmatprep.subr.bf16.mxu0 0
        %5182 = vmatpush2.bf16.msra.mxu0 0
        %5183 = vmatprep.mubr.bf16.mxu0 0
        %5184 = vmatmul.mubr.bf16.gmra.mxu0 %v5101
        %v5185 = vpop.f32.mrf.mxu0
        %v5186 = vadd.f32 0.0, %v5185
        %v5187 = vpop.f32.mrf.mxu0
        %v5188 = vpop.f32.mrf.mxu0
        %v5189 = vpop.f32.mrf.mxu0
        %5190 = vdwg.mxu0
        %v5191 = vadd.f32 %v5070, %v5186
        %s5192 = scalar_lea.vmem [#allocation3], 2
        %v5193 = vld [vmem:[%s5192] sm:$0x1]
        %s5194 = scalar_lea.vmem %s5, 192
        %v5195 = vld [vmem:[%s5194] sm:$0xf]
        %v5196 = vld [vmem:[%s5194 + $0x4] sm:$0xf]
        %v5197 = vld [vmem:[%s5194 + $0x8] sm:$0xf]
        %v5198 = vld [vmem:[%s5194 + $0xc] sm:$0xf]
        %v5199 = vld [vmem:[%s5194 + $0x10] sm:$0xf]
        %v5200 = vld [vmem:[%s5194 + $0x14] sm:$0xf]
        %v5201 = vld [vmem:[%s5194 + $0x18] sm:$0xf]
        %v5202 = vld [vmem:[%s5194 + $0x1c] sm:$0xf]
        %v5203 = vld [vmem:[%s5194 + $0x20] sm:$0xf]
        %v5204 = vld [vmem:[%s5194 + $0x24] sm:$0xf]
        %v5205 = vld [vmem:[%s5194 + $0x28] sm:$0xf]
        %v5206 = vld [vmem:[%s5194 + $0x2c] sm:$0xf]
        %v5207 = vld [vmem:[%s5194 + $0x30] sm:$0xf]
        %v5208 = vld [vmem:[%s5194 + $0x34] sm:$0xf]
        %v5209 = vld [vmem:[%s5194 + $0x38] sm:$0xf]
        %v5210 = vld [vmem:[%s5194 + $0x3c] sm:$0xf]
        %v5227 = vunpack.c.l.b16 %v5195
        %v5228 = vunpack.c.l.b16 %v5196
        %v5229 = vunpack.c.l.b16 %v5197
        %v5230 = vunpack.c.l.b16 %v5198
        %v5231 = vunpack.c.l.b16 %v5199
        %v5232 = vunpack.c.l.b16 %v5200
        %v5233 = vunpack.c.l.b16 %v5201
        %v5234 = vunpack.c.l.b16 %v5202
        %v5235 = vunpack.c.l.b16 %v5203
        %v5236 = vunpack.c.l.b16 %v5204
        %v5237 = vunpack.c.l.b16 %v5205
        %v5238 = vunpack.c.l.b16 %v5206
        %v5239 = vunpack.c.l.b16 %v5207
        %v5240 = vunpack.c.l.b16 %v5208
        %v5241 = vunpack.c.l.b16 %v5209
        %v5242 = vunpack.c.l.b16 %v5210
        %v5243 = vpack.c.b16 %v5228, %v5227
        %v5244 = vpack.c.b16 %v5230, %v5229
        %v5245 = vpack.c.b16 %v5232, %v5231
        %v5246 = vpack.c.b16 %v5234, %v5233
        %v5247 = vpack.c.b16 %v5236, %v5235
        %v5248 = vpack.c.b16 %v5238, %v5237
        %v5249 = vpack.c.b16 %v5240, %v5239
        %v5250 = vpack.c.b16 %v5242, %v5241
        %5259 = vmatprep.subr.bf16.mxu0 0
        %5260 = vmatpush1.bf16.msra.mxu0 %v5250
        %5261 = vmatprep.subr.bf16.mxu0 0
        %5262 = vmatpush1.bf16.msra.mxu0 %v5249
        %5263 = vmatprep.subr.bf16.mxu0 0
        %5264 = vmatpush1.bf16.msra.mxu0 %v5248
        %5265 = vmatprep.subr.bf16.mxu0 0
        %5266 = vmatpush1.bf16.msra.mxu0 %v5247
        %5267 = vmatprep.subr.bf16.mxu0 0
        %5268 = vmatpush1.bf16.msra.mxu0 %v5246
        %5269 = vmatprep.subr.bf16.mxu0 0
        %5270 = vmatpush1.bf16.msra.mxu0 %v5245
        %5271 = vmatprep.subr.bf16.mxu0 0
        %5272 = vmatpush1.bf16.msra.mxu0 %v5244
        %5273 = vmatprep.subr.bf16.mxu0 0
        %5274 = vmatpush1.bf16.msra.mxu0 %v5243
        %5275 = vmatprep.subr.bf16.mxu0 0
        %5276 = vmatpush2.bf16.msra.mxu0 0
        %5277 = vmatprep.subr.bf16.mxu0 0
        %5278 = vmatpush2.bf16.msra.mxu0 0
        %5279 = vmatprep.subr.bf16.mxu0 0
        %5280 = vmatpush2.bf16.msra.mxu0 0
        %5281 = vmatprep.subr.bf16.mxu0 0
        %5282 = vmatpush2.bf16.msra.mxu0 0
        %5283 = vmatprep.subr.bf16.mxu0 0
        %5284 = vmatpush2.bf16.msra.mxu0 0
        %5285 = vmatprep.subr.bf16.mxu0 0
        %5286 = vmatpush2.bf16.msra.mxu0 0
        %5287 = vmatprep.subr.bf16.mxu0 0
        %5288 = vmatpush2.bf16.msra.mxu0 0
        %5289 = vmatprep.subr.bf16.mxu0 0
        %5290 = vmatpush2.bf16.msra.mxu0 0
        %5291 = vmatprep.mubr.bf16.mxu0 0
        %5292 = vmatmul.mubr.bf16.gmra.mxu0 %v5193
        %v5293 = vpop.f32.mrf.mxu0
        %v5294 = vadd.f32 0.0, %v5293
        %v5295 = vpop.f32.mrf.mxu0
        %v5296 = vpop.f32.mrf.mxu0
        %v5297 = vpop.f32.mrf.mxu0
        %5298 = vdwg.mxu0
        %v5299 = vadd.f32 %v5191, %v5294
        %s5300 = scalar_lea.vmem %s5, 256
        %v5301 = vld [vmem:[%s5300] sm:$0xf]
        %v5302 = vld [vmem:[%s5300 + $0x4] sm:$0xf]
        %v5303 = vld [vmem:[%s5300 + $0x8] sm:$0xf]
        %v5304 = vld [vmem:[%s5300 + $0xc] sm:$0xf]
        %v5305 = vld [vmem:[%s5300 + $0x10] sm:$0xf]
        %v5306 = vld [vmem:[%s5300 + $0x14] sm:$0xf]
        %v5307 = vld [vmem:[%s5300 + $0x18] sm:$0xf]
        %v5308 = vld [vmem:[%s5300 + $0x1c] sm:$0xf]
        %v5309 = vld [vmem:[%s5300 + $0x20] sm:$0xf]
        %v5310 = vld [vmem:[%s5300 + $0x24] sm:$0xf]
        %v5311 = vld [vmem:[%s5300 + $0x28] sm:$0xf]
        %v5312 = vld [vmem:[%s5300 + $0x2c] sm:$0xf]
        %v5313 = vld [vmem:[%s5300 + $0x30] sm:$0xf]
        %v5314 = vld [vmem:[%s5300 + $0x34] sm:$0xf]
        %v5315 = vld [vmem:[%s5300 + $0x38] sm:$0xf]
        %v5316 = vld [vmem:[%s5300 + $0x3c] sm:$0xf]
        %v5319 = vunpack.c.l.s4 1983009808
        %v5320 = vunpack.c.0.s8 %v5319
        %v5321 = vlaneseq
        %v5322 = vshrl.u32 %v5321, 7
        %v5323 = vsub.s32 %v5320, %v5322
        %v5324 = vrot.slane %v5193, %v5323
        %v5326 = vshrl.u32 %v5324, 16
        %v5345 = vunpack.c.l.b16 %v5301
        %v5346 = vunpack.c.l.b16 %v5302
        %v5347 = vunpack.c.l.b16 %v5303
        %v5348 = vunpack.c.l.b16 %v5304
        %v5349 = vunpack.c.l.b16 %v5305
        %v5350 = vunpack.c.l.b16 %v5306
        %v5351 = vunpack.c.l.b16 %v5307
        %v5352 = vunpack.c.l.b16 %v5308
        %v5353 = vunpack.c.l.b16 %v5309
        %v5354 = vunpack.c.l.b16 %v5310
        %v5355 = vunpack.c.l.b16 %v5311
        %v5356 = vunpack.c.l.b16 %v5312
        %v5357 = vunpack.c.l.b16 %v5313
        %v5358 = vunpack.c.l.b16 %v5314
        %v5359 = vunpack.c.l.b16 %v5315
        %v5360 = vunpack.c.l.b16 %v5316
        %v5361 = vpack.c.b16 %v5346, %v5345
        %v5362 = vpack.c.b16 %v5348, %v5347
        %v5363 = vpack.c.b16 %v5350, %v5349
        %v5364 = vpack.c.b16 %v5352, %v5351
        %v5365 = vpack.c.b16 %v5354, %v5353
        %v5366 = vpack.c.b16 %v5356, %v5355
        %v5367 = vpack.c.b16 %v5358, %v5357
        %v5368 = vpack.c.b16 %v5360, %v5359
        %5377 = vmatprep.subr.bf16.mxu0 0
        %5378 = vmatpush1.bf16.msra.mxu0 %v5368
        %5379 = vmatprep.subr.bf16.mxu0 0
        %5380 = vmatpush1.bf16.msra.mxu0 %v5367
        %5381 = vmatprep.subr.bf16.mxu0 0
        %5382 = vmatpush1.bf16.msra.mxu0 %v5366
        %5383 = vmatprep.subr.bf16.mxu0 0
        %5384 = vmatpush1.bf16.msra.mxu0 %v5365
        %5385 = vmatprep.subr.bf16.mxu0 0
        %5386 = vmatpush1.bf16.msra.mxu0 %v5364
        %5387 = vmatprep.subr.bf16.mxu0 0
        %5388 = vmatpush1.bf16.msra.mxu0 %v5363
        %5389 = vmatprep.subr.bf16.mxu0 0
        %5390 = vmatpush1.bf16.msra.mxu0 %v5362
        %5391 = vmatprep.subr.bf16.mxu0 0
        %5392 = vmatpush1.bf16.msra.mxu0 %v5361
        %5393 = vmatprep.subr.bf16.mxu0 0
        %5394 = vmatpush2.bf16.msra.mxu0 0
        %5395 = vmatprep.subr.bf16.mxu0 0
        %5396 = vmatpush2.bf16.msra.mxu0 0
        %5397 = vmatprep.subr.bf16.mxu0 0
        %5398 = vmatpush2.bf16.msra.mxu0 0
        %5399 = vmatprep.subr.bf16.mxu0 0
        %5400 = vmatpush2.bf16.msra.mxu0 0
        %5401 = vmatprep.subr.bf16.mxu0 0
        %5402 = vmatpush2.bf16.msra.mxu0 0
        %5403 = vmatprep.subr.bf16.mxu0 0
        %5404 = vmatpush2.bf16.msra.mxu0 0
        %5405 = vmatprep.subr.bf16.mxu0 0
        %5406 = vmatpush2.bf16.msra.mxu0 0
        %5407 = vmatprep.subr.bf16.mxu0 0
        %5408 = vmatpush2.bf16.msra.mxu0 0
        %5409 = vmatprep.mubr.bf16.mxu0 0
        %5410 = vmatmul.mubr.bf16.gmra.mxu0 %v5326
        %v5411 = vpop.f32.mrf.mxu0
        %v5412 = vadd.f32 0.0, %v5411
        %v5413 = vpop.f32.mrf.mxu0
        %v5414 = vpop.f32.mrf.mxu0
        %v5415 = vpop.f32.mrf.mxu0
        %5416 = vdwg.mxu0
        %v5417 = vadd.f32 %v5299, %v5412
        %v5418 = vld [vmem:[%s5192] sm:$0x2]
        %s5419 = scalar_lea.vmem %s5, 320
        %v5420 = vld [vmem:[%s5419] sm:$0xf]
        %v5421 = vld [vmem:[%s5419 + $0x4] sm:$0xf]
        %v5422 = vld [vmem:[%s5419 + $0x8] sm:$0xf]
        %v5423 = vld [vmem:[%s5419 + $0xc] sm:$0xf]
        %v5424 = vld [vmem:[%s5419 + $0x10] sm:$0xf]
        %v5425 = vld [vmem:[%s5419 + $0x14] sm:$0xf]
        %v5426 = vld [vmem:[%s5419 + $0x18] sm:$0xf]
        %v5427 = vld [vmem:[%s5419 + $0x1c] sm:$0xf]
        %v5428 = vld [vmem:[%s5419 + $0x20] sm:$0xf]
        %v5429 = vld [vmem:[%s5419 + $0x24] sm:$0xf]
        %v5430 = vld [vmem:[%s5419 + $0x28] sm:$0xf]
        %v5431 = vld [vmem:[%s5419 + $0x2c] sm:$0xf]
        %v5432 = vld [vmem:[%s5419 + $0x30] sm:$0xf]
        %v5433 = vld [vmem:[%s5419 + $0x34] sm:$0xf]
        %v5434 = vld [vmem:[%s5419 + $0x38] sm:$0xf]
        %v5435 = vld [vmem:[%s5419 + $0x3c] sm:$0xf]
        %v5438 = vunpack.c.l.s4 1983009808
        %v5439 = vunpack.c.0.s8 %v5438
        %v5440 = vlaneseq
        %v5441 = vshrl.u32 %v5440, 7
        %v5442 = vsub.s32 %v5439, %v5441
        %v5443 = vrot.slane %v5418, %v5442
        %v5444 = vrot.slane %v5443, 1
        %v5462 = vunpack.c.l.b16 %v5420
        %v5463 = vunpack.c.l.b16 %v5421
        %v5464 = vunpack.c.l.b16 %v5422
        %v5465 = vunpack.c.l.b16 %v5423
        %v5466 = vunpack.c.l.b16 %v5424
        %v5467 = vunpack.c.l.b16 %v5425
        %v5468 = vunpack.c.l.b16 %v5426
        %v5469 = vunpack.c.l.b16 %v5427
        %v5470 = vunpack.c.l.b16 %v5428
        %v5471 = vunpack.c.l.b16 %v5429
        %v5472 = vunpack.c.l.b16 %v5430
        %v5473 = vunpack.c.l.b16 %v5431
        %v5474 = vunpack.c.l.b16 %v5432
        %v5475 = vunpack.c.l.b16 %v5433
        %v5476 = vunpack.c.l.b16 %v5434
        %v5477 = vunpack.c.l.b16 %v5435
        %v5478 = vpack.c.b16 %v5463, %v5462
        %v5479 = vpack.c.b16 %v5465, %v5464
        %v5480 = vpack.c.b16 %v5467, %v5466
        %v5481 = vpack.c.b16 %v5469, %v5468
        %v5482 = vpack.c.b16 %v5471, %v5470
        %v5483 = vpack.c.b16 %v5473, %v5472
        %v5484 = vpack.c.b16 %v5475, %v5474
        %v5485 = vpack.c.b16 %v5477, %v5476
        %5494 = vmatprep.subr.bf16.mxu0 0
        %5495 = vmatpush1.bf16.msra.mxu0 %v5485
        %5496 = vmatprep.subr.bf16.mxu0 0
        %5497 = vmatpush1.bf16.msra.mxu0 %v5484
        %5498 = vmatprep.subr.bf16.mxu0 0
        %5499 = vmatpush1.bf16.msra.mxu0 %v5483
        %5500 = vmatprep.subr.bf16.mxu0 0
        %5501 = vmatpush1.bf16.msra.mxu0 %v5482
        %5502 = vmatprep.subr.bf16.mxu0 0
        %5503 = vmatpush1.bf16.msra.mxu0 %v5481
        %5504 = vmatprep.subr.bf16.mxu0 0
        %5505 = vmatpush1.bf16.msra.mxu0 %v5480
        %5506 = vmatprep.subr.bf16.mxu0 0
        %5507 = vmatpush1.bf16.msra.mxu0 %v5479
        %5508 = vmatprep.subr.bf16.mxu0 0
        %5509 = vmatpush1.bf16.msra.mxu0 %v5478
        %5510 = vmatprep.subr.bf16.mxu0 0
        %5511 = vmatpush2.bf16.msra.mxu0 0
        %5512 = vmatprep.subr.bf16.mxu0 0
        %5513 = vmatpush2.bf16.msra.mxu0 0
        %5514 = vmatprep.subr.bf16.mxu0 0
        %5515 = vmatpush2.bf16.msra.mxu0 0
        %5516 = vmatprep.subr.bf16.mxu0 0
        %5517 = vmatpush2.bf16.msra.mxu0 0
        %5518 = vmatprep.subr.bf16.mxu0 0
        %5519 = vmatpush2.bf16.msra.mxu0 0
        %5520 = vmatprep.subr.bf16.mxu0 0
        %5521 = vmatpush2.bf16.msra.mxu0 0
        %5522 = vmatprep.subr.bf16.mxu0 0
        %5523 = vmatpush2.bf16.msra.mxu0 0
        %5524 = vmatprep.subr.bf16.mxu0 0
        %5525 = vmatpush2.bf16.msra.mxu0 0
        %5526 = vmatprep.mubr.bf16.mxu0 0
        %5527 = vmatmul.mubr.bf16.gmra.mxu0 %v5444
        %v5528 = vpop.f32.mrf.mxu0
        %v5529 = vadd.f32 0.0, %v5528
        %v5530 = vpop.f32.mrf.mxu0
        %v5531 = vpop.f32.mrf.mxu0
        %v5532 = vpop.f32.mrf.mxu0
        %5533 = vdwg.mxu0
        %v5534 = vadd.f32 %v5417, %v5529
        %s5535 = scalar_lea.vmem [#allocation3], 4
        %v5536 = vld [vmem:[%s5535] sm:$0x1]
        %s5537 = scalar_lea.vmem %s5, 384
        %v5538 = vld [vmem:[%s5537] sm:$0xf]
        %v5539 = vld [vmem:[%s5537 + $0x4] sm:$0xf]
        %v5540 = vld [vmem:[%s5537 + $0x8] sm:$0xf]
        %v5541 = vld [vmem:[%s5537 + $0xc] sm:$0xf]
        %v5542 = vld [vmem:[%s5537 + $0x10] sm:$0xf]
        %v5543 = vld [vmem:[%s5537 + $0x14] sm:$0xf]
        %v5544 = vld [vmem:[%s5537 + $0x18] sm:$0xf]
        %v5545 = vld [vmem:[%s5537 + $0x1c] sm:$0xf]
        %v5546 = vld [vmem:[%s5537 + $0x20] sm:$0xf]
        %v5547 = vld [vmem:[%s5537 + $0x24] sm:$0xf]
        %v5548 = vld [vmem:[%s5537 + $0x28] sm:$0xf]
        %v5549 = vld [vmem:[%s5537 + $0x2c] sm:$0xf]
        %v5550 = vld [vmem:[%s5537 + $0x30] sm:$0xf]
        %v5551 = vld [vmem:[%s5537 + $0x34] sm:$0xf]
        %v5552 = vld [vmem:[%s5537 + $0x38] sm:$0xf]
        %v5553 = vld [vmem:[%s5537 + $0x3c] sm:$0xf]
        %v5570 = vunpack.c.l.b16 %v5538
        %v5571 = vunpack.c.l.b16 %v5539
        %v5572 = vunpack.c.l.b16 %v5540
        %v5573 = vunpack.c.l.b16 %v5541
        %v5574 = vunpack.c.l.b16 %v5542
        %v5575 = vunpack.c.l.b16 %v5543
        %v5576 = vunpack.c.l.b16 %v5544
        %v5577 = vunpack.c.l.b16 %v5545
        %v5578 = vunpack.c.l.b16 %v5546
        %v5579 = vunpack.c.l.b16 %v5547
        %v5580 = vunpack.c.l.b16 %v5548
        %v5581 = vunpack.c.l.b16 %v5549
        %v5582 = vunpack.c.l.b16 %v5550
        %v5583 = vunpack.c.l.b16 %v5551
        %v5584 = vunpack.c.l.b16 %v5552
        %v5585 = vunpack.c.l.b16 %v5553
        %v5586 = vpack.c.b16 %v5571, %v5570
        %v5587 = vpack.c.b16 %v5573, %v5572
        %v5588 = vpack.c.b16 %v5575, %v5574
        %v5589 = vpack.c.b16 %v5577, %v5576
        %v5590 = vpack.c.b16 %v5579, %v5578
        %v5591 = vpack.c.b16 %v5581, %v5580
        %v5592 = vpack.c.b16 %v5583, %v5582
        %v5593 = vpack.c.b16 %v5585, %v5584
        %5602 = vmatprep.subr.bf16.mxu0 0
        %5603 = vmatpush1.bf16.msra.mxu0 %v5593
        %5604 = vmatprep.subr.bf16.mxu0 0
        %5605 = vmatpush1.bf16.msra.mxu0 %v5592
        %5606 = vmatprep.subr.bf16.mxu0 0
        %5607 = vmatpush1.bf16.msra.mxu0 %v5591
        %5608 = vmatprep.subr.bf16.mxu0 0
        %5609 = vmatpush1.bf16.msra.mxu0 %v5590
        %5610 = vmatprep.subr.bf16.mxu0 0
        %5611 = vmatpush1.bf16.msra.mxu0 %v5589
        %5612 = vmatprep.subr.bf16.mxu0 0
        %5613 = vmatpush1.bf16.msra.mxu0 %v5588
        %5614 = vmatprep.subr.bf16.mxu0 0
        %5615 = vmatpush1.bf16.msra.mxu0 %v5587
        %5616 = vmatprep.subr.bf16.mxu0 0
        %5617 = vmatpush1.bf16.msra.mxu0 %v5586
        %5618 = vmatprep.subr.bf16.mxu0 0
        %5619 = vmatpush2.bf16.msra.mxu0 0
        %5620 = vmatprep.subr.bf16.mxu0 0
        %5621 = vmatpush2.bf16.msra.mxu0 0
        %5622 = vmatprep.subr.bf16.mxu0 0
        %5623 = vmatpush2.bf16.msra.mxu0 0
        %5624 = vmatprep.subr.bf16.mxu0 0
        %5625 = vmatpush2.bf16.msra.mxu0 0
        %5626 = vmatprep.subr.bf16.mxu0 0
        %5627 = vmatpush2.bf16.msra.mxu0 0
        %5628 = vmatprep.subr.bf16.mxu0 0
        %5629 = vmatpush2.bf16.msra.mxu0 0
        %5630 = vmatprep.subr.bf16.mxu0 0
        %5631 = vmatpush2.bf16.msra.mxu0 0
        %5632 = vmatprep.subr.bf16.mxu0 0
        %5633 = vmatpush2.bf16.msra.mxu0 0
        %5634 = vmatprep.mubr.bf16.mxu0 0
        %5635 = vmatmul.mubr.bf16.gmra.mxu0 %v5536
        %v5636 = vpop.f32.mrf.mxu0
        %v5637 = vadd.f32 0.0, %v5636
        %v5638 = vpop.f32.mrf.mxu0
        %v5639 = vpop.f32.mrf.mxu0
        %v5640 = vpop.f32.mrf.mxu0
        %5641 = vdwg.mxu0
        %v5642 = vadd.f32 %v5534, %v5637
        %s5643 = scalar_lea.vmem %s5, 448
        %v5644 = vld [vmem:[%s5643] sm:$0xf]
        %v5645 = vld [vmem:[%s5643 + $0x4] sm:$0xf]
        %v5646 = vld [vmem:[%s5643 + $0x8] sm:$0xf]
        %v5647 = vld [vmem:[%s5643 + $0xc] sm:$0xf]
        %v5648 = vld [vmem:[%s5643 + $0x10] sm:$0xf]
        %v5649 = vld [vmem:[%s5643 + $0x14] sm:$0xf]
        %v5650 = vld [vmem:[%s5643 + $0x18] sm:$0xf]
        %v5651 = vld [vmem:[%s5643 + $0x1c] sm:$0xf]
        %v5652 = vld [vmem:[%s5643 + $0x20] sm:$0xf]
        %v5653 = vld [vmem:[%s5643 + $0x24] sm:$0xf]
        %v5654 = vld [vmem:[%s5643 + $0x28] sm:$0xf]
        %v5655 = vld [vmem:[%s5643 + $0x2c] sm:$0xf]
        %v5656 = vld [vmem:[%s5643 + $0x30] sm:$0xf]
        %v5657 = vld [vmem:[%s5643 + $0x34] sm:$0xf]
        %v5658 = vld [vmem:[%s5643 + $0x38] sm:$0xf]
        %v5659 = vld [vmem:[%s5643 + $0x3c] sm:$0xf]
        %v5662 = vunpack.c.l.s4 1983009808
        %v5663 = vunpack.c.0.s8 %v5662
        %v5664 = vlaneseq
        %v5665 = vshrl.u32 %v5664, 7
        %v5666 = vsub.s32 %v5663, %v5665
        %v5667 = vrot.slane %v5536, %v5666
        %v5669 = vshrl.u32 %v5667, 16
        %v5688 = vunpack.c.l.b16 %v5644
        %v5689 = vunpack.c.l.b16 %v5645
        %v5690 = vunpack.c.l.b16 %v5646
        %v5691 = vunpack.c.l.b16 %v5647
        %v5692 = vunpack.c.l.b16 %v5648
        %v5693 = vunpack.c.l.b16 %v5649
        %v5694 = vunpack.c.l.b16 %v5650
        %v5695 = vunpack.c.l.b16 %v5651
        %v5696 = vunpack.c.l.b16 %v5652
        %v5697 = vunpack.c.l.b16 %v5653
        %v5698 = vunpack.c.l.b16 %v5654
        %v5699 = vunpack.c.l.b16 %v5655
        %v5700 = vunpack.c.l.b16 %v5656
        %v5701 = vunpack.c.l.b16 %v5657
        %v5702 = vunpack.c.l.b16 %v5658
        %v5703 = vunpack.c.l.b16 %v5659
        %v5704 = vpack.c.b16 %v5689, %v5688
        %v5705 = vpack.c.b16 %v5691, %v5690
        %v5706 = vpack.c.b16 %v5693, %v5692
        %v5707 = vpack.c.b16 %v5695, %v5694
        %v5708 = vpack.c.b16 %v5697, %v5696
        %v5709 = vpack.c.b16 %v5699, %v5698
        %v5710 = vpack.c.b16 %v5701, %v5700
        %v5711 = vpack.c.b16 %v5703, %v5702
        %5720 = vmatprep.subr.bf16.mxu0 0
        %5721 = vmatpush1.bf16.msra.mxu0 %v5711
        %5722 = vmatprep.subr.bf16.mxu0 0
        %5723 = vmatpush1.bf16.msra.mxu0 %v5710
        %5724 = vmatprep.subr.bf16.mxu0 0
        %5725 = vmatpush1.bf16.msra.mxu0 %v5709
        %5726 = vmatprep.subr.bf16.mxu0 0
        %5727 = vmatpush1.bf16.msra.mxu0 %v5708
        %5728 = vmatprep.subr.bf16.mxu0 0
        %5729 = vmatpush1.bf16.msra.mxu0 %v5707
        %5730 = vmatprep.subr.bf16.mxu0 0
        %5731 = vmatpush1.bf16.msra.mxu0 %v5706
        %5732 = vmatprep.subr.bf16.mxu0 0
        %5733 = vmatpush1.bf16.msra.mxu0 %v5705
        %5734 = vmatprep.subr.bf16.mxu0 0
        %5735 = vmatpush1.bf16.msra.mxu0 %v5704
        %5736 = vmatprep.subr.bf16.mxu0 0
        %5737 = vmatpush2.bf16.msra.mxu0 0
        %5738 = vmatprep.subr.bf16.mxu0 0
        %5739 = vmatpush2.bf16.msra.mxu0 0
        %5740 = vmatprep.subr.bf16.mxu0 0
        %5741 = vmatpush2.bf16.msra.mxu0 0
        %5742 = vmatprep.subr.bf16.mxu0 0
        %5743 = vmatpush2.bf16.msra.mxu0 0
        %5744 = vmatprep.subr.bf16.mxu0 0
        %5745 = vmatpush2.bf16.msra.mxu0 0
        %5746 = vmatprep.subr.bf16.mxu0 0
        %5747 = vmatpush2.bf16.msra.mxu0 0
        %5748 = vmatprep.subr.bf16.mxu0 0
        %5749 = vmatpush2.bf16.msra.mxu0 0
        %5750 = vmatprep.subr.bf16.mxu0 0
        %5751 = vmatpush2.bf16.msra.mxu0 0
        %5752 = vmatprep.mubr.bf16.mxu0 0
        %5753 = vmatmul.mubr.bf16.gmra.mxu0 %v5669
        %v5754 = vpop.f32.mrf.mxu0
        %v5755 = vadd.f32 0.0, %v5754
        %v5756 = vpop.f32.mrf.mxu0
        %v5757 = vpop.f32.mrf.mxu0
        %v5758 = vpop.f32.mrf.mxu0
        %5759 = vdwg.mxu0
        %v5760 = vadd.f32 %v5642, %v5755
        %v5761 = vld [vmem:[%s5535] sm:$0x2]
        %s5762 = scalar_lea.vmem %s5, 512
        %v5763 = vld [vmem:[%s5762] sm:$0xf]
        %v5764 = vld [vmem:[%s5762 + $0x4] sm:$0xf]
        %v5765 = vld [vmem:[%s5762 + $0x8] sm:$0xf]
        %v5766 = vld [vmem:[%s5762 + $0xc] sm:$0xf]
        %v5767 = vld [vmem:[%s5762 + $0x10] sm:$0xf]
        %v5768 = vld [vmem:[%s5762 + $0x14] sm:$0xf]
        %v5769 = vld [vmem:[%s5762 + $0x18] sm:$0xf]
        %v5770 = vld [vmem:[%s5762 + $0x1c] sm:$0xf]
        %v5771 = vld [vmem:[%s5762 + $0x20] sm:$0xf]
        %v5772 = vld [vmem:[%s5762 + $0x24] sm:$0xf]
        %v5773 = vld [vmem:[%s5762 + $0x28] sm:$0xf]
        %v5774 = vld [vmem:[%s5762 + $0x2c] sm:$0xf]
        %v5775 = vld [vmem:[%s5762 + $0x30] sm:$0xf]
        %v5776 = vld [vmem:[%s5762 + $0x34] sm:$0xf]
        %v5777 = vld [vmem:[%s5762 + $0x38] sm:$0xf]
        %v5778 = vld [vmem:[%s5762 + $0x3c] sm:$0xf]
        %v5781 = vunpack.c.l.s4 1983009808
        %v5782 = vunpack.c.0.s8 %v5781
        %v5783 = vlaneseq
        %v5784 = vshrl.u32 %v5783, 7
        %v5785 = vsub.s32 %v5782, %v5784
        %v5786 = vrot.slane %v5761, %v5785
        %v5787 = vrot.slane %v5786, 1
        %v5805 = vunpack.c.l.b16 %v5763
        %v5806 = vunpack.c.l.b16 %v5764
        %v5807 = vunpack.c.l.b16 %v5765
        %v5808 = vunpack.c.l.b16 %v5766
        %v5809 = vunpack.c.l.b16 %v5767
        %v5810 = vunpack.c.l.b16 %v5768
        %v5811 = vunpack.c.l.b16 %v5769
        %v5812 = vunpack.c.l.b16 %v5770
        %v5813 = vunpack.c.l.b16 %v5771
        %v5814 = vunpack.c.l.b16 %v5772
        %v5815 = vunpack.c.l.b16 %v5773
        %v5816 = vunpack.c.l.b16 %v5774
        %v5817 = vunpack.c.l.b16 %v5775
        %v5818 = vunpack.c.l.b16 %v5776
        %v5819 = vunpack.c.l.b16 %v5777
        %v5820 = vunpack.c.l.b16 %v5778
        %v5821 = vpack.c.b16 %v5806, %v5805
        %v5822 = vpack.c.b16 %v5808, %v5807
        %v5823 = vpack.c.b16 %v5810, %v5809
        %v5824 = vpack.c.b16 %v5812, %v5811
        %v5825 = vpack.c.b16 %v5814, %v5813
        %v5826 = vpack.c.b16 %v5816, %v5815
        %v5827 = vpack.c.b16 %v5818, %v5817
        %v5828 = vpack.c.b16 %v5820, %v5819
        %5837 = vmatprep.subr.bf16.mxu0 0
        %5838 = vmatpush1.bf16.msra.mxu0 %v5828
        %5839 = vmatprep.subr.bf16.mxu0 0
        %5840 = vmatpush1.bf16.msra.mxu0 %v5827
        %5841 = vmatprep.subr.bf16.mxu0 0
        %5842 = vmatpush1.bf16.msra.mxu0 %v5826
        %5843 = vmatprep.subr.bf16.mxu0 0
        %5844 = vmatpush1.bf16.msra.mxu0 %v5825
        %5845 = vmatprep.subr.bf16.mxu0 0
        %5846 = vmatpush1.bf16.msra.mxu0 %v5824
        %5847 = vmatprep.subr.bf16.mxu0 0
        %5848 = vmatpush1.bf16.msra.mxu0 %v5823
        %5849 = vmatprep.subr.bf16.mxu0 0
        %5850 = vmatpush1.bf16.msra.mxu0 %v5822
        %5851 = vmatprep.subr.bf16.mxu0 0
        %5852 = vmatpush1.bf16.msra.mxu0 %v5821
        %5853 = vmatprep.subr.bf16.mxu0 0
        %5854 = vmatpush2.bf16.msra.mxu0 0
        %5855 = vmatprep.subr.bf16.mxu0 0
        %5856 = vmatpush2.bf16.msra.mxu0 0
        %5857 = vmatprep.subr.bf16.mxu0 0
        %5858 = vmatpush2.bf16.msra.mxu0 0
        %5859 = vmatprep.subr.bf16.mxu0 0
        %5860 = vmatpush2.bf16.msra.mxu0 0
        %5861 = vmatprep.subr.bf16.mxu0 0
        %5862 = vmatpush2.bf16.msra.mxu0 0
        %5863 = vmatprep.subr.bf16.mxu0 0
        %5864 = vmatpush2.bf16.msra.mxu0 0
        %5865 = vmatprep.subr.bf16.mxu0 0
        %5866 = vmatpush2.bf16.msra.mxu0 0
        %5867 = vmatprep.subr.bf16.mxu0 0
        %5868 = vmatpush2.bf16.msra.mxu0 0
        %5869 = vmatprep.mubr.bf16.mxu0 0
        %5870 = vmatmul.mubr.bf16.gmra.mxu0 %v5787
        %v5871 = vpop.f32.mrf.mxu0
        %v5872 = vadd.f32 0.0, %v5871
        %v5873 = vpop.f32.mrf.mxu0
        %v5874 = vpop.f32.mrf.mxu0
        %v5875 = vpop.f32.mrf.mxu0
        %5876 = vdwg.mxu0
        %v5877 = vadd.f32 %v5760, %v5872
        %v5878 = vld [vmem:[%s6] sm:$0x1]
        %v5879 = vadd.f32 %v5877, %v5878
        %v5880 = vmax.f32 %v5879, 0.0
        %s5881 = scalar_lea.vmem [#allocation4], %s392
        %vm5882 = vcmask 516096
        %5883 = vst.msk [vmem:[%s5881] sm:$0x1] %vm5882, %v5880
      $region69: #{_lambda_.1} parent=63 // loop_footer
        %s396 = sadd.s32 1, %s392
      $region70: #{_lambda_.1} parent=63 // loop_footer_branch
        %391 = sbr.rel target = $region66
      $region71: #{_lambda_.1} parent=63 // loop_exit
        _
      %v5884 = vld [vmem:[#allocation4] sm:$0xff]
      %v5885 = vpack.c.bf16 %v5884, %v5884
      %v5886 = vld [vmem:[%s7] sm:$0xff]
      %v5887 = vld [vmem:[%s7 + $0x8] sm:$0xff]
      %v5888 = vld [vmem:[%s7 + $0x10] sm:$0xff]
      %v5889 = vld [vmem:[%s7 + $0x18] sm:$0xff]
      %v5890 = vld [vmem:[%s7 + $0x20] sm:$0xff]
      %v5891 = vld [vmem:[%s7 + $0x28] sm:$0xff]
      %v5892 = vld [vmem:[%s7 + $0x30] sm:$0xff]
      %v5893 = vld [vmem:[%s7 + $0x38] sm:$0xff]
      %v5894 = vld [vmem:[%s7 + $0x40] sm:$0xff]
      %v5895 = vld [vmem:[%s7 + $0x48] sm:$0xff]
      %v5896 = vld [vmem:[%s7 + $0x50] sm:$0xff]
      %v5897 = vld [vmem:[%s7 + $0x58] sm:$0xff]
      %v5898 = vld [vmem:[%s7 + $0x60] sm:$0xff]
      %v5899 = vld [vmem:[%s7 + $0x68] sm:$0xff]
      %v5900 = vld [vmem:[%s7 + $0x70] sm:$0xff]
      %v5901 = vld [vmem:[%s7 + $0x78] sm:$0xff]
      %v5902 = vld [vmem:[%s8] sm:$0xf]
      %v5904 = vlaneseq
      %v5905 = vshrl.u32 %v5904, 7
      %v5906 = vsub.s32 0, %v5905
      %v5907 = vrot.slane %v5902, %v5906
      %v5908 = vlaneseq
      %v5909 = vshrl.u32 %v5908, 7
      %v5910 = vsub.s32 1, %v5909
      %v5911 = vrot.slane %v5902, %v5910
      %v5912 = vlaneseq
      %v5913 = vshrl.u32 %v5912, 7
      %v5914 = vsub.s32 2, %v5913
      %v5915 = vrot.slane %v5902, %v5914
      %v5916 = vlaneseq
      %v5917 = vshrl.u32 %v5916, 7
      %v5918 = vsub.s32 3, %v5917
      %v5919 = vrot.slane %v5902, %v5918
      %v5940 = vunpack.c.l.b16 %v5886
      %v5941 = vunpack.c.h.b16 %v5886
      %v5942 = vunpack.c.l.b16 %v5887
      %v5943 = vunpack.c.h.b16 %v5887
      %v5944 = vunpack.c.l.b16 %v5888
      %v5945 = vunpack.c.h.b16 %v5888
      %v5946 = vunpack.c.l.b16 %v5889
      %v5947 = vunpack.c.h.b16 %v5889
      %v5948 = vunpack.c.l.b16 %v5890
      %v5949 = vunpack.c.h.b16 %v5890
      %v5950 = vunpack.c.l.b16 %v5891
      %v5951 = vunpack.c.h.b16 %v5891
      %v5952 = vunpack.c.l.b16 %v5892
      %v5953 = vunpack.c.h.b16 %v5892
      %v5954 = vunpack.c.l.b16 %v5893
      %v5955 = vunpack.c.h.b16 %v5893
      %v5956 = vunpack.c.l.b16 %v5894
      %v5957 = vunpack.c.h.b16 %v5894
      %v5958 = vunpack.c.l.b16 %v5895
      %v5959 = vunpack.c.h.b16 %v5895
      %v5960 = vunpack.c.l.b16 %v5896
      %v5961 = vunpack.c.h.b16 %v5896
      %v5962 = vunpack.c.l.b16 %v5897
      %v5963 = vunpack.c.h.b16 %v5897
      %v5964 = vunpack.c.l.b16 %v5898
      %v5965 = vunpack.c.h.b16 %v5898
      %v5966 = vunpack.c.l.b16 %v5899
      %v5967 = vunpack.c.h.b16 %v5899
      %v5968 = vunpack.c.l.b16 %v5900
      %v5969 = vunpack.c.h.b16 %v5900
      %v5970 = vunpack.c.l.b16 %v5901
      %v5971 = vunpack.c.h.b16 %v5901
      %v5972 = vpack.c.b16 %v5944, %v5940
      %v5973 = vpack.c.b16 %v5945, %v5941
      %v5974 = vpack.c.b16 %v5946, %v5942
      %v5975 = vpack.c.b16 %v5947, %v5943
      %v5976 = vpack.c.b16 %v5952, %v5948
      %v5977 = vpack.c.b16 %v5953, %v5949
      %v5978 = vpack.c.b16 %v5954, %v5950
      %v5979 = vpack.c.b16 %v5955, %v5951
      %v5980 = vpack.c.b16 %v5960, %v5956
      %v5981 = vpack.c.b16 %v5961, %v5957
      %v5982 = vpack.c.b16 %v5962, %v5958
      %v5983 = vpack.c.b16 %v5963, %v5959
      %v5984 = vpack.c.b16 %v5968, %v5964
      %v5985 = vpack.c.b16 %v5969, %v5965
      %v5986 = vpack.c.b16 %v5970, %v5966
      %v5987 = vpack.c.b16 %v5971, %v5967
      %vm6004 = vcmask 523264
      %v6006 = vsel %vm6004, %v5885, 0
      %6008 = vmatprep.subr.bf16.mxu0 0
      %6009 = vmatpush1.bf16.msra.mxu0 0
      %6010 = vmatprep.subr.bf16.mxu0 0
      %6011 = vmatpush1.bf16.msra.mxu0 0
      %6012 = vmatprep.subr.bf16.mxu0 0
      %6013 = vmatpush1.bf16.msra.mxu0 0
      %6014 = vmatprep.subr.bf16.mxu0 0
      %6015 = vmatpush1.bf16.msra.mxu0 0
      %6016 = vmatprep.subr.bf16.mxu0 %v5985
      %6017 = vmatpush1.bf16.msra.mxu0 %v5984
      %6018 = vmatprep.subr.bf16.mxu0 %v5981
      %6019 = vmatpush1.bf16.msra.mxu0 %v5980
      %6020 = vmatprep.subr.bf16.mxu0 %v5977
      %6021 = vmatpush1.bf16.msra.mxu0 %v5976
      %6022 = vmatprep.subr.bf16.mxu0 %v5973
      %6023 = vmatpush1.bf16.msra.mxu0 %v5972
      %6024 = vmatprep.subr.bf16.mxu0 0
      %6025 = vmatpush2.bf16.msra.mxu0 0
      %6026 = vmatprep.subr.bf16.mxu0 0
      %6027 = vmatpush2.bf16.msra.mxu0 0
      %6028 = vmatprep.subr.bf16.mxu0 0
      %6029 = vmatpush2.bf16.msra.mxu0 0
      %6030 = vmatprep.subr.bf16.mxu0 0
      %6031 = vmatpush2.bf16.msra.mxu0 0
      %6032 = vmatprep.subr.bf16.mxu0 0
      %6033 = vmatpush2.bf16.msra.mxu0 0
      %6034 = vmatprep.subr.bf16.mxu0 0
      %6035 = vmatpush2.bf16.msra.mxu0 0
      %6036 = vmatprep.subr.bf16.mxu0 0
      %6037 = vmatpush2.bf16.msra.mxu0 0
      %6038 = vmatprep.subr.bf16.mxu0 0
      %6039 = vmatpush2.bf16.msra.mxu0 0
      %6040 = vmatprep.mubr.bf16.mxu0 0
      %6041 = vmatmul.mubr.bf16.gmra.mxu0 %v6006
      %v6042 = vpop.f32.mrf.mxu0
      %v6043 = vadd.f32 %v5907, %v6042
      %v6044 = vpop.f32.mrf.mxu0
      %v6045 = vadd.f32 %v5911, %v6044
      %v6046 = vpop.f32.mrf.mxu0
      %v6047 = vpop.f32.mrf.mxu0
      %6048 = vdwg.mxu0
      %6049 = vmatprep.subr.bf16.mxu0 0
      %6050 = vmatpush1.bf16.msra.mxu0 0
      %6051 = vmatprep.subr.bf16.mxu0 0
      %6052 = vmatpush1.bf16.msra.mxu0 0
      %6053 = vmatprep.subr.bf16.mxu0 0
      %6054 = vmatpush1.bf16.msra.mxu0 0
      %6055 = vmatprep.subr.bf16.mxu0 0
      %6056 = vmatpush1.bf16.msra.mxu0 0
      %6057 = vmatprep.subr.bf16.mxu0 %v5987
      %6058 = vmatpush1.bf16.msra.mxu0 %v5986
      %6059 = vmatprep.subr.bf16.mxu0 %v5983
      %6060 = vmatpush1.bf16.msra.mxu0 %v5982
      %6061 = vmatprep.subr.bf16.mxu0 %v5979
      %6062 = vmatpush1.bf16.msra.mxu0 %v5978
      %6063 = vmatprep.subr.bf16.mxu0 %v5975
      %6064 = vmatpush1.bf16.msra.mxu0 %v5974
      %6065 = vmatprep.subr.bf16.mxu0 0
      %6066 = vmatpush2.bf16.msra.mxu0 0
      %6067 = vmatprep.subr.bf16.mxu0 0
      %6068 = vmatpush2.bf16.msra.mxu0 0
      %6069 = vmatprep.subr.bf16.mxu0 0
      %6070 = vmatpush2.bf16.msra.mxu0 0
      %6071 = vmatprep.subr.bf16.mxu0 0
      %6072 = vmatpush2.bf16.msra.mxu0 0
      %6073 = vmatprep.subr.bf16.mxu0 0
      %6074 = vmatpush2.bf16.msra.mxu0 0
      %6075 = vmatprep.subr.bf16.mxu0 0
      %6076 = vmatpush2.bf16.msra.mxu0 0
      %6077 = vmatprep.subr.bf16.mxu0 0
      %6078 = vmatpush2.bf16.msra.mxu0 0
      %6079 = vmatprep.subr.bf16.mxu0 0
      %6080 = vmatpush2.bf16.msra.mxu0 0
      %6081 = vmatprep.mubr.bf16.mxu0 0
      %6082 = vmatmul.mubr.bf16.gmra.mxu0 %v6006
      %v6083 = vpop.f32.mrf.mxu0
      %v6084 = vadd.f32 %v5915, %v6083
      %v6085 = vpop.f32.mrf.mxu0
      %v6086 = vadd.f32 %v5919, %v6085
      %v6087 = vpop.f32.mrf.mxu0
      %v6088 = vpop.f32.mrf.mxu0
      %6089 = vdwg.mxu0
      %v6090 = vmax.f32 %v6043, 0.0
      %v6091 = vmax.f32 %v6045, 0.0
      %v6092 = vmax.f32 %v6084, 0.0
      %v6093 = vmax.f32 %v6086, 0.0
      %v6094 = vpack.c.bf16 %v6090, %v6090
      %v6095 = vpack.c.bf16 %v6091, %v6091
      %v6096 = vpack.c.bf16 %v6092, %v6092
      %v6097 = vpack.c.bf16 %v6093, %v6093
      %v6098 = vld [vmem:[%s9] sm:$0xf]
      %v6099 = vld [vmem:[%s9 + $0x4] sm:$0xf]
      %v6100 = vld [vmem:[%s9 + $0x8] sm:$0xf]
      %v6101 = vld [vmem:[%s9 + $0xc] sm:$0xf]
      %v6102 = vld [vmem:[%s9 + $0x10] sm:$0xf]
      %v6103 = vld [vmem:[%s9 + $0x14] sm:$0xf]
      %v6104 = vld [vmem:[%s9 + $0x18] sm:$0xf]
      %v6105 = vld [vmem:[%s9 + $0x1c] sm:$0xf]
      %v6106 = vld [vmem:[%s9 + $0x20] sm:$0xf]
      %v6107 = vld [vmem:[%s9 + $0x24] sm:$0xf]
      %v6108 = vld [vmem:[%s9 + $0x28] sm:$0xf]
      %v6109 = vld [vmem:[%s9 + $0x2c] sm:$0xf]
      %v6110 = vld [vmem:[%s9 + $0x30] sm:$0xf]
      %v6111 = vld [vmem:[%s9 + $0x34] sm:$0xf]
      %v6112 = vld [vmem:[%s9 + $0x38] sm:$0xf]
      %v6113 = vld [vmem:[%s9 + $0x3c] sm:$0xf]
      %v6114 = vld [vmem:[%s9 + $0x40] sm:$0xf]
      %v6115 = vld [vmem:[%s9 + $0x44] sm:$0xf]
      %v6116 = vld [vmem:[%s9 + $0x48] sm:$0xf]
      %v6117 = vld [vmem:[%s9 + $0x4c] sm:$0xf]
      %v6118 = vld [vmem:[%s9 + $0x50] sm:$0xf]
      %v6119 = vld [vmem:[%s9 + $0x54] sm:$0xf]
      %v6120 = vld [vmem:[%s9 + $0x58] sm:$0xf]
      %v6121 = vld [vmem:[%s9 + $0x5c] sm:$0xf]
      %v6122 = vld [vmem:[%s9 + $0x60] sm:$0xf]
      %v6123 = vld [vmem:[%s9 + $0x64] sm:$0xf]
      %v6124 = vld [vmem:[%s9 + $0x68] sm:$0xf]
      %v6125 = vld [vmem:[%s9 + $0x6c] sm:$0xf]
      %v6126 = vld [vmem:[%s9 + $0x70] sm:$0xf]
      %v6127 = vld [vmem:[%s9 + $0x74] sm:$0xf]
      %v6128 = vld [vmem:[%s9 + $0x78] sm:$0xf]
      %v6129 = vld [vmem:[%s9 + $0x7c] sm:$0xf]
      %v6130 = vld [vmem:[%s9 + $0x80] sm:$0xf]
      %v6131 = vld [vmem:[%s9 + $0x84] sm:$0xf]
      %v6132 = vld [vmem:[%s9 + $0x88] sm:$0xf]
      %v6133 = vld [vmem:[%s9 + $0x8c] sm:$0xf]
      %v6134 = vld [vmem:[%s9 + $0x90] sm:$0xf]
      %v6135 = vld [vmem:[%s9 + $0x94] sm:$0xf]
      %v6136 = vld [vmem:[%s9 + $0x98] sm:$0xf]
      %v6137 = vld [vmem:[%s9 + $0x9c] sm:$0xf]
      %v6138 = vld [vmem:[%s9 + $0xa0] sm:$0xf]
      %v6139 = vld [vmem:[%s9 + $0xa4] sm:$0xf]
      %v6140 = vld [vmem:[%s9 + $0xa8] sm:$0xf]
      %v6141 = vld [vmem:[%s9 + $0xac] sm:$0xf]
      %v6142 = vld [vmem:[%s9 + $0xb0] sm:$0xf]
      %v6143 = vld [vmem:[%s9 + $0xb4] sm:$0xf]
      %v6144 = vld [vmem:[%s9 + $0xb8] sm:$0xf]
      %v6145 = vld [vmem:[%s9 + $0xbc] sm:$0xf]
      %v6146 = vld [vmem:[%s9 + $0xc0] sm:$0xf]
      %v6147 = vld [vmem:[%s9 + $0xc4] sm:$0xf]
      %v6148 = vld [vmem:[%s9 + $0xc8] sm:$0xf]
      %v6149 = vld [vmem:[%s9 + $0xcc] sm:$0xf]
      %v6150 = vld [vmem:[%s9 + $0xd0] sm:$0xf]
      %v6151 = vld [vmem:[%s9 + $0xd4] sm:$0xf]
      %v6152 = vld [vmem:[%s9 + $0xd8] sm:$0xf]
      %v6153 = vld [vmem:[%s9 + $0xdc] sm:$0xf]
      %v6154 = vld [vmem:[%s9 + $0xe0] sm:$0xf]
      %v6155 = vld [vmem:[%s9 + $0xe4] sm:$0xf]
      %v6156 = vld [vmem:[%s9 + $0xe8] sm:$0xf]
      %v6157 = vld [vmem:[%s9 + $0xec] sm:$0xf]
      %v6158 = vld [vmem:[%s9 + $0xf0] sm:$0xf]
      %v6159 = vld [vmem:[%s9 + $0xf4] sm:$0xf]
      %v6160 = vld [vmem:[%s9 + $0xf8] sm:$0xf]
      %v6161 = vld [vmem:[%s9 + $0xfc] sm:$0xf]
      %v6162 = vld [vmem:[%s10] sm:$0x1]
      %v6164 = vlaneseq
      %v6165 = vshrl.u32 %v6164, 7
      %v6166 = vsub.s32 0, %v6165
      %v6167 = vrot.slane %v6162, %v6166
      %v6233 = vunpack.c.l.b16 %v6098
      %v6234 = vunpack.c.l.b16 %v6099
      %v6235 = vunpack.c.l.b16 %v6100
      %v6236 = vunpack.c.l.b16 %v6101
      %v6237 = vunpack.c.l.b16 %v6102
      %v6238 = vunpack.c.l.b16 %v6103
      %v6239 = vunpack.c.l.b16 %v6104
      %v6240 = vunpack.c.l.b16 %v6105
      %v6241 = vunpack.c.l.b16 %v6106
      %v6242 = vunpack.c.l.b16 %v6107
      %v6243 = vunpack.c.l.b16 %v6108
      %v6244 = vunpack.c.l.b16 %v6109
      %v6245 = vunpack.c.l.b16 %v6110
      %v6246 = vunpack.c.l.b16 %v6111
      %v6247 = vunpack.c.l.b16 %v6112
      %v6248 = vunpack.c.l.b16 %v6113
      %v6249 = vunpack.c.l.b16 %v6114
      %v6250 = vunpack.c.l.b16 %v6115
      %v6251 = vunpack.c.l.b16 %v6116
      %v6252 = vunpack.c.l.b16 %v6117
      %v6253 = vunpack.c.l.b16 %v6118
      %v6254 = vunpack.c.l.b16 %v6119
      %v6255 = vunpack.c.l.b16 %v6120
      %v6256 = vunpack.c.l.b16 %v6121
      %v6257 = vunpack.c.l.b16 %v6122
      %v6258 = vunpack.c.l.b16 %v6123
      %v6259 = vunpack.c.l.b16 %v6124
      %v6260 = vunpack.c.l.b16 %v6125
      %v6261 = vunpack.c.l.b16 %v6126
      %v6262 = vunpack.c.l.b16 %v6127
      %v6263 = vunpack.c.l.b16 %v6128
      %v6264 = vunpack.c.l.b16 %v6129
      %v6265 = vunpack.c.l.b16 %v6130
      %v6266 = vunpack.c.l.b16 %v6131
      %v6267 = vunpack.c.l.b16 %v6132
      %v6268 = vunpack.c.l.b16 %v6133
      %v6269 = vunpack.c.l.b16 %v6134
      %v6270 = vunpack.c.l.b16 %v6135
      %v6271 = vunpack.c.l.b16 %v6136
      %v6272 = vunpack.c.l.b16 %v6137
      %v6273 = vunpack.c.l.b16 %v6138
      %v6274 = vunpack.c.l.b16 %v6139
      %v6275 = vunpack.c.l.b16 %v6140
      %v6276 = vunpack.c.l.b16 %v6141
      %v6277 = vunpack.c.l.b16 %v6142
      %v6278 = vunpack.c.l.b16 %v6143
      %v6279 = vunpack.c.l.b16 %v6144
      %v6280 = vunpack.c.l.b16 %v6145
      %v6281 = vunpack.c.l.b16 %v6146
      %v6282 = vunpack.c.l.b16 %v6147
      %v6283 = vunpack.c.l.b16 %v6148
      %v6284 = vunpack.c.l.b16 %v6149
      %v6285 = vunpack.c.l.b16 %v6150
      %v6286 = vunpack.c.l.b16 %v6151
      %v6287 = vunpack.c.l.b16 %v6152
      %v6288 = vunpack.c.l.b16 %v6153
      %v6289 = vunpack.c.l.b16 %v6154
      %v6290 = vunpack.c.l.b16 %v6155
      %v6291 = vunpack.c.l.b16 %v6156
      %v6292 = vunpack.c.l.b16 %v6157
      %v6293 = vunpack.c.l.b16 %v6158
      %v6294 = vunpack.c.l.b16 %v6159
      %v6295 = vunpack.c.l.b16 %v6160
      %v6296 = vunpack.c.l.b16 %v6161
      %v6297 = vpack.c.b16 %v6234, %v6233
      %v6298 = vpack.c.b16 %v6236, %v6235
      %v6299 = vpack.c.b16 %v6238, %v6237
      %v6300 = vpack.c.b16 %v6240, %v6239
      %v6301 = vpack.c.b16 %v6242, %v6241
      %v6302 = vpack.c.b16 %v6244, %v6243
      %v6303 = vpack.c.b16 %v6246, %v6245
      %v6304 = vpack.c.b16 %v6248, %v6247
      %v6305 = vpack.c.b16 %v6250, %v6249
      %v6306 = vpack.c.b16 %v6252, %v6251
      %v6307 = vpack.c.b16 %v6254, %v6253
      %v6308 = vpack.c.b16 %v6256, %v6255
      %v6309 = vpack.c.b16 %v6258, %v6257
      %v6310 = vpack.c.b16 %v6260, %v6259
      %v6311 = vpack.c.b16 %v6262, %v6261
      %v6312 = vpack.c.b16 %v6264, %v6263
      %v6313 = vpack.c.b16 %v6266, %v6265
      %v6314 = vpack.c.b16 %v6268, %v6267
      %v6315 = vpack.c.b16 %v6270, %v6269
      %v6316 = vpack.c.b16 %v6272, %v6271
      %v6317 = vpack.c.b16 %v6274, %v6273
      %v6318 = vpack.c.b16 %v6276, %v6275
      %v6319 = vpack.c.b16 %v6278, %v6277
      %v6320 = vpack.c.b16 %v6280, %v6279
      %v6321 = vpack.c.b16 %v6282, %v6281
      %v6322 = vpack.c.b16 %v6284, %v6283
      %v6323 = vpack.c.b16 %v6286, %v6285
      %v6324 = vpack.c.b16 %v6288, %v6287
      %v6325 = vpack.c.b16 %v6290, %v6289
      %v6326 = vpack.c.b16 %v6292, %v6291
      %v6327 = vpack.c.b16 %v6294, %v6293
      %v6328 = vpack.c.b16 %v6296, %v6295
      %6361 = vmatprep.subr.bf16.mxu0 0
      %6362 = vmatpush1.bf16.msra.mxu0 %v6304
      %6363 = vmatprep.subr.bf16.mxu0 0
      %6364 = vmatpush1.bf16.msra.mxu0 %v6303
      %6365 = vmatprep.subr.bf16.mxu0 0
      %6366 = vmatpush1.bf16.msra.mxu0 %v6302
      %6367 = vmatprep.subr.bf16.mxu0 0
      %6368 = vmatpush1.bf16.msra.mxu0 %v6301
      %6369 = vmatprep.subr.bf16.mxu0 0
      %6370 = vmatpush1.bf16.msra.mxu0 %v6300
      %6371 = vmatprep.subr.bf16.mxu0 0
      %6372 = vmatpush1.bf16.msra.mxu0 %v6299
      %6373 = vmatprep.subr.bf16.mxu0 0
      %6374 = vmatpush1.bf16.msra.mxu0 %v6298
      %6375 = vmatprep.subr.bf16.mxu0 0
      %6376 = vmatpush1.bf16.msra.mxu0 %v6297
      %6377 = vmatprep.subr.bf16.mxu0 0
      %6378 = vmatpush2.bf16.msra.mxu0 %v6312
      %6379 = vmatprep.subr.bf16.mxu0 0
      %6380 = vmatpush2.bf16.msra.mxu0 %v6311
      %6381 = vmatprep.subr.bf16.mxu0 0
      %6382 = vmatpush2.bf16.msra.mxu0 %v6310
      %6383 = vmatprep.subr.bf16.mxu0 0
      %6384 = vmatpush2.bf16.msra.mxu0 %v6309
      %6385 = vmatprep.subr.bf16.mxu0 0
      %6386 = vmatpush2.bf16.msra.mxu0 %v6308
      %6387 = vmatprep.subr.bf16.mxu0 0
      %6388 = vmatpush2.bf16.msra.mxu0 %v6307
      %6389 = vmatprep.subr.bf16.mxu0 0
      %6390 = vmatpush2.bf16.msra.mxu0 %v6306
      %6391 = vmatprep.subr.bf16.mxu0 0
      %6392 = vmatpush2.bf16.msra.mxu0 %v6305
      %6393 = vmatprep.mubr.bf16.mxu0 %v6095
      %6394 = vmatmul.mubr.bf16.gmra.mxu0 %v6094
      %v6395 = vpop.f32.mrf.mxu0
      %v6396 = vadd.f32 %v6167, %v6395
      %v6397 = vpop.f32.mrf.mxu0
      %v6398 = vpop.f32.mrf.mxu0
      %v6399 = vpop.f32.mrf.mxu0
      %6400 = vdwg.mxu0
      %6401 = vmatprep.subr.bf16.mxu0 0
      %6402 = vmatpush1.bf16.msra.mxu0 %v6320
      %6403 = vmatprep.subr.bf16.mxu0 0
      %6404 = vmatpush1.bf16.msra.mxu0 %v6319
      %6405 = vmatprep.subr.bf16.mxu0 0
      %6406 = vmatpush1.bf16.msra.mxu0 %v6318
      %6407 = vmatprep.subr.bf16.mxu0 0
      %6408 = vmatpush1.bf16.msra.mxu0 %v6317
      %6409 = vmatprep.subr.bf16.mxu0 0
      %6410 = vmatpush1.bf16.msra.mxu0 %v6316
      %6411 = vmatprep.subr.bf16.mxu0 0
      %6412 = vmatpush1.bf16.msra.mxu0 %v6315
      %6413 = vmatprep.subr.bf16.mxu0 0
      %6414 = vmatpush1.bf16.msra.mxu0 %v6314
      %6415 = vmatprep.subr.bf16.mxu0 0
      %6416 = vmatpush1.bf16.msra.mxu0 %v6313
      %6417 = vmatprep.subr.bf16.mxu0 0
      %6418 = vmatpush2.bf16.msra.mxu0 %v6328
      %6419 = vmatprep.subr.bf16.mxu0 0
      %6420 = vmatpush2.bf16.msra.mxu0 %v6327
      %6421 = vmatprep.subr.bf16.mxu0 0
      %6422 = vmatpush2.bf16.msra.mxu0 %v6326
      %6423 = vmatprep.subr.bf16.mxu0 0
      %6424 = vmatpush2.bf16.msra.mxu0 %v6325
      %6425 = vmatprep.subr.bf16.mxu0 0
      %6426 = vmatpush2.bf16.msra.mxu0 %v6324
      %6427 = vmatprep.subr.bf16.mxu0 0
      %6428 = vmatpush2.bf16.msra.mxu0 %v6323
      %6429 = vmatprep.subr.bf16.mxu0 0
      %6430 = vmatpush2.bf16.msra.mxu0 %v6322
      %6431 = vmatprep.subr.bf16.mxu0 0
      %6432 = vmatpush2.bf16.msra.mxu0 %v6321
      %6433 = vmatprep.mubr.bf16.mxu0 %v6097
      %6434 = vmatmul.mubr.bf16.gmra.mxu0 %v6096
      %v6435 = vpop.f32.mrf.mxu0
      %v6436 = vadd.f32 %v6396, %v6435
      %v6437 = vpop.f32.mrf.mxu0
      %v6438 = vpop.f32.mrf.mxu0
      %v6439 = vpop.f32.mrf.mxu0
      %6440 = vdwg.mxu0
      %6441 = vst [vmem:[%s389] sm:$0xff] %v6436
      %p6442 = scmp.lt.s32.totalorder %s22, 1
      %s6443 = scalar_select %p6442, %s22, 1
      %s6444 = smul.addr %s6443, 8
      %s6445 = scalar_lea.vmem %s11, %s6444
      // Predicated region
      $region72: #{_lambda_.1} parent=63 // pred_check
        %p6446 = pneg %p276
      $region73: #{_lambda_.1} parent=63 // pred_check_branch
        %6448 = sbr.rel (%p6446) target = $region75
      $region74: #{_lambda_.1} parent=63 // pred_region
        _
      $region75: #{_lambda_.1} parent=63 // pred_fallthru
        _
    $region64: #{_lambda_.1} parent=5 // pred_fallthru
      _
    %p6449 = scmp.le.s32.totalorder 2, %s17
    // Predicated region
    $region76: #{_lambda_.1} parent=5 // pred_check
      %p6450 = pneg %p6449
    $region77: #{_lambda_.1} parent=5 // pred_check_branch
      %6452 = sbr.rel (%p6450) target = $region79
    $region78: #{_lambda_.1} parent=5 // pred_region
      %s6453 = ssub.s32 %s17, 2
      // Predicated region
      $region80: #{_lambda_.1} parent=78 // pred_check
        %p6454 = pneg %p282
      $region81: #{_lambda_.1} parent=78 // pred_check_branch
        %6456 = sbr.rel (%p6454) target = $region83
      $region82: #{_lambda_.1} parent=78 // pred_region
        %p6457 = scmp.lt.s32.totalorder %s23, 1
        %s6458 = scalar_select %p6457, %s23, 1
        %s6459 = smul.addr %s6458, 8
        %s6460 = scalar_lea.vmem %s11, %s6459
      $region83: #{_lambda_.1} parent=78 // pred_fallthru
        _
    $region79: #{_lambda_.1} parent=5 // pred_fallthru
      _
  $region6: #{_lambda_.1} parent=0 // loop_footer
    %s21 = sadd.s32 1, %s17
  $region7: #{_lambda_.1} parent=0 // loop_footer_branch
    %16 = sbr.rel target = $region3
  $region8: #{_lambda_.1} parent=0 // loop_exit
    _

</llo_original>
